<compile_context>
chip_gen: v7x
topology: tpu7x:2x2x1
jax: 0.10.0
libtpu: 0.0.40
codegen_flags: <defaults>
</compile_context>

<pallas_src>
import functools
import math

import jax
import jax.numpy as jnp
from jax.experimental import pallas as pl
from jax.experimental.pallas import tpu as pltpu

LEAKAGE = 0.1
BN_EPS = 1e-5


def _vmem_limit_bytes():
    """Scoped-VMEM limit derived from the chip: ~96 MiB on 128 MiB parts, <=48 MiB on v7x."""
    try:
        cap = int(getattr(pltpu.get_tpu_info(), "vmem_capacity_bytes", 0) or 0)
    except Exception:  # fall back to a limit that is safe on every TPU generation
        cap = 0
    if cap >= (112 << 20):            # v5e / v6e: 128 MiB physical VMEM
        return 96 << 20
    if cap > 0:                       # v7x: 64 MiB physical per TensorCore
        return min(int(cap * 3 // 4), 48 << 20)
    return 48 << 20


_VMEM_LIMIT = _vmem_limit_bytes()


def _round_up(x, m):
    return (x + m - 1) // m * m


# ----------------------------------------------------------------------------- kernels
def conv_stats_kernel(p_ref, w_ref, scale_ref, shift_ref, mask_ref, z_ref, stats_ref,
                      *, W, C, S_out, apply_prologue):
    """One (image, row-tile) step: [prev-layer BN + LeakyReLU] -> 3x3 conv -> BN partials.

    p_ref:     (1, 1, Sp, C)    bf16 reflect-padded tile; pixels flattened on sublanes with
                                row stride (W+2); Sp >= (th+2)*(W+2)+2 (zero-filled tail).
    w_ref:     (9, C, C)        one bf16 [C, C] weight matrix per (ky, kx) tap.
    scale_ref: (1, C)           previous layer's fused BN scale (gamma * inv_std).
    shift_ref: (1, C)           previous layer's fused BN shift (beta - mean * scale).
    mask_ref:  (S_out, 1)       1.0 for valid output rows (x < W), 0.0 for stride padding.
    z_ref:     (1, 1, S_out, C) bf16 pre-BN conv output; row y*(W+2)+x is valid iff x < W
                                (the 2 trailing columns per row are garbage, masked below
                                and sliced off by the wrapper).
    stats_ref: (1, 1, 2, C)     f32 per-tile per-channel [sum, sum-of-squares] partials.
    """
    Wp2 = W + 2
    pf = p_ref[0, 0].astype(jnp.float32)                      # (Sp, C)
    if apply_prologue:
        # Previous layer's BatchNorm affine + LeakyReLU.  Pointwise, so it commutes with
        # the reflect padding / halo rows already baked into the slab.  Applied once per
        # element (not once per tap), in f32 (portable to v5e's f32-only VPU).
        pf = pf * scale_ref[...] + shift_ref[...]
        pf = jnp.where(pf > 0, pf, LEAKAGE * pf)

    # 9 conv taps as contiguous sublane slices of the flattened padded tile:
    #   out[y*(W+2)+x] += p[(y+ky)*(W+2) + (x+kx)] @ Wt[ky, kx]
    acc = jnp.zeros((S_out, C), jnp.float32)
    for ky in range(3):
        for kx in range(3):
            off = ky * Wp2 + kx
            lhs = pf[off:off + S_out, :].astype(jnp.bfloat16)  # bf16 MXU operand
            acc += jnp.dot(lhs, w_ref[ky * 3 + kx],
                           preferred_element_type=jnp.float32)
    # NOTE: conv bias intentionally omitted: training-mode BatchNorm subtracts the batch
    # mean, which cancels any per-channel constant exactly.

    z_ref[...] = acc.astype(jnp.bfloat16).reshape(1, 1, S_out, C)

    # BatchNorm partials over the valid output pixels only.
    # TODO(synk): E[x^2]-E[x]^2 in f32 is cancellation-prone for large-mean conv outputs;
    # switch to per-tile mean-centered partials if trained weights drift vs. PyTorch.
    m = mask_ref[...]
    s1 = jnp.sum(acc * m, axis=0, keepdims=True)
    s2 = jnp.sum(acc * acc * m, axis=0, keepdims=True)
    stats_ref[...] = jnp.concatenate([s1, s2], axis=0).reshape(1, 1, 2, C)


def bn_act_residual_kernel(z_ref, x_ref, scale_ref, shift_ref, o_ref):
    """Final fused step for one (image, row-tile): out = x + LeakyReLU(BN(z3))."""
    y = z_ref[...].astype(jnp.float32) * scale_ref[...] + shift_ref[...]
    y = jnp.where(y > 0, y, LEAKAGE * y)
    o_ref[...] = x_ref[...] + y


# --------------------------------------------------------------------- wrapper helpers
def _pick_tile_h(N, H, W, C, budget_bytes):
    """Largest row tile dividing H whose per-step conv VMEM footprint fits the budget."""
    def footprint(th):
        sp = (th + 2) * (W + 2)
        s_out = th * (W + 2)
        return (2 * sp * C * 2          # double-buffered bf16 input slab
                + 2 * s_out * C * 2     # double-buffered bf16 z output
                + sp * C * 4            # f32 prologue copy
                + s_out * C * 4         # f32 accumulator
                + 2 * s_out * C * 2     # bf16 tap temporaries
                + 9 * C * C * 2)        # resident weights

    divisors = [t for t in range(1, H + 1) if H % t == 0]
    fitting = [t for t in divisors if footprint(t) <= budget_bytes]
    th = max(fitting) if fitting else min(divisors)
    if N == 1 and th == H:              # keep >=2 parallel grid steps for v7x megacore
        smaller = [t for t in fitting if t < H]
        if smaller:
            th = max(smaller)
    return th


def _pick_tile_final(H, W, C, budget_bytes):
    """Row tile for the halo-free BN+LeakyReLU+residual pass (larger than the conv tile)."""
    per_row = W * C * (2 + 4 + 4) * 2   # bf16 z + f32 x + f32 out, double-buffered
    divisors = [t for t in range(1, H + 1) if H % t == 0 and (t == H or t % 8 == 0)]
    fitting = [t for t in divisors if t * per_row <= budget_bytes]
    return max(fitting) if fitting else min(divisors)


def _prep_slab(a_nhwc, th, Sp):
    """[N,H,W,C] -> bf16 [N, nt, Sp, C]: reflect pad, halo'd row tiles, pixels on sublanes."""
    a = a_nhwc.astype(jnp.bfloat16)
    N, H, W, C = a.shape
    nt = H // th
    ap = jnp.pad(a, ((0, 0), (1, 1), (1, 1), (0, 0)), mode="reflect")   # [N, H+2, W+2, C]
    tiles = jnp.stack([ap[:, i * th:i * th + th + 2] for i in range(nt)], axis=1)
    flat = tiles.reshape(N, nt, (th + 2) * (W + 2), C)
    pad_rows = Sp - (th + 2) * (W + 2)
    if pad_rows:
        flat = jnp.pad(flat, ((0, 0), (0, 0), (0, pad_rows), (0, 0)))
    return flat


def _compact(z_wide, N, nt, th, W, C):
    """bf16 [N, nt, th*(W+2), C] (wide, with stride-padding cols) -> bf16 [N, H, W, C]."""
    z5 = z_wide.reshape(N, nt, th, W + 2, C)[:, :, :, :W, :]
    return z5.reshape(N, nt * th, W, C)


def _conv_layer(slab, w9, scale, shift, mask, *, N, nt, W, C, Sp, S_out, apply_prologue):
    """One conv block's heavy pass: pre-BN conv output (wide layout) + per-tile BN partials."""
    kernel = functools.partial(conv_stats_kernel, W=W, C=C, S_out=S_out,
                               apply_prologue=apply_prologue)
    z, stats = pl.pallas_call(
        kernel,
        grid=(N, nt),
        in_specs=[
            pl.BlockSpec((1, 1, Sp, C), lambda n, i: (n, i, 0, 0)),
            pl.BlockSpec((9, C, C), lambda n, i: (0, 0, 0)),
            pl.BlockSpec((1, C), lambda n, i: (0, 0)),
            pl.BlockSpec((1, C), lambda n, i: (0, 0)),
            pl.BlockSpec((S_out, 1), lambda n, i: (0, 0)),
        ],
        out_specs=(
            pl.BlockSpec((1, 1, S_out, C), lambda n, i: (n, i, 0, 0)),
            pl.BlockSpec((1, 1, 2, C), lambda n, i: (n, i, 0, 0)),
        ),
        out_shape=(
            jax.ShapeDtypeStruct((N, nt, S_out, C), jnp.bfloat16),
            jax.ShapeDtypeStruct((N, nt, 2, C), jnp.float32),
        ),
        compiler_params=pltpu.CompilerParams(
            dimension_semantics=("parallel", "parallel"),
            vmem_limit_bytes=_VMEM_LIMIT,
        ),
    )(slab, w9,
      scale.reshape(1, C).astype(jnp.float32),
      shift.reshape(1, C).astype(jnp.float32),
      mask)
    return z, stats


def _bn_affine(stats, gamma, beta, count):
    """Fold batch statistics (training-mode, biased variance) + BN params into scale/shift."""
    tot = jnp.sum(stats, axis=(0, 1))                 # (2, C) f32
    mean = tot[0] / count
    var = jnp.maximum(tot[1] / count - mean * mean, 0.0)
    inv_std = jax.lax.rsqrt(var + BN_EPS)
    scale = gamma * inv_std
    shift = beta - mean * scale
    return scale, shift


def _bn_act_residual(z_nhwc, x_nhwc, scale, shift, *, tr):
    N, H, W, C = x_nhwc.shape
    nt = H // tr
    z_flat = z_nhwc.reshape(N, H, W * C)              # bf16, lane-dense W*C rows
    x_flat = x_nhwc.reshape(N, H, W * C)              # f32 residual input
    scale_row = jnp.tile(scale.reshape(1, C), (1, W)).astype(jnp.float32)
    shift_row = jnp.tile(shift.reshape(1, C), (1, W)).astype(jnp.float32)
    out = pl.pallas_call(
        bn_act_residual_kernel,
        grid=(N, nt),
        in_specs=[
            pl.BlockSpec((1, tr, W * C), lambda n, i: (n, i, 0)),
            pl.BlockSpec((1, tr, W * C), lambda n, i: (n, i, 0)),
            pl.BlockSpec((1, W * C), lambda n, i: (0, 0)),
            pl.BlockSpec((1, W * C), lambda n, i: (0, 0)),
        ],
        out_specs=pl.BlockSpec((1, tr, W * C), lambda n, i: (n, i, 0)),
        out_shape=jax.ShapeDtypeStruct((N, H, W * C), jnp.float32),
        compiler_params=pltpu.CompilerParams(
            dimension_semantics=("parallel", "parallel"),
            vmem_limit_bytes=_VMEM_LIMIT,
        ),
    )(z_flat, x_flat, scale_row, shift_row)
    return out.reshape(N, H, W, C)


@functools.partial(jax.jit, static_argnames=("tile_h",))
def residual_forward(x_nchw, params, tile_h=None):
    """x + block(x), block = 3x [conv3x3 (reflect) -> BatchNorm2d (batch stats) -> LeakyReLU]."""
    x = jnp.transpose(x_nchw, (0, 2, 3, 1)).astype(jnp.float32)     # NCHW -> NHWC
    N, H, W, C = x.shape
    budget = _VMEM_LIMIT // 2
    th = _pick_tile_h(N, H, W, C, budget) if tile_h is None else tile_h
    assert H % th == 0, (H, th)
    nt = H // th
    Sp = _round_up((th + 2) * (W + 2) + 2, 8)
    S_out = th * (W + 2)
    count = float(N * H * W)

    # valid-output-row mask for the wide (stride W+2) conv output layout
    row_in_img = jnp.arange(S_out, dtype=jnp.int32) % (W + 2)
    mask = (row_in_img < W).astype(jnp.float32).reshape(S_out, 1)

    scale = jnp.ones((C,), jnp.float32)
    shift = jnp.zeros((C,), jnp.float32)
    a = x                                       # layer 0 consumes x directly (no prologue)
    for layer_idx, (w9, _bias_unused, gamma, beta) in enumerate(params):
        slab = _prep_slab(a, th, Sp)            # bf16 [N, nt, Sp, C]
        z_w, stats = _conv_layer(slab, w9, scale, shift, mask,
                                 N=N, nt=nt, W=W, C=C, Sp=Sp, S_out=S_out,
                                 apply_prologue=layer_idx > 0)
        scale, shift = _bn_affine(stats, gamma, beta, count)
        a = _compact(z_w, N, nt, th, W, C)      # bf16 [N,H,W,C], pre-BN conv output
    tr = _pick_tile_final(H, W, C, budget)
    out = _bn_act_residual(a, x, scale, shift, tr=tr)               # x + LeakyReLU(BN(z3))
    return jnp.transpose(out, (0, 3, 1, 2))                         # back to NCHW


def init_params(key, channels):
    """Matches the module's __init__ (shapes + distributions).

    Conv weight: normal(std=sqrt(2 / ((1+leakage) * 9 * in_channels)))  (Conv2dReLUInit)
    Conv bias:   uniform(+-1/sqrt(fan_in))  (generated for fidelity; mathematically
                 cancelled by the following training-mode BatchNorm, so not applied)
    BN: gamma = 1, beta = 0.
    """
    C = channels
    std = math.sqrt(2.0 / ((1.0 + LEAKAGE) * 9 * C))
    bound = 1.0 / math.sqrt(C * 3 * 3)
    params = []
    for _ in range(3):
        key, kw, kb = jax.random.split(key, 3)
        w_oihw = jax.random.normal(kw, (C, C, 3, 3), jnp.float32) * std
        # OIHW -> (ky, kx, cin, cout) -> (9, Cin, Cout), bf16 for the MXU
        w9 = jnp.transpose(w_oihw, (2, 3, 1, 0)).reshape(9, C, C).astype(jnp.bfloat16)
        b = jax.random.uniform(kb, (C,), jnp.float32, -bound, bound)
        gamma = jnp.ones((C,), jnp.float32)
        beta = jnp.zeros((C,), jnp.float32)
        params.append((w9, b, gamma, beta))
    return params


if __name__ == "__main__":
    key = jax.random.PRNGKey(0)
    k_x, k_p = jax.random.split(key)

    N, C, H, W = 2, 4, 16, 16
    x = jax.random.normal(k_x, (N, C, H, W), jnp.float32)       # NCHW, like PyTorch
    params = init_params(k_p, C)

    out = residual_forward(x, params, tile_h=8)                 # 2 row tiles/image -> grid (2, 2)
    jax.block_until_ready(out)
    assert out.shape == (N, C, H, W), out.shape
    assert bool(jnp.all(jnp.isfinite(out))), "non-finite output"
    print("KERNEL_OK")
</pallas_src>

<mosaic_0001>
module attributes {stable_mosaic.version = 11 : i64} {
  func.func @conv_stats_kernel(%arg0: i32, %arg1: i32, %arg2: memref<1x1x184x4xbf16, #tpu.memory_space<vmem>>, %arg3: memref<9x4x4xbf16, #tpu.memory_space<vmem>>, %arg4: memref<1x4xf32, #tpu.memory_space<vmem>>, %arg5: memref<1x4xf32, #tpu.memory_space<vmem>>, %arg6: memref<144x1xf32, #tpu.memory_space<vmem>>, %arg7: memref<1x1x144x4xbf16, #tpu.memory_space<vmem>>, %arg8: memref<1x1x2x4xf32, #tpu.memory_space<vmem>>) attributes {dimension_semantics = [#tpu.dimension_semantics<parallel>, #tpu.dimension_semantics<parallel>], iteration_bounds = array<i64: 2, 2>, scalar_prefetch = 0 : i64, scratch_operands = 0 : i64, tpu.core_type = #tpu.core_type<tc>, window_params = [{transform_indices = @transform_0, window_bounds = array<i64: 1, 1, 184, 4>}, {pipeline_mode = #tpu.pipeline_mode<synchronous>, transform_indices = @transform_1, window_bounds = array<i64: 9, 4, 4>}, {pipeline_mode = #tpu.pipeline_mode<synchronous>, transform_indices = @transform_2, window_bounds = array<i64: 1, 4>}, {pipeline_mode = #tpu.pipeline_mode<synchronous>, transform_indices = @transform_3, window_bounds = array<i64: 1, 4>}, {pipeline_mode = #tpu.pipeline_mode<synchronous>, transform_indices = @transform_4, window_bounds = array<i64: 144, 1>}, {transform_indices = @transform_5, window_bounds = array<i64: 1, 1, 144, 4>}, {transform_indices = @transform_6, window_bounds = array<i64: 1, 1, 2, 4>}]} {
    %c0 = arith.constant 0 : index
    %c0_0 = arith.constant 0 : index
    %c0_1 = arith.constant 0 : index
    %c0_2 = arith.constant 0 : index
    %0 = vector.load %arg2[%c0, %c0_0, %c0_1, %c0_2] : memref<1x1x184x4xbf16, #tpu.memory_space<vmem>>, vector<1x1x184x4xbf16>
    %1 = vector.shape_cast %0 : vector<1x1x184x4xbf16> to vector<184x4xbf16>
    %2 = arith.extf %1 : vector<184x4xbf16> to vector<184x4xf32>
    %cst = arith.constant 0.000000e+00 : f32
    %3 = vector.broadcast %cst : f32 to vector<144x4xf32>
    %4 = vector.extract_strided_slice %2 {offsets = [0, 0], sizes = [144, 4], strides = [1, 1]} : vector<184x4xf32> to vector<144x4xf32>
    %5 = arith.truncf %4 : vector<144x4xf32> to vector<144x4xbf16>
    %c0_3 = arith.constant 0 : index
    %c0_4 = arith.constant 0 : index
    %c0_5 = arith.constant 0 : index
    %6 = vector.load %arg3[%c0_3, %c0_4, %c0_5] : memref<9x4x4xbf16, #tpu.memory_space<vmem>>, vector<1x4x4xbf16>
    %7 = vector.shape_cast %6 : vector<1x4x4xbf16> to vector<4x4xbf16>
    %cst_6 = arith.constant dense<0.000000e+00> : vector<144x4xf32>
    %8 = tpu.matmul %5, %7, %cst_6 {dimension_numbers = #tpu.dot_dimension_numbers<[1], [0], [0], [1], [0, 0, 1, 1], [], []>} : vector<144x4xbf16>, vector<4x4xbf16>, vector<144x4xf32> -> vector<144x4xf32>
    %9 = arith.addf %3, %8 : vector<144x4xf32>
    %10 = vector.extract_strided_slice %2 {offsets = [1, 0], sizes = [144, 4], strides = [1, 1]} : vector<184x4xf32> to vector<144x4xf32>
    %11 = arith.truncf %10 : vector<144x4xf32> to vector<144x4xbf16>
    %c1 = arith.constant 1 : index
    %c0_7 = arith.constant 0 : index
    %c0_8 = arith.constant 0 : index
    %12 = vector.load %arg3[%c1, %c0_7, %c0_8] : memref<9x4x4xbf16, #tpu.memory_space<vmem>>, vector<1x4x4xbf16>
    %13 = vector.shape_cast %12 : vector<1x4x4xbf16> to vector<4x4xbf16>
    %cst_9 = arith.constant dense<0.000000e+00> : vector<144x4xf32>
    %14 = tpu.matmul %11, %13, %cst_9 {dimension_numbers = #tpu.dot_dimension_numbers<[1], [0], [0], [1], [0, 0, 1, 1], [], []>} : vector<144x4xbf16>, vector<4x4xbf16>, vector<144x4xf32> -> vector<144x4xf32>
    %15 = arith.addf %9, %14 : vector<144x4xf32>
    %16 = vector.extract_strided_slice %2 {offsets = [2, 0], sizes = [144, 4], strides = [1, 1]} : vector<184x4xf32> to vector<144x4xf32>
    %17 = arith.truncf %16 : vector<144x4xf32> to vector<144x4xbf16>
    %c2 = arith.constant 2 : index
    %c0_10 = arith.constant 0 : index
    %c0_11 = arith.constant 0 : index
    %18 = vector.load %arg3[%c2, %c0_10, %c0_11] : memref<9x4x4xbf16, #tpu.memory_space<vmem>>, vector<1x4x4xbf16>
    %19 = vector.shape_cast %18 : vector<1x4x4xbf16> to vector<4x4xbf16>
    %cst_12 = arith.constant dense<0.000000e+00> : vector<144x4xf32>
    %20 = tpu.matmul %17, %19, %cst_12 {dimension_numbers = #tpu.dot_dimension_numbers<[1], [0], [0], [1], [0, 0, 1, 1], [], []>} : vector<144x4xbf16>, vector<4x4xbf16>, vector<144x4xf32> -> vector<144x4xf32>
    %21 = arith.addf %15, %20 : vector<144x4xf32>
    %22 = vector.extract_strided_slice %2 {offsets = [18, 0], sizes = [144, 4], strides = [1, 1]} : vector<184x4xf32> to vector<144x4xf32>
    %23 = arith.truncf %22 : vector<144x4xf32> to vector<144x4xbf16>
    %c3 = arith.constant 3 : index
    %c0_13 = arith.constant 0 : index
    %c0_14 = arith.constant 0 : index
    %24 = vector.load %arg3[%c3, %c0_13, %c0_14] : memref<9x4x4xbf16, #tpu.memory_space<vmem>>, vector<1x4x4xbf16>
    %25 = vector.shape_cast %24 : vector<1x4x4xbf16> to vector<4x4xbf16>
    %cst_15 = arith.constant dense<0.000000e+00> : vector<144x4xf32>
    %26 = tpu.matmul %23, %25, %cst_15 {dimension_numbers = #tpu.dot_dimension_numbers<[1], [0], [0], [1], [0, 0, 1, 1], [], []>} : vector<144x4xbf16>, vector<4x4xbf16>, vector<144x4xf32> -> vector<144x4xf32>
    %27 = arith.addf %21, %26 : vector<144x4xf32>
    %28 = vector.extract_strided_slice %2 {offsets = [19, 0], sizes = [144, 4], strides = [1, 1]} : vector<184x4xf32> to vector<144x4xf32>
    %29 = arith.truncf %28 : vector<144x4xf32> to vector<144x4xbf16>
    %c4 = arith.constant 4 : index
    %c0_16 = arith.constant 0 : index
    %c0_17 = arith.constant 0 : index
    %30 = vector.load %arg3[%c4, %c0_16, %c0_17] : memref<9x4x4xbf16, #tpu.memory_space<vmem>>, vector<1x4x4xbf16>
    %31 = vector.shape_cast %30 : vector<1x4x4xbf16> to vector<4x4xbf16>
    %cst_18 = arith.constant dense<0.000000e+00> : vector<144x4xf32>
    %32 = tpu.matmul %29, %31, %cst_18 {dimension_numbers = #tpu.dot_dimension_numbers<[1], [0], [0], [1], [0, 0, 1, 1], [], []>} : vector<144x4xbf16>, vector<4x4xbf16>, vector<144x4xf32> -> vector<144x4xf32>
    %33 = arith.addf %27, %32 : vector<144x4xf32>
    %34 = vector.extract_strided_slice %2 {offsets = [20, 0], sizes = [144, 4], strides = [1, 1]} : vector<184x4xf32> to vector<144x4xf32>
    %35 = arith.truncf %34 : vector<144x4xf32> to vector<144x4xbf16>
    %c5 = arith.constant 5 : index
    %c0_19 = arith.constant 0 : index
    %c0_20 = arith.constant 0 : index
    %36 = vector.load %arg3[%c5, %c0_19, %c0_20] : memref<9x4x4xbf16, #tpu.memory_space<vmem>>, vector<1x4x4xbf16>
    %37 = vector.shape_cast %36 : vector<1x4x4xbf16> to vector<4x4xbf16>
    %cst_21 = arith.constant dense<0.000000e+00> : vector<144x4xf32>
    %38 = tpu.matmul %35, %37, %cst_21 {dimension_numbers = #tpu.dot_dimension_numbers<[1], [0], [0], [1], [0, 0, 1, 1], [], []>} : vector<144x4xbf16>, vector<4x4xbf16>, vector<144x4xf32> -> vector<144x4xf32>
    %39 = arith.addf %33, %38 : vector<144x4xf32>
    %40 = vector.extract_strided_slice %2 {offsets = [36, 0], sizes = [144, 4], strides = [1, 1]} : vector<184x4xf32> to vector<144x4xf32>
    %41 = arith.truncf %40 : vector<144x4xf32> to vector<144x4xbf16>
    %c6 = arith.constant 6 : index
    %c0_22 = arith.constant 0 : index
    %c0_23 = arith.constant 0 : index
    %42 = vector.load %arg3[%c6, %c0_22, %c0_23] : memref<9x4x4xbf16, #tpu.memory_space<vmem>>, vector<1x4x4xbf16>
    %43 = vector.shape_cast %42 : vector<1x4x4xbf16> to vector<4x4xbf16>
    %cst_24 = arith.constant dense<0.000000e+00> : vector<144x4xf32>
    %44 = tpu.matmul %41, %43, %cst_24 {dimension_numbers = #tpu.dot_dimension_numbers<[1], [0], [0], [1], [0, 0, 1, 1], [], []>} : vector<144x4xbf16>, vector<4x4xbf16>, vector<144x4xf32> -> vector<144x4xf32>
    %45 = arith.addf %39, %44 : vector<144x4xf32>
    %46 = vector.extract_strided_slice %2 {offsets = [37, 0], sizes = [144, 4], strides = [1, 1]} : vector<184x4xf32> to vector<144x4xf32>
    %47 = arith.truncf %46 : vector<144x4xf32> to vector<144x4xbf16>
    %c7 = arith.constant 7 : index
    %c0_25 = arith.constant 0 : index
    %c0_26 = arith.constant 0 : index
    %48 = vector.load %arg3[%c7, %c0_25, %c0_26] : memref<9x4x4xbf16, #tpu.memory_space<vmem>>, vector<1x4x4xbf16>
    %49 = vector.shape_cast %48 : vector<1x4x4xbf16> to vector<4x4xbf16>
    %cst_27 = arith.constant dense<0.000000e+00> : vector<144x4xf32>
    %50 = tpu.matmul %47, %49, %cst_27 {dimension_numbers = #tpu.dot_dimension_numbers<[1], [0], [0], [1], [0, 0, 1, 1], [], []>} : vector<144x4xbf16>, vector<4x4xbf16>, vector<144x4xf32> -> vector<144x4xf32>
    %51 = arith.addf %45, %50 : vector<144x4xf32>
    %52 = vector.extract_strided_slice %2 {offsets = [38, 0], sizes = [144, 4], strides = [1, 1]} : vector<184x4xf32> to vector<144x4xf32>
    %53 = arith.truncf %52 : vector<144x4xf32> to vector<144x4xbf16>
    %c8 = arith.constant 8 : index
    %c0_28 = arith.constant 0 : index
    %c0_29 = arith.constant 0 : index
    %54 = vector.load %arg3[%c8, %c0_28, %c0_29] : memref<9x4x4xbf16, #tpu.memory_space<vmem>>, vector<1x4x4xbf16>
    %55 = vector.shape_cast %54 : vector<1x4x4xbf16> to vector<4x4xbf16>
    %cst_30 = arith.constant dense<0.000000e+00> : vector<144x4xf32>
    %56 = tpu.matmul %53, %55, %cst_30 {dimension_numbers = #tpu.dot_dimension_numbers<[1], [0], [0], [1], [0, 0, 1, 1], [], []>} : vector<144x4xbf16>, vector<4x4xbf16>, vector<144x4xf32> -> vector<144x4xf32>
    %57 = arith.addf %51, %56 : vector<144x4xf32>
    %58 = arith.truncf %57 : vector<144x4xf32> to vector<144x4xbf16>
    %59 = vector.shape_cast %58 : vector<144x4xbf16> to vector<1x1x144x4xbf16>
    %c0_31 = arith.constant 0 : index
    %c0_32 = arith.constant 0 : index
    %c0_33 = arith.constant 0 : index
    %c0_34 = arith.constant 0 : index
    %60 = vector.load %arg7[%c0_31, %c0_32, %c0_33, %c0_34] : memref<1x1x144x4xbf16, #tpu.memory_space<vmem>>, vector<1x1x144x4xbf16>
    tpu.vector_store %arg7[%c0_31, %c0_32, %c0_33, %c0_34], %59 {strides = array<i32>} : memref<1x1x144x4xbf16, #tpu.memory_space<vmem>>, vector<1x1x144x4xbf16>,
    %c0_35 = arith.constant 0 : index
    %c0_36 = arith.constant 0 : index
    %61 = vector.load %arg6[%c0_35, %c0_36] : memref<144x1xf32, #tpu.memory_space<vmem>>, vector<144x1xf32>
    %62 = vector.broadcast %61 : vector<144x1xf32> to vector<144x4xf32>
    %63 = arith.mulf %57, %62 : vector<144x4xf32>
    %cst_37 = arith.constant dense<0.000000e+00> : vector<4xf32>
    %64 = vector.multi_reduction <add>, %63, %cst_37 [0] : vector<144x4xf32> to vector<4xf32>
    %65 = vector.shape_cast %64 : vector<4xf32> to vector<1x4xf32>
    %66 = arith.mulf %57, %57 : vector<144x4xf32>
    %67 = vector.broadcast %61 : vector<144x1xf32> to vector<144x4xf32>
    %68 = arith.mulf %66, %67 : vector<144x4xf32>
    %cst_38 = arith.constant dense<0.000000e+00> : vector<4xf32>
    %69 = vector.multi_reduction <add>, %68, %cst_38 [0] : vector<144x4xf32> to vector<4xf32>
    %70 = vector.shape_cast %69 : vector<4xf32> to vector<1x4xf32>
    %71 = tpu.concatenate %65, %70 in 0 : vector<1x4xf32>, vector<1x4xf32> -> vector<2x4xf32>
    %72 = vector.shape_cast %71 : vector<2x4xf32> to vector<1x1x2x4xf32>
    %c0_39 = arith.constant 0 : index
    %c0_40 = arith.constant 0 : index
    %c0_41 = arith.constant 0 : index
    %c0_42 = arith.constant 0 : index
    %73 = vector.load %arg8[%c0_39, %c0_40, %c0_41, %c0_42] : memref<1x1x2x4xf32, #tpu.memory_space<vmem>>, vector<1x1x2x4xf32>
    tpu.vector_store %arg8[%c0_39, %c0_40, %c0_41, %c0_42], %72 {strides = array<i32>} : memref<1x1x2x4xf32, #tpu.memory_space<vmem>>, vector<1x1x2x4xf32>,
    return
  }
  func.func @transform_0(%arg0: i32, %arg1: i32) -> (i32, i32, i32, i32) {
    %c0_i32 = arith.constant 0 : i32
    %c0_i32_0 = arith.constant 0 : i32
    %c0_i32_1 = arith.constant 0 : i32
    return %arg0, %arg1, %c0_i32, %c0_i32_0 : i32, i32, i32, i32
  }
  func.func @transform_1(%arg0: i32, %arg1: i32) -> (i32, i32, i32) {
    %c0_i32 = arith.constant 0 : i32
    %c0_i32_0 = arith.constant 0 : i32
    %c0_i32_1 = arith.constant 0 : i32
    %c0_i32_2 = arith.constant 0 : i32
    return %c0_i32, %c0_i32_0, %c0_i32_1 : i32, i32, i32
  }
  func.func @transform_2(%arg0: i32, %arg1: i32) -> (i32, i32) {
    %c0_i32 = arith.constant 0 : i32
    %c0_i32_0 = arith.constant 0 : i32
    %c0_i32_1 = arith.constant 0 : i32
    return %c0_i32, %c0_i32_0 : i32, i32
  }
  func.func @transform_3(%arg0: i32, %arg1: i32) -> (i32, i32) {
    %c0_i32 = arith.constant 0 : i32
    %c0_i32_0 = arith.constant 0 : i32
    %c0_i32_1 = arith.constant 0 : i32
    return %c0_i32, %c0_i32_0 : i32, i32
  }
  func.func @transform_4(%arg0: i32, %arg1: i32) -> (i32, i32) {
    %c0_i32 = arith.constant 0 : i32
    %c0_i32_0 = arith.constant 0 : i32
    %c0_i32_1 = arith.constant 0 : i32
    return %c0_i32, %c0_i32_0 : i32, i32
  }
  func.func @transform_5(%arg0: i32, %arg1: i32) -> (i32, i32, i32, i32) {
    %c0_i32 = arith.constant 0 : i32
    %c0_i32_0 = arith.constant 0 : i32
    %c0_i32_1 = arith.constant 0 : i32
    return %arg0, %arg1, %c0_i32, %c0_i32_0 : i32, i32, i32, i32
  }
  func.func @transform_6(%arg0: i32, %arg1: i32) -> (i32, i32, i32, i32) {
    %c0_i32 = arith.constant 0 : i32
    %c0_i32_0 = arith.constant 0 : i32
    %c0_i32_1 = arith.constant 0 : i32
    return %arg0, %arg1, %c0_i32, %c0_i32_0 : i32, i32, i32, i32
  }
}

module attributes {stable_mosaic.version = 11 : i64} {
  func.func @conv_stats_kernel(%arg0: i32, %arg1: i32, %arg2: memref<1x1x184x4xbf16, #tpu.memory_space<vmem>>, %arg3: memref<9x4x4xbf16, #tpu.memory_space<vmem>>, %arg4: memref<1x4xf32, #tpu.memory_space<vmem>>, %arg5: memref<1x4xf32, #tpu.memory_space<vmem>>, %arg6: memref<144x1xf32, #tpu.memory_space<vmem>>, %arg7: memref<1x1x144x4xbf16, #tpu.memory_space<vmem>>, %arg8: memref<1x1x2x4xf32, #tpu.memory_space<vmem>>) attributes {dimension_semantics = [#tpu.dimension_semantics<parallel>, #tpu.dimension_semantics<parallel>], iteration_bounds = array<i64: 2, 2>, scalar_prefetch = 0 : i64, scratch_operands = 0 : i64, tpu.core_type = #tpu.core_type<tc>, window_params = [{transform_indices = @transform_0, window_bounds = array<i64: 1, 1, 184, 4>}, {pipeline_mode = #tpu.pipeline_mode<synchronous>, transform_indices = @transform_1, window_bounds = array<i64: 9, 4, 4>}, {pipeline_mode = #tpu.pipeline_mode<synchronous>, transform_indices = @transform_2, window_bounds = array<i64: 1, 4>}, {pipeline_mode = #tpu.pipeline_mode<synchronous>, transform_indices = @transform_3, window_bounds = array<i64: 1, 4>}, {pipeline_mode = #tpu.pipeline_mode<synchronous>, transform_indices = @transform_4, window_bounds = array<i64: 144, 1>}, {transform_indices = @transform_5, window_bounds = array<i64: 1, 1, 144, 4>}, {transform_indices = @transform_6, window_bounds = array<i64: 1, 1, 2, 4>}]} {
    %c0 = arith.constant 0 : index
    %c0_0 = arith.constant 0 : index
    %c0_1 = arith.constant 0 : index
    %c0_2 = arith.constant 0 : index
    %0 = vector.load %arg2[%c0, %c0_0, %c0_1, %c0_2] : memref<1x1x184x4xbf16, #tpu.memory_space<vmem>>, vector<1x1x184x4xbf16>
    %1 = vector.shape_cast %0 : vector<1x1x184x4xbf16> to vector<184x4xbf16>
    %2 = arith.extf %1 : vector<184x4xbf16> to vector<184x4xf32>
    %c0_3 = arith.constant 0 : index
    %c0_4 = arith.constant 0 : index
    %3 = vector.load %arg4[%c0_3, %c0_4] : memref<1x4xf32, #tpu.memory_space<vmem>>, vector<1x4xf32>
    %4 = vector.broadcast %3 : vector<1x4xf32> to vector<184x4xf32>
    %5 = arith.mulf %2, %4 : vector<184x4xf32>
    %c0_5 = arith.constant 0 : index
    %c0_6 = arith.constant 0 : index
    %6 = vector.load %arg5[%c0_5, %c0_6] : memref<1x4xf32, #tpu.memory_space<vmem>>, vector<1x4xf32>
    %7 = vector.broadcast %6 : vector<1x4xf32> to vector<184x4xf32>
    %8 = arith.addf %5, %7 : vector<184x4xf32>
    %cst = arith.constant 0.000000e+00 : f32
    %9 = vector.broadcast %cst : f32 to vector<184x4xf32>
    %10 = arith.cmpf ogt, %8, %9 : vector<184x4xf32>
    %cst_7 = arith.constant 1.000000e-01 : f32
    %11 = vector.broadcast %cst_7 : f32 to vector<184x4xf32>
    %12 = arith.mulf %11, %8 : vector<184x4xf32>
    %13 = arith.select %10, %8, %12 : vector<184x4xi1>, vector<184x4xf32>
    %cst_8 = arith.constant 0.000000e+00 : f32
    %14 = vector.broadcast %cst_8 : f32 to vector<144x4xf32>
    %15 = vector.extract_strided_slice %13 {offsets = [0, 0], sizes = [144, 4], strides = [1, 1]} : vector<184x4xf32> to vector<144x4xf32>
    %16 = arith.truncf %15 : vector<144x4xf32> to vector<144x4xbf16>
    %c0_9 = arith.constant 0 : index
    %c0_10 = arith.constant 0 : index
    %c0_11 = arith.constant 0 : index
    %17 = vector.load %arg3[%c0_9, %c0_10, %c0_11] : memref<9x4x4xbf16, #tpu.memory_space<vmem>>, vector<1x4x4xbf16>
    %18 = vector.shape_cast %17 : vector<1x4x4xbf16> to vector<4x4xbf16>
    %cst_12 = arith.constant dense<0.000000e+00> : vector<144x4xf32>
    %19 = tpu.matmul %16, %18, %cst_12 {dimension_numbers = #tpu.dot_dimension_numbers<[1], [0], [0], [1], [0, 0, 1, 1], [], []>} : vector<144x4xbf16>, vector<4x4xbf16>, vector<144x4xf32> -> vector<144x4xf32>
    %20 = arith.addf %14, %19 : vector<144x4xf32>
    %21 = vector.extract_strided_slice %13 {offsets = [1, 0], sizes = [144, 4], strides = [1, 1]} : vector<184x4xf32> to vector<144x4xf32>
    %22 = arith.truncf %21 : vector<144x4xf32> to vector<144x4xbf16>
    %c1 = arith.constant 1 : index
    %c0_13 = arith.constant 0 : index
    %c0_14 = arith.constant 0 : index
    %23 = vector.load %arg3[%c1, %c0_13, %c0_14] : memref<9x4x4xbf16, #tpu.memory_space<vmem>>, vector<1x4x4xbf16>
    %24 = vector.shape_cast %23 : vector<1x4x4xbf16> to vector<4x4xbf16>
    %cst_15 = arith.constant dense<0.000000e+00> : vector<144x4xf32>
    %25 = tpu.matmul %22, %24, %cst_15 {dimension_numbers = #tpu.dot_dimension_numbers<[1], [0], [0], [1], [0, 0, 1, 1], [], []>} : vector<144x4xbf16>, vector<4x4xbf16>, vector<144x4xf32> -> vector<144x4xf32>
    %26 = arith.addf %20, %25 : vector<144x4xf32>
    %27 = vector.extract_strided_slice %13 {offsets = [2, 0], sizes = [144, 4], strides = [1, 1]} : vector<184x4xf32> to vector<144x4xf32>
    %28 = arith.truncf %27 : vector<144x4xf32> to vector<144x4xbf16>
    %c2 = arith.constant 2 : index
    %c0_16 = arith.constant 0 : index
    %c0_17 = arith.constant 0 : index
    %29 = vector.load %arg3[%c2, %c0_16, %c0_17] : memref<9x4x4xbf16, #tpu.memory_space<vmem>>, vector<1x4x4xbf16>
    %30 = vector.shape_cast %29 : vector<1x4x4xbf16> to vector<4x4xbf16>
    %cst_18 = arith.constant dense<0.000000e+00> : vector<144x4xf32>
    %31 = tpu.matmul %28, %30, %cst_18 {dimension_numbers = #tpu.dot_dimension_numbers<[1], [0], [0], [1], [0, 0, 1, 1], [], []>} : vector<144x4xbf16>, vector<4x4xbf16>, vector<144x4xf32> -> vector<144x4xf32>
    %32 = arith.addf %26, %31 : vector<144x4xf32>
    %33 = vector.extract_strided_slice %13 {offsets = [18, 0], sizes = [144, 4], strides = [1, 1]} : vector<184x4xf32> to vector<144x4xf32>
    %34 = arith.truncf %33 : vector<144x4xf32> to vector<144x4xbf16>
    %c3 = arith.constant 3 : index
    %c0_19 = arith.constant 0 : index
    %c0_20 = arith.constant 0 : index
    %35 = vector.load %arg3[%c3, %c0_19, %c0_20] : memref<9x4x4xbf16, #tpu.memory_space<vmem>>, vector<1x4x4xbf16>
    %36 = vector.shape_cast %35 : vector<1x4x4xbf16> to vector<4x4xbf16>
    %cst_21 = arith.constant dense<0.000000e+00> : vector<144x4xf32>
    %37 = tpu.matmul %34, %36, %cst_21 {dimension_numbers = #tpu.dot_dimension_numbers<[1], [0], [0], [1], [0, 0, 1, 1], [], []>} : vector<144x4xbf16>, vector<4x4xbf16>, vector<144x4xf32> -> vector<144x4xf32>
    %38 = arith.addf %32, %37 : vector<144x4xf32>
    %39 = vector.extract_strided_slice %13 {offsets = [19, 0], sizes = [144, 4], strides = [1, 1]} : vector<184x4xf32> to vector<144x4xf32>
    %40 = arith.truncf %39 : vector<144x4xf32> to vector<144x4xbf16>
    %c4 = arith.constant 4 : index
    %c0_22 = arith.constant 0 : index
    %c0_23 = arith.constant 0 : index
    %41 = vector.load %arg3[%c4, %c0_22, %c0_23] : memref<9x4x4xbf16, #tpu.memory_space<vmem>>, vector<1x4x4xbf16>
    %42 = vector.shape_cast %41 : vector<1x4x4xbf16> to vector<4x4xbf16>
    %cst_24 = arith.constant dense<0.000000e+00> : vector<144x4xf32>
    %43 = tpu.matmul %40, %42, %cst_24 {dimension_numbers = #tpu.dot_dimension_numbers<[1], [0], [0], [1], [0, 0, 1, 1], [], []>} : vector<144x4xbf16>, vector<4x4xbf16>, vector<144x4xf32> -> vector<144x4xf32>
    %44 = arith.addf %38, %43 : vector<144x4xf32>
    %45 = vector.extract_strided_slice %13 {offsets = [20, 0], sizes = [144, 4], strides = [1, 1]} : vector<184x4xf32> to vector<144x4xf32>
    %46 = arith.truncf %45 : vector<144x4xf32> to vector<144x4xbf16>
    %c5 = arith.constant 5 : index
    %c0_25 = arith.constant 0 : index
    %c0_26 = arith.constant 0 : index
    %47 = vector.load %arg3[%c5, %c0_25, %c0_26] : memref<9x4x4xbf16, #tpu.memory_space<vmem>>, vector<1x4x4xbf16>
    %48 = vector.shape_cast %47 : vector<1x4x4xbf16> to vector<4x4xbf16>
    %cst_27 = arith.constant dense<0.000000e+00> : vector<144x4xf32>
    %49 = tpu.matmul %46, %48, %cst_27 {dimension_numbers = #tpu.dot_dimension_numbers<[1], [0], [0], [1], [0, 0, 1, 1], [], []>} : vector<144x4xbf16>, vector<4x4xbf16>, vector<144x4xf32> -> vector<144x4xf32>
    %50 = arith.addf %44, %49 : vector<144x4xf32>
    %51 = vector.extract_strided_slice %13 {offsets = [36, 0], sizes = [144, 4], strides = [1, 1]} : vector<184x4xf32> to vector<144x4xf32>
    %52 = arith.truncf %51 : vector<144x4xf32> to vector<144x4xbf16>
    %c6 = arith.constant 6 : index
    %c0_28 = arith.constant 0 : index
    %c0_29 = arith.constant 0 : index
    %53 = vector.load %arg3[%c6, %c0_28, %c0_29] : memref<9x4x4xbf16, #tpu.memory_space<vmem>>, vector<1x4x4xbf16>
    %54 = vector.shape_cast %53 : vector<1x4x4xbf16> to vector<4x4xbf16>
    %cst_30 = arith.constant dense<0.000000e+00> : vector<144x4xf32>
    %55 = tpu.matmul %52, %54, %cst_30 {dimension_numbers = #tpu.dot_dimension_numbers<[1], [0], [0], [1], [0, 0, 1, 1], [], []>} : vector<144x4xbf16>, vector<4x4xbf16>, vector<144x4xf32> -> vector<144x4xf32>
    %56 = arith.addf %50, %55 : vector<144x4xf32>
    %57 = vector.extract_strided_slice %13 {offsets = [37, 0], sizes = [144, 4], strides = [1, 1]} : vector<184x4xf32> to vector<144x4xf32>
    %58 = arith.truncf %57 : vector<144x4xf32> to vector<144x4xbf16>
    %c7 = arith.constant 7 : index
    %c0_31 = arith.constant 0 : index
    %c0_32 = arith.constant 0 : index
    %59 = vector.load %arg3[%c7, %c0_31, %c0_32] : memref<9x4x4xbf16, #tpu.memory_space<vmem>>, vector<1x4x4xbf16>
    %60 = vector.shape_cast %59 : vector<1x4x4xbf16> to vector<4x4xbf16>
    %cst_33 = arith.constant dense<0.000000e+00> : vector<144x4xf32>
    %61 = tpu.matmul %58, %60, %cst_33 {dimension_numbers = #tpu.dot_dimension_numbers<[1], [0], [0], [1], [0, 0, 1, 1], [], []>} : vector<144x4xbf16>, vector<4x4xbf16>, vector<144x4xf32> -> vector<144x4xf32>
    %62 = arith.addf %56, %61 : vector<144x4xf32>
    %63 = vector.extract_strided_slice %13 {offsets = [38, 0], sizes = [144, 4], strides = [1, 1]} : vector<184x4xf32> to vector<144x4xf32>
    %64 = arith.truncf %63 : vector<144x4xf32> to vector<144x4xbf16>
    %c8 = arith.constant 8 : index
    %c0_34 = arith.constant 0 : index
    %c0_35 = arith.constant 0 : index
    %65 = vector.load %arg3[%c8, %c0_34, %c0_35] : memref<9x4x4xbf16, #tpu.memory_space<vmem>>, vector<1x4x4xbf16>
    %66 = vector.shape_cast %65 : vector<1x4x4xbf16> to vector<4x4xbf16>
    %cst_36 = arith.constant dense<0.000000e+00> : vector<144x4xf32>
    %67 = tpu.matmul %64, %66, %cst_36 {dimension_numbers = #tpu.dot_dimension_numbers<[1], [0], [0], [1], [0, 0, 1, 1], [], []>} : vector<144x4xbf16>, vector<4x4xbf16>, vector<144x4xf32> -> vector<144x4xf32>
    %68 = arith.addf %62, %67 : vector<144x4xf32>
    %69 = arith.truncf %68 : vector<144x4xf32> to vector<144x4xbf16>
    %70 = vector.shape_cast %69 : vector<144x4xbf16> to vector<1x1x144x4xbf16>
    %c0_37 = arith.constant 0 : index
    %c0_38 = arith.constant 0 : index
    %c0_39 = arith.constant 0 : index
    %c0_40 = arith.constant 0 : index
    %71 = vector.load %arg7[%c0_37, %c0_38, %c0_39, %c0_40] : memref<1x1x144x4xbf16, #tpu.memory_space<vmem>>, vector<1x1x144x4xbf16>
    tpu.vector_store %arg7[%c0_37, %c0_38, %c0_39, %c0_40], %70 {strides = array<i32>} : memref<1x1x144x4xbf16, #tpu.memory_space<vmem>>, vector<1x1x144x4xbf16>,
    %c0_41 = arith.constant 0 : index
    %c0_42 = arith.constant 0 : index
    %72 = vector.load %arg6[%c0_41, %c0_42] : memref<144x1xf32, #tpu.memory_space<vmem>>, vector<144x1xf32>
    %73 = vector.broadcast %72 : vector<144x1xf32> to vector<144x4xf32>
    %74 = arith.mulf %68, %73 : vector<144x4xf32>
    %cst_43 = arith.constant dense<0.000000e+00> : vector<4xf32>
    %75 = vector.multi_reduction <add>, %74, %cst_43 [0] : vector<144x4xf32> to vector<4xf32>
    %76 = vector.shape_cast %75 : vector<4xf32> to vector<1x4xf32>
    %77 = arith.mulf %68, %68 : vector<144x4xf32>
    %78 = vector.broadcast %72 : vector<144x1xf32> to vector<144x4xf32>
    %79 = arith.mulf %77, %78 : vector<144x4xf32>
    %cst_44 = arith.constant dense<0.000000e+00> : vector<4xf32>
    %80 = vector.multi_reduction <add>, %79, %cst_44 [0] : vector<144x4xf32> to vector<4xf32>
    %81 = vector.shape_cast %80 : vector<4xf32> to vector<1x4xf32>
    %82 = tpu.concatenate %76, %81 in 0 : vector<1x4xf32>, vector<1x4xf32> -> vector<2x4xf32>
    %83 = vector.shape_cast %82 : vector<2x4xf32> to vector<1x1x2x4xf32>
    %c0_45 = arith.constant 0 : index
    %c0_46 = arith.constant 0 : index
    %c0_47 = arith.constant 0 : index
    %c0_48 = arith.constant 0 : index
    %84 = vector.load %arg8[%c0_45, %c0_46, %c0_47, %c0_48] : memref<1x1x2x4xf32, #tpu.memory_space<vmem>>, vector<1x1x2x4xf32>
    tpu.vector_store %arg8[%c0_45, %c0_46, %c0_47, %c0_48], %83 {strides = array<i32>} : memref<1x1x2x4xf32, #tpu.memory_space<vmem>>, vector<1x1x2x4xf32>,
    return
  }
  func.func @transform_0(%arg0: i32, %arg1: i32) -> (i32, i32, i32, i32) {
    %c0_i32 = arith.constant 0 : i32
    %c0_i32_0 = arith.constant 0 : i32
    %c0_i32_1 = arith.constant 0 : i32
    return %arg0, %arg1, %c0_i32, %c0_i32_0 : i32, i32, i32, i32
  }
  func.func @transform_1(%arg0: i32, %arg1: i32) -> (i32, i32, i32) {
    %c0_i32 = arith.constant 0 : i32
    %c0_i32_0 = arith.constant 0 : i32
    %c0_i32_1 = arith.constant 0 : i32
    %c0_i32_2 = arith.constant 0 : i32
    return %c0_i32, %c0_i32_0, %c0_i32_1 : i32, i32, i32
  }
  func.func @transform_2(%arg0: i32, %arg1: i32) -> (i32, i32) {
    %c0_i32 = arith.constant 0 : i32
    %c0_i32_0 = arith.constant 0 : i32
    %c0_i32_1 = arith.constant 0 : i32
    return %c0_i32, %c0_i32_0 : i32, i32
  }
  func.func @transform_3(%arg0: i32, %arg1: i32) -> (i32, i32) {
    %c0_i32 = arith.constant 0 : i32
    %c0_i32_0 = arith.constant 0 : i32
    %c0_i32_1 = arith.constant 0 : i32
    return %c0_i32, %c0_i32_0 : i32, i32
  }
  func.func @transform_4(%arg0: i32, %arg1: i32) -> (i32, i32) {
    %c0_i32 = arith.constant 0 : i32
    %c0_i32_0 = arith.constant 0 : i32
    %c0_i32_1 = arith.constant 0 : i32
    return %c0_i32, %c0_i32_0 : i32, i32
  }
  func.func @transform_5(%arg0: i32, %arg1: i32) -> (i32, i32, i32, i32) {
    %c0_i32 = arith.constant 0 : i32
    %c0_i32_0 = arith.constant 0 : i32
    %c0_i32_1 = arith.constant 0 : i32
    return %arg0, %arg1, %c0_i32, %c0_i32_0 : i32, i32, i32, i32
  }
  func.func @transform_6(%arg0: i32, %arg1: i32) -> (i32, i32, i32, i32) {
    %c0_i32 = arith.constant 0 : i32
    %c0_i32_0 = arith.constant 0 : i32
    %c0_i32_1 = arith.constant 0 : i32
    return %arg0, %arg1, %c0_i32, %c0_i32_0 : i32, i32, i32, i32
  }
}

module attributes {stable_mosaic.version = 11 : i64} {
  func.func @bn_act_residual_kernel(%arg0: i32, %arg1: i32, %arg2: memref<1x16x64xbf16, #tpu.memory_space<vmem>>, %arg3: memref<1x16x64xf32, #tpu.memory_space<vmem>>, %arg4: memref<1x64xf32, #tpu.memory_space<vmem>>, %arg5: memref<1x64xf32, #tpu.memory_space<vmem>>, %arg6: memref<1x16x64xf32, #tpu.memory_space<vmem>>) attributes {dimension_semantics = [#tpu.dimension_semantics<parallel>, #tpu.dimension_semantics<parallel>], iteration_bounds = array<i64: 2, 1>, scalar_prefetch = 0 : i64, scratch_operands = 0 : i64, tpu.core_type = #tpu.core_type<tc>, window_params = [{transform_indices = @transform_0, window_bounds = array<i64: 1, 16, 64>}, {transform_indices = @transform_1, window_bounds = array<i64: 1, 16, 64>}, {pipeline_mode = #tpu.pipeline_mode<synchronous>, transform_indices = @transform_2, window_bounds = array<i64: 1, 64>}, {pipeline_mode = #tpu.pipeline_mode<synchronous>, transform_indices = @transform_3, window_bounds = array<i64: 1, 64>}, {transform_indices = @transform_4, window_bounds = array<i64: 1, 16, 64>}]} {
    %c0 = arith.constant 0 : index
    %c0_0 = arith.constant 0 : index
    %c0_1 = arith.constant 0 : index
    %0 = vector.load %arg2[%c0, %c0_0, %c0_1] : memref<1x16x64xbf16, #tpu.memory_space<vmem>>, vector<1x16x64xbf16>
    %1 = arith.extf %0 : vector<1x16x64xbf16> to vector<1x16x64xf32>
    %c0_2 = arith.constant 0 : index
    %c0_3 = arith.constant 0 : index
    %2 = vector.load %arg4[%c0_2, %c0_3] : memref<1x64xf32, #tpu.memory_space<vmem>>, vector<1x64xf32>
    %3 = vector.shape_cast %2 : vector<1x64xf32> to vector<1x1x64xf32>
    %4 = vector.broadcast %3 : vector<1x1x64xf32> to vector<1x16x64xf32>
    %5 = arith.mulf %1, %4 : vector<1x16x64xf32>
    %c0_4 = arith.constant 0 : index
    %c0_5 = arith.constant 0 : index
    %6 = vector.load %arg5[%c0_4, %c0_5] : memref<1x64xf32, #tpu.memory_space<vmem>>, vector<1x64xf32>
    %7 = vector.shape_cast %6 : vector<1x64xf32> to vector<1x1x64xf32>
    %8 = vector.broadcast %7 : vector<1x1x64xf32> to vector<1x16x64xf32>
    %9 = arith.addf %5, %8 : vector<1x16x64xf32>
    %cst = arith.constant 0.000000e+00 : f32
    %10 = vector.broadcast %cst : f32 to vector<1x16x64xf32>
    %11 = arith.cmpf ogt, %9, %10 : vector<1x16x64xf32>
    %cst_6 = arith.constant 1.000000e-01 : f32
    %12 = vector.broadcast %cst_6 : f32 to vector<1x16x64xf32>
    %13 = arith.mulf %12, %9 : vector<1x16x64xf32>
    %14 = arith.select %11, %9, %13 : vector<1x16x64xi1>, vector<1x16x64xf32>
    %c0_7 = arith.constant 0 : index
    %c0_8 = arith.constant 0 : index
    %c0_9 = arith.constant 0 : index
    %15 = vector.load %arg3[%c0_7, %c0_8, %c0_9] : memref<1x16x64xf32, #tpu.memory_space<vmem>>, vector<1x16x64xf32>
    %16 = arith.addf %15, %14 : vector<1x16x64xf32>
    %c0_10 = arith.constant 0 : index
    %c0_11 = arith.constant 0 : index
    %c0_12 = arith.constant 0 : index
    %17 = vector.load %arg6[%c0_10, %c0_11, %c0_12] : memref<1x16x64xf32, #tpu.memory_space<vmem>>, vector<1x16x64xf32>
    tpu.vector_store %arg6[%c0_10, %c0_11, %c0_12], %16 {strides = array<i32>} : memref<1x16x64xf32, #tpu.memory_space<vmem>>, vector<1x16x64xf32>,
    return
  }
  func.func @transform_0(%arg0: i32, %arg1: i32) -> (i32, i32, i32) {
    %c0_i32 = arith.constant 0 : i32
    %c0_i32_0 = arith.constant 0 : i32
    return %arg0, %arg1, %c0_i32 : i32, i32, i32
  }
  func.func @transform_1(%arg0: i32, %arg1: i32) -> (i32, i32, i32) {
    %c0_i32 = arith.constant 0 : i32
    %c0_i32_0 = arith.constant 0 : i32
    return %arg0, %arg1, %c0_i32 : i32, i32, i32
  }
  func.func @transform_2(%arg0: i32, %arg1: i32) -> (i32, i32) {
    %c0_i32 = arith.constant 0 : i32
    %c0_i32_0 = arith.constant 0 : i32
    %c0_i32_1 = arith.constant 0 : i32
    return %c0_i32, %c0_i32_0 : i32, i32
  }
  func.func @transform_3(%arg0: i32, %arg1: i32) -> (i32, i32) {
    %c0_i32 = arith.constant 0 : i32
    %c0_i32_0 = arith.constant 0 : i32
    %c0_i32_1 = arith.constant 0 : i32
    return %c0_i32, %c0_i32_0 : i32, i32
  }
  func.func @transform_4(%arg0: i32, %arg1: i32) -> (i32, i32, i32) {
    %c0_i32 = arith.constant 0 : i32
    %c0_i32_0 = arith.constant 0 : i32
    return %arg0, %arg1, %c0_i32 : i32, i32, i32
  }
}

</mosaic_0001>

<llo_original>
// kernel: residual_forward.7
$region0: #{residual_forward.7}
  #allocation0 [shape = 'u32[]', space=smem, size = 0x4, offset = 0x4, fixed_abs, tag = 'smem constant byte address 0x4 - core index']
  #allocation1 [shape = 'u32[144,128]{1,0:T(1,128)}', space=vmem, size = 0x12000, scoped, tag = 'internal scratch']
  %s0 = inlined_call_operand.vmem [shape: bf16[2,16,64], index: 0, kind: input, shape index: {}]
  %s1 = inlined_call_operand.vmem [shape: f32[2,16,64], index: 1, kind: input, shape index: {}]
  %s2 = inlined_call_operand.vmem [shape: f32[1,64], index: 2, kind: input, shape index: {}]
  %s3 = inlined_call_operand.vmem [shape: f32[1,64], index: 3, kind: input, shape index: {}]
  %s4 = inlined_call_operand.vmem [shape: f32[2,16,64], index: 4, kind: output, shape index: {}]
  %s5 = sld [smem:[#allocation0]]
  $region49: #{residual_forward.7} parent=0
    _
  %s7 = ssub.s32 1, %s5
  %s8 = scalar_select 0, %s7, %s5
  loop: start=0, step=1, limit=4
  $region2: #{residual_forward.7} parent=0 // loop_pre_header
    _
  $region3: #{residual_forward.7} parent=0 // loop_header
    %s10 = sphi 0, %s14
    %p11 = scmp.ge.s32.totalorder %s10, 4
    %s17 = sphi 0, %s29
    %s18 = sphi 0, %s25
    %s19 = sphi 0, %s17
    %s20 = sphi 0, %s18
    %s21 = sphi 0, %s19
    %s22 = sphi 0, %s20
    %s34 = sphi 0, %s36
    %s37 = sphi 0, %s34
    %s38 = sphi 0, %s37
    %s54 = sphi 0, %s38
    %s62 = sphi 0, %s64
    %s65 = sphi 0, %s62
    %s66 = sphi 0, %s65
    %s82 = sphi 0, %s66
    %s86 = sphi 0, %s86
    %s88 = sphi 0, %s86
    %s89 = sphi 0, %s88
    %s103 = sphi 0, %s89
    %s107 = sphi 0, %s107
    %s109 = sphi 0, %s107
    %s110 = sphi 0, %s109
    %s124 = sphi 0, %s110
    %s132 = sphi 0, %s134
    %s135 = sphi 0, %s132
    %s136 = sphi 0, %s135
    %s152 = sphi 0, %s136
  $region4: #{residual_forward.7} parent=0 // loop_header_branch
    %13 = sbr.rel (%p11) target = $region8
  $region5: #{residual_forward.7} parent=0 // loop_body
    %s15 = ssub.s32 %s10, 1
    %s16 = ssub.s32 %s10, 2
    %s23 = sadd.s32 1, %s18
    %p24 = scmp.ge.s32.totalorder %s23, 1
    %s25 = scalar_select %p24, 0, %s23
    %s26 = sadd.s32 1, %s17
    %s27 = scalar_select %p24, %s26, %s17
    %p28 = scmp.ge.s32.totalorder %s27, 2
    %s29 = scalar_select %p28, 0, %s27
    %s30 = ssub.s32 %s17, %s29
    %s31 = ssub.s32 %s18, %s25
    %s32 = sor.u32 %s30, %s31
    %p33 = scmp.eq.s32.totalorder %s32, 0
    %s35 = sadd.s32 %s34, 1
    %s36 = scalar_select %p33, %s34, %s35
    %p39 = pneg %p33
    %p40 = scmp.eq.s32.totalorder %s10, 1
    %p41 = por %p39, %p40
    %p42 = scmp.ne.s32.totalorder %s34, %s37
    %p43 = scmp.eq.s32.totalorder %s10, 0
    %p44 = por %p42, %p43
    %p45 = scmp.ne.s32.totalorder %s34, %s37
    %p46 = scmp.eq.s32.totalorder %s15, 1
    %p47 = por %p45, %p46
    %p48 = scmp.ne.s32.totalorder %s37, %s38
    %p49 = scmp.eq.s32.totalorder %s15, 0
    %p50 = por %p48, %p49
    %p51 = scmp.ne.s32.totalorder %s37, %s38
    %p52 = scmp.eq.s32.totalorder %s16, 1
    %p53 = por %p51, %p52
    %p55 = scmp.ne.s32.totalorder %s38, %s54
    %p56 = scmp.eq.s32.totalorder %s16, 0
    %p57 = por %p55, %p56
    %s58 = ssub.s32 %s17, %s29
    %s59 = ssub.s32 %s18, %s25
    %s60 = sor.u32 %s58, %s59
    %p61 = scmp.eq.s32.totalorder %s60, 0
    %s63 = sadd.s32 %s62, 1
    %s64 = scalar_select %p61, %s62, %s63
    %p67 = pneg %p61
    %p68 = scmp.eq.s32.totalorder %s10, 1
    %p69 = por %p67, %p68
    %p70 = scmp.ne.s32.totalorder %s62, %s65
    %p71 = scmp.eq.s32.totalorder %s10, 0
    %p72 = por %p70, %p71
    %p73 = scmp.ne.s32.totalorder %s62, %s65
    %p74 = scmp.eq.s32.totalorder %s15, 1
    %p75 = por %p73, %p74
    %p76 = scmp.ne.s32.totalorder %s65, %s66
    %p77 = scmp.eq.s32.totalorder %s15, 0
    %p78 = por %p76, %p77
    %p79 = scmp.ne.s32.totalorder %s65, %s66
    %p80 = scmp.eq.s32.totalorder %s16, 1
    %p81 = por %p79, %p80
    %p83 = scmp.ne.s32.totalorder %s66, %s82
    %p84 = scmp.eq.s32.totalorder %s16, 0
    %p85 = por %p83, %p84
    %s87 = sadd.s32 %s86, 1
    %p90 = scmp.eq.s32.totalorder %s10, 1
    %p91 = scmp.ne.s32.totalorder %s86, %s88
    %p92 = scmp.eq.s32.totalorder %s10, 0
    %p93 = por %p91, %p92
    %p94 = scmp.ne.s32.totalorder %s86, %s88
    %p95 = scmp.eq.s32.totalorder %s15, 1
    %p96 = por %p94, %p95
    %p97 = scmp.ne.s32.totalorder %s88, %s89
    %p98 = scmp.eq.s32.totalorder %s15, 0
    %p99 = por %p97, %p98
    %p100 = scmp.ne.s32.totalorder %s88, %s89
    %p101 = scmp.eq.s32.totalorder %s16, 1
    %p102 = por %p100, %p101
    %p104 = scmp.ne.s32.totalorder %s89, %s103
    %p105 = scmp.eq.s32.totalorder %s16, 0
    %p106 = por %p104, %p105
    %s108 = sadd.s32 %s107, 1
    %p111 = scmp.eq.s32.totalorder %s10, 1
    %p112 = scmp.ne.s32.totalorder %s107, %s109
    %p113 = scmp.eq.s32.totalorder %s10, 0
    %p114 = por %p112, %p113
    %p115 = scmp.ne.s32.totalorder %s107, %s109
    %p116 = scmp.eq.s32.totalorder %s15, 1
    %p117 = por %p115, %p116
    %p118 = scmp.ne.s32.totalorder %s109, %s110
    %p119 = scmp.eq.s32.totalorder %s15, 0
    %p120 = por %p118, %p119
    %p121 = scmp.ne.s32.totalorder %s109, %s110
    %p122 = scmp.eq.s32.totalorder %s16, 1
    %p123 = por %p121, %p122
    %p125 = scmp.ne.s32.totalorder %s110, %s124
    %p126 = scmp.eq.s32.totalorder %s16, 0
    %p127 = por %p125, %p126
    %s128 = ssub.s32 %s17, %s29
    %s129 = ssub.s32 %s18, %s25
    %s130 = sor.u32 %s128, %s129
    %p131 = scmp.eq.s32.totalorder %s130, 0
    %s133 = sadd.s32 %s132, 1
    %s134 = scalar_select %p131, %s132, %s133
    %p137 = pneg %p131
    %p138 = scmp.eq.s32.totalorder %s10, 1
    %p139 = por %p137, %p138
    %p140 = scmp.ne.s32.totalorder %s132, %s135
    %p141 = scmp.eq.s32.totalorder %s10, 0
    %p142 = por %p140, %p141
    %p143 = scmp.ne.s32.totalorder %s132, %s135
    %p144 = scmp.eq.s32.totalorder %s15, 1
    %p145 = por %p143, %p144
    %p146 = scmp.ne.s32.totalorder %s135, %s136
    %p147 = scmp.eq.s32.totalorder %s15, 0
    %p148 = por %p146, %p147
    %p149 = scmp.ne.s32.totalorder %s135, %s136
    %p150 = scmp.eq.s32.totalorder %s16, 1
    %p151 = por %p149, %p150
    %p153 = scmp.ne.s32.totalorder %s136, %s152
    %p154 = scmp.eq.s32.totalorder %s16, 0
    %p155 = por %p153, %p154
    %p156 = scmp.le.s32.totalorder 1, %s10
    %p157 = scmp.lt.s32.totalorder %s10, 3
    %p158 = pnand %p156, %p157
    %p159 = pneg %p158
    // Predicated region
    $region9: #{residual_forward.7} parent=5 // pred_check
      _
    $region10: #{residual_forward.7} parent=5 // pred_check_branch
      %161 = sbr.rel (%p158) target = $region12
    $region11: #{residual_forward.7} parent=5 // pred_region
      %s162 = ssub.s32 %s10, 1
      // Predicated region
      $region13: #{residual_forward.7} parent=11 // pred_check
        %p163 = pneg %p99
      $region14: #{residual_forward.7} parent=11 // pred_check_branch
        %165 = sbr.rel (%p163) target = $region16
      $region15: #{residual_forward.7} parent=11 // pred_region
        _
      $region16: #{residual_forward.7} parent=11 // pred_fallthru
        _
      // Predicated region
      $region17: #{residual_forward.7} parent=11 // pred_check
        %p166 = pneg %p120
      $region18: #{residual_forward.7} parent=11 // pred_check_branch
        %168 = sbr.rel (%p166) target = $region20
      $region19: #{residual_forward.7} parent=11 // pred_region
        _
      $region20: #{residual_forward.7} parent=11 // pred_fallthru
        _
    $region12: #{residual_forward.7} parent=5 // pred_fallthru
      _
    %p169 = scmp.lt.s32.totalorder %s10, 2
    // Predicated region
    $region21: #{residual_forward.7} parent=5 // pred_check
      %p170 = pneg %p169
    $region22: #{residual_forward.7} parent=5 // pred_check_branch
      %172 = sbr.rel (%p170) target = $region24
    $region23: #{residual_forward.7} parent=5 // pred_region
      // Predicated region
      $region25: #{residual_forward.7} parent=23 // pred_check
        %p173 = pneg %p44
      $region26: #{residual_forward.7} parent=23 // pred_check_branch
        %175 = sbr.rel (%p173) target = $region28
      $region27: #{residual_forward.7} parent=23 // pred_region
        %s176 = smul.u32 2, %s18
        %p177 = scmp.lt.s32.totalorder %s17, 1
        %s178 = scalar_select %p177, %s17, 1
        %p179 = scmp.lt.s32.totalorder %s176, 1
        %s180 = scalar_select %p179, %s176, 1
        %s181 = smul.addr %s178, 2
        %s182 = sadd.s32 %s180, %s181
        %s183 = smul.addr %s182, 4
        %s184 = scalar_lea.vmem %s0, %s183
        %s185 = smul.u32 2, %s18
      $region28: #{residual_forward.7} parent=23 // pred_fallthru
        _
      // Predicated region
      $region29: #{residual_forward.7} parent=23 // pred_check
        %p186 = pneg %p72
      $region30: #{residual_forward.7} parent=23 // pred_check_branch
        %188 = sbr.rel (%p186) target = $region32
      $region31: #{residual_forward.7} parent=23 // pred_region
        %s189 = smul.u32 2, %s18
        %p190 = scmp.lt.s32.totalorder %s17, 1
        %s191 = scalar_select %p190, %s17, 1
        %p192 = scmp.lt.s32.totalorder %s189, 1
        %s193 = scalar_select %p192, %s189, 1
        %s194 = smul.addr %s191, 2
        %s195 = sadd.s32 %s193, %s194
        %s196 = smul.addr %s195, 8
        %s197 = scalar_lea.vmem %s1, %s196
        %s198 = smul.u32 2, %s18
      $region32: #{residual_forward.7} parent=23 // pred_fallthru
        _
    $region24: #{residual_forward.7} parent=5 // pred_fallthru
      _
    %p199 = scmp.le.s32.totalorder 1, %s10
    %p200 = scmp.lt.s32.totalorder %s10, 3
    %p201 = pnand %p199, %p200
    %p202 = pneg %p201
    // Predicated region
    $region33: #{residual_forward.7} parent=5 // pred_check
      _
    $region34: #{residual_forward.7} parent=5 // pred_check_branch
      %204 = sbr.rel (%p201) target = $region36
    $region35: #{residual_forward.7} parent=5 // pred_region
      %s205 = ssub.s32 %s10, 1
      %s206 = smul.u32 2, %s20
      %p207 = scmp.lt.s32.totalorder %s19, 1
      %s208 = scalar_select %p207, %s19, 1
      %p209 = scmp.lt.s32.totalorder %s206, 1
      %s210 = scalar_select %p209, %s206, 1
      %s211 = smul.addr %s208, 2
      %s212 = sadd.s32 %s210, %s211
      %s213 = smul.addr %s212, 4
      %s214 = scalar_lea.vmem %s0, %s213
      %p215 = pneg %p50
      %p216 = pneg %p47
      %s217 = smul.u32 2, %s20
      %p218 = scmp.lt.s32.totalorder %s19, 1
      %s219 = scalar_select %p218, %s19, 1
      %p220 = scmp.lt.s32.totalorder %s217, 1
      %s221 = scalar_select %p220, %s217, 1
      %s222 = smul.addr %s219, 2
      %s223 = sadd.s32 %s221, %s222
      %s224 = smul.addr %s223, 8
      %s225 = scalar_lea.vmem %s1, %s224
      %p226 = pneg %p78
      %p227 = pneg %p75
      %p228 = pneg %p99
      %p229 = pneg %p96
      %p230 = pneg %p120
      %p231 = pneg %p117
      %p232 = pneg %p148
      %p233 = pneg %p145
      %s234 = smul.u32 2, %s20
      %p235 = scmp.lt.s32.totalorder %s19, 1
      %s236 = scalar_select %p235, %s19, 1
      %p237 = scmp.lt.s32.totalorder %s234, 1
      %s238 = scalar_select %p237, %s234, 1
      %s239 = smul.addr %s236, 2
      %s240 = sadd.s32 %s238, %s239
      %s241 = smul.addr %s240, 8
      %s242 = scalar_lea.vmem %s4, %s241
      %s243 = smul.u32 2, %s20
      %p244 = scmp.lt.s32.totalorder %s19, 1
      %s245 = scalar_select %p244, %s19, 1
      %p246 = scmp.lt.s32.totalorder %s243, 1
      %s247 = scalar_select %p246, %s243, 1
      %s248 = smul.addr %s245, 2
      %s249 = sadd.s32 %s247, %s248
      %s250 = smul.addr %s249, 4
      %s251 = scalar_lea.vmem %s0, %s250
      %s252 = smul.u32 2, %s20
      %s253 = smul.u32 2, %s20
      %p254 = scmp.lt.s32.totalorder %s19, 1
      %s255 = scalar_select %p254, %s19, 1
      %p256 = scmp.lt.s32.totalorder %s253, 1
      %s257 = scalar_select %p256, %s253, 1
      %s258 = smul.addr %s255, 2
      %s259 = sadd.s32 %s257, %s258
      %s260 = smul.addr %s259, 8
      %s261 = scalar_lea.vmem %s1, %s260
      %s262 = smul.u32 2, %s20
      %s263 = smul.u32 2, %s20
      %p264 = scmp.lt.s32.totalorder %s19, 1
      %s265 = scalar_select %p264, %s19, 1
      %p266 = scmp.lt.s32.totalorder %s263, 1
      %s267 = scalar_select %p266, %s263, 1
      %s268 = smul.addr %s265, 2
      %s269 = sadd.s32 %s267, %s268
      %s270 = smul.addr %s269, 8
      %s271 = scalar_lea.vmem %s4, %s270
      %s272 = smul.u32 2, %s20
      %v273 = vld [vmem:[%s251] sm:$0xf]
      %v274 = vld [vmem:[%s251 + $0x4] sm:$0xf]
      %v275 = vunpack.c.l.bf16 %v273
      %v276 = vunpack.c.l.bf16 %v274
      %v277 = vld [vmem:[%s2] sm:$0x1]
      %v279 = vlaneseq
      %v280 = vshrl.u32 %v279, 7
      %v281 = vsub.s32 0, %v280
      %v282 = vrot.slane %v277, %v281
      %v284 = vmul.f32 %v275, %v282
      %v285 = vmul.f32 %v276, %v282
      %v286 = vld [vmem:[%s3] sm:$0x1]
      %v288 = vlaneseq
      %v289 = vshrl.u32 %v288, 7
      %v290 = vsub.s32 0, %v289
      %v291 = vrot.slane %v286, %v290
      %v293 = vadd.f32 %v284, %v291
      %v294 = vadd.f32 %v285, %v291
      %vm295 = vcmp.gt.f32.partialorder %v293, 0.0
      %vm296 = vcmp.gt.f32.partialorder %v294, 0.0
      %v297 = vmul.f32 %v293, 0.1
      %v298 = vmul.f32 %v294, 0.1
      %v299 = vsel %vm295, %v293, %v297
      %v300 = vsel %vm296, %v294, %v298
      %v301 = vld [vmem:[%s261] sm:$0xff]
      %v302 = vld [vmem:[%s261 + $0x8] sm:$0xff]
      %v303 = vadd.f32 %v301, %v299
      %v304 = vadd.f32 %v302, %v300
      %vm305 = vcmask 523264
      %306 = vst.msk [vmem:[%s271] sm:$0xff] %vm305, %v303
      %307 = vst.msk [vmem:[%s271 + $0x8] sm:$0xff] %vm305, %v304
      %s308 = smul.u32 2, %s20
      %p309 = scmp.lt.s32.totalorder %s19, 1
      %s310 = scalar_select %p309, %s19, 1
      %p311 = scmp.lt.s32.totalorder %s308, 1
      %s312 = scalar_select %p311, %s308, 1
      %s313 = smul.addr %s310, 2
      %s314 = sadd.s32 %s312, %s313
      %s315 = smul.addr %s314, 8
      %s316 = scalar_lea.vmem %s4, %s315
      // Predicated region
      $region37: #{residual_forward.7} parent=35 // pred_check
        %p317 = pneg %p145
      $region38: #{residual_forward.7} parent=35 // pred_check_branch
        %319 = sbr.rel (%p317) target = $region40
      $region39: #{residual_forward.7} parent=35 // pred_region
        %s320 = smul.u32 2, %s20
      $region40: #{residual_forward.7} parent=35 // pred_fallthru
        _
    $region36: #{residual_forward.7} parent=5 // pred_fallthru
      _
    %p321 = scmp.le.s32.totalorder 2, %s10
    // Predicated region
    $region41: #{residual_forward.7} parent=5 // pred_check
      %p322 = pneg %p321
    $region42: #{residual_forward.7} parent=5 // pred_check_branch
      %324 = sbr.rel (%p322) target = $region44
    $region43: #{residual_forward.7} parent=5 // pred_region
      %s325 = ssub.s32 %s10, 2
      // Predicated region
      $region45: #{residual_forward.7} parent=43 // pred_check
        %p326 = pneg %p151
      $region46: #{residual_forward.7} parent=43 // pred_check_branch
        %328 = sbr.rel (%p326) target = $region48
      $region47: #{residual_forward.7} parent=43 // pred_region
        %s329 = smul.u32 2, %s22
        %p330 = scmp.lt.s32.totalorder %s21, 1
        %s331 = scalar_select %p330, %s21, 1
        %p332 = scmp.lt.s32.totalorder %s329, 1
        %s333 = scalar_select %p332, %s329, 1
        %s334 = smul.addr %s331, 2
        %s335 = sadd.s32 %s333, %s334
        %s336 = smul.addr %s335, 8
        %s337 = scalar_lea.vmem %s4, %s336
      $region48: #{residual_forward.7} parent=43 // pred_fallthru
        _
    $region44: #{residual_forward.7} parent=5 // pred_fallthru
      _
  $region6: #{residual_forward.7} parent=0 // loop_footer
    %s14 = sadd.s32 1, %s10
  $region7: #{residual_forward.7} parent=0 // loop_footer_branch
    %9 = sbr.rel target = $region3
  $region8: #{residual_forward.7} parent=0 // loop_exit
    _

// kernel: residual_forward.4
$region0: #{residual_forward.4}
  #allocation0 [shape = 'u32[]', space=smem, size = 0x4, offset = 0x4, fixed_abs, tag = 'smem constant byte address 0x4 - core index']
  #allocation1 [shape = 'u32[144,128]{1,0:T(1,128)}', space=vmem, size = 0x12000, scoped, tag = 'internal scratch']
  %s0 = inlined_call_operand.vmem [shape: bf16[2,2,184,4], index: 0, kind: input, shape index: {}]
  %s1 = inlined_call_operand.vmem [shape: bf16[9,4,4], index: 1, kind: input, shape index: {}]
  %s2 = inlined_call_operand.vmem [shape: f32[1,4], index: 2, kind: input, shape index: {}]
  %s3 = inlined_call_operand.vmem [shape: f32[1,4], index: 3, kind: input, shape index: {}]
  %s4 = inlined_call_operand.vmem [shape: f32[144,1], index: 4, kind: input, shape index: {}]
  %s5 = inlined_call_operand.vmem [shape: bf16[2,2,144,4], index: 5, kind: output, shape index: {0}]
  %s6 = inlined_call_operand.vmem [shape: f32[2,2,2,4], index: 6, kind: output, shape index: {1}]
  %7 = xla_tuple %s5, %s6
  %s8 = sld [smem:[#allocation0]]
  $region61: #{residual_forward.4} parent=0
    _
  %s10 = ssub.s32 1, %s8
  %s11 = scalar_select 0, %s10, %s8
  loop: start=0, step=1, limit=6
  $region2: #{residual_forward.4} parent=0 // loop_pre_header
    _
  $region3: #{residual_forward.4} parent=0 // loop_header
    %s13 = sphi 0, %s17
    %p14 = scmp.ge.s32.totalorder %s13, 6
    %s20 = sphi 0, %s32
    %s21 = sphi 0, %s28
    %s22 = sphi 0, %s20
    %s23 = sphi 0, %s21
    %s24 = sphi 0, %s22
    %s25 = sphi 0, %s23
    %s37 = sphi 0, %s39
    %s40 = sphi 0, %s37
    %s41 = sphi 0, %s40
    %s57 = sphi 0, %s41
    %s61 = sphi 0, %s61
    %s63 = sphi 0, %s61
    %s64 = sphi 0, %s63
    %s78 = sphi 0, %s64
    %s82 = sphi 0, %s82
    %s84 = sphi 0, %s82
    %s85 = sphi 0, %s84
    %s99 = sphi 0, %s85
    %s103 = sphi 0, %s103
    %s105 = sphi 0, %s103
    %s106 = sphi 0, %s105
    %s120 = sphi 0, %s106
    %s124 = sphi 0, %s124
    %s126 = sphi 0, %s124
    %s127 = sphi 0, %s126
    %s141 = sphi 0, %s127
    %s149 = sphi 0, %s151
    %s152 = sphi 0, %s149
    %s153 = sphi 0, %s152
    %s169 = sphi 0, %s153
    %s177 = sphi 0, %s179
    %s180 = sphi 0, %s177
    %s181 = sphi 0, %s180
    %s197 = sphi 0, %s181
  $region4: #{residual_forward.4} parent=0 // loop_header_branch
    %16 = sbr.rel (%p14) target = $region8
  $region5: #{residual_forward.4} parent=0 // loop_body
    %s18 = ssub.s32 %s13, 1
    %s19 = ssub.s32 %s13, 2
    %s26 = sadd.s32 1, %s21
    %p27 = scmp.ge.s32.totalorder %s26, 2
    %s28 = scalar_select %p27, 0, %s26
    %s29 = sadd.s32 1, %s20
    %s30 = scalar_select %p27, %s29, %s20
    %p31 = scmp.ge.s32.totalorder %s30, 2
    %s32 = scalar_select %p31, 0, %s30
    %s33 = ssub.s32 %s20, %s32
    %s34 = ssub.s32 %s21, %s28
    %s35 = sor.u32 %s33, %s34
    %p36 = scmp.eq.s32.totalorder %s35, 0
    %s38 = sadd.s32 %s37, 1
    %s39 = scalar_select %p36, %s37, %s38
    %p42 = pneg %p36
    %p43 = scmp.eq.s32.totalorder %s13, 3
    %p44 = por %p42, %p43
    %p45 = scmp.ne.s32.totalorder %s37, %s40
    %p46 = scmp.eq.s32.totalorder %s13, 0
    %p47 = por %p45, %p46
    %p48 = scmp.ne.s32.totalorder %s37, %s40
    %p49 = scmp.eq.s32.totalorder %s18, 3
    %p50 = por %p48, %p49
    %p51 = scmp.ne.s32.totalorder %s40, %s41
    %p52 = scmp.eq.s32.totalorder %s18, 0
    %p53 = por %p51, %p52
    %p54 = scmp.ne.s32.totalorder %s40, %s41
    %p55 = scmp.eq.s32.totalorder %s19, 3
    %p56 = por %p54, %p55
    %p58 = scmp.ne.s32.totalorder %s41, %s57
    %p59 = scmp.eq.s32.totalorder %s19, 0
    %p60 = por %p58, %p59
    %s62 = sadd.s32 %s61, 1
    %p65 = scmp.eq.s32.totalorder %s13, 3
    %p66 = scmp.ne.s32.totalorder %s61, %s63
    %p67 = scmp.eq.s32.totalorder %s13, 0
    %p68 = por %p66, %p67
    %p69 = scmp.ne.s32.totalorder %s61, %s63
    %p70 = scmp.eq.s32.totalorder %s18, 3
    %p71 = por %p69, %p70
    %p72 = scmp.ne.s32.totalorder %s63, %s64
    %p73 = scmp.eq.s32.totalorder %s18, 0
    %p74 = por %p72, %p73
    %p75 = scmp.ne.s32.totalorder %s63, %s64
    %p76 = scmp.eq.s32.totalorder %s19, 3
    %p77 = por %p75, %p76
    %p79 = scmp.ne.s32.totalorder %s64, %s78
    %p80 = scmp.eq.s32.totalorder %s19, 0
    %p81 = por %p79, %p80
    %s83 = sadd.s32 %s82, 1
    %p86 = scmp.eq.s32.totalorder %s13, 3
    %p87 = scmp.ne.s32.totalorder %s82, %s84
    %p88 = scmp.eq.s32.totalorder %s13, 0
    %p89 = por %p87, %p88
    %p90 = scmp.ne.s32.totalorder %s82, %s84
    %p91 = scmp.eq.s32.totalorder %s18, 3
    %p92 = por %p90, %p91
    %p93 = scmp.ne.s32.totalorder %s84, %s85
    %p94 = scmp.eq.s32.totalorder %s18, 0
    %p95 = por %p93, %p94
    %p96 = scmp.ne.s32.totalorder %s84, %s85
    %p97 = scmp.eq.s32.totalorder %s19, 3
    %p98 = por %p96, %p97
    %p100 = scmp.ne.s32.totalorder %s85, %s99
    %p101 = scmp.eq.s32.totalorder %s19, 0
    %p102 = por %p100, %p101
    %s104 = sadd.s32 %s103, 1
    %p107 = scmp.eq.s32.totalorder %s13, 3
    %p108 = scmp.ne.s32.totalorder %s103, %s105
    %p109 = scmp.eq.s32.totalorder %s13, 0
    %p110 = por %p108, %p109
    %p111 = scmp.ne.s32.totalorder %s103, %s105
    %p112 = scmp.eq.s32.totalorder %s18, 3
    %p113 = por %p111, %p112
    %p114 = scmp.ne.s32.totalorder %s105, %s106
    %p115 = scmp.eq.s32.totalorder %s18, 0
    %p116 = por %p114, %p115
    %p117 = scmp.ne.s32.totalorder %s105, %s106
    %p118 = scmp.eq.s32.totalorder %s19, 3
    %p119 = por %p117, %p118
    %p121 = scmp.ne.s32.totalorder %s106, %s120
    %p122 = scmp.eq.s32.totalorder %s19, 0
    %p123 = por %p121, %p122
    %s125 = sadd.s32 %s124, 1
    %p128 = scmp.eq.s32.totalorder %s13, 3
    %p129 = scmp.ne.s32.totalorder %s124, %s126
    %p130 = scmp.eq.s32.totalorder %s13, 0
    %p131 = por %p129, %p130
    %p132 = scmp.ne.s32.totalorder %s124, %s126
    %p133 = scmp.eq.s32.totalorder %s18, 3
    %p134 = por %p132, %p133
    %p135 = scmp.ne.s32.totalorder %s126, %s127
    %p136 = scmp.eq.s32.totalorder %s18, 0
    %p137 = por %p135, %p136
    %p138 = scmp.ne.s32.totalorder %s126, %s127
    %p139 = scmp.eq.s32.totalorder %s19, 3
    %p140 = por %p138, %p139
    %p142 = scmp.ne.s32.totalorder %s127, %s141
    %p143 = scmp.eq.s32.totalorder %s19, 0
    %p144 = por %p142, %p143
    %s145 = ssub.s32 %s20, %s32
    %s146 = ssub.s32 %s21, %s28
    %s147 = sor.u32 %s145, %s146
    %p148 = scmp.eq.s32.totalorder %s147, 0
    %s150 = sadd.s32 %s149, 1
    %s151 = scalar_select %p148, %s149, %s150
    %p154 = pneg %p148
    %p155 = scmp.eq.s32.totalorder %s13, 3
    %p156 = por %p154, %p155
    %p157 = scmp.ne.s32.totalorder %s149, %s152
    %p158 = scmp.eq.s32.totalorder %s13, 0
    %p159 = por %p157, %p158
    %p160 = scmp.ne.s32.totalorder %s149, %s152
    %p161 = scmp.eq.s32.totalorder %s18, 3
    %p162 = por %p160, %p161
    %p163 = scmp.ne.s32.totalorder %s152, %s153
    %p164 = scmp.eq.s32.totalorder %s18, 0
    %p165 = por %p163, %p164
    %p166 = scmp.ne.s32.totalorder %s152, %s153
    %p167 = scmp.eq.s32.totalorder %s19, 3
    %p168 = por %p166, %p167
    %p170 = scmp.ne.s32.totalorder %s153, %s169
    %p171 = scmp.eq.s32.totalorder %s19, 0
    %p172 = por %p170, %p171
    %s173 = ssub.s32 %s20, %s32
    %s174 = ssub.s32 %s21, %s28
    %s175 = sor.u32 %s173, %s174
    %p176 = scmp.eq.s32.totalorder %s175, 0
    %s178 = sadd.s32 %s177, 1
    %s179 = scalar_select %p176, %s177, %s178
    %p182 = pneg %p176
    %p183 = scmp.eq.s32.totalorder %s13, 3
    %p184 = por %p182, %p183
    %p185 = scmp.ne.s32.totalorder %s177, %s180
    %p186 = scmp.eq.s32.totalorder %s13, 0
    %p187 = por %p185, %p186
    %p188 = scmp.ne.s32.totalorder %s177, %s180
    %p189 = scmp.eq.s32.totalorder %s18, 3
    %p190 = por %p188, %p189
    %p191 = scmp.ne.s32.totalorder %s180, %s181
    %p192 = scmp.eq.s32.totalorder %s18, 0
    %p193 = por %p191, %p192
    %p194 = scmp.ne.s32.totalorder %s180, %s181
    %p195 = scmp.eq.s32.totalorder %s19, 3
    %p196 = por %p194, %p195
    %p198 = scmp.ne.s32.totalorder %s181, %s197
    %p199 = scmp.eq.s32.totalorder %s19, 0
    %p200 = por %p198, %p199
    %p201 = scmp.le.s32.totalorder 1, %s13
    %p202 = scmp.lt.s32.totalorder %s13, 5
    %p203 = pnand %p201, %p202
    %p204 = pneg %p203
    // Predicated region
    $region9: #{residual_forward.4} parent=5 // pred_check
      _
    $region10: #{residual_forward.4} parent=5 // pred_check_branch
      %206 = sbr.rel (%p203) target = $region12
    $region11: #{residual_forward.4} parent=5 // pred_region
      %s207 = ssub.s32 %s13, 1
      // Predicated region
      $region13: #{residual_forward.4} parent=11 // pred_check
        %p208 = pneg %p74
      $region14: #{residual_forward.4} parent=11 // pred_check_branch
        %210 = sbr.rel (%p208) target = $region16
      $region15: #{residual_forward.4} parent=11 // pred_region
        _
      $region16: #{residual_forward.4} parent=11 // pred_fallthru
        _
      // Predicated region
      $region17: #{residual_forward.4} parent=11 // pred_check
        %p211 = pneg %p95
      $region18: #{residual_forward.4} parent=11 // pred_check_branch
        %213 = sbr.rel (%p211) target = $region20
      $region19: #{residual_forward.4} parent=11 // pred_region
        _
      $region20: #{residual_forward.4} parent=11 // pred_fallthru
        _
      // Predicated region
      $region21: #{residual_forward.4} parent=11 // pred_check
        %p214 = pneg %p116
      $region22: #{residual_forward.4} parent=11 // pred_check_branch
        %216 = sbr.rel (%p214) target = $region24
      $region23: #{residual_forward.4} parent=11 // pred_region
        _
      $region24: #{residual_forward.4} parent=11 // pred_fallthru
        _
      // Predicated region
      $region25: #{residual_forward.4} parent=11 // pred_check
        %p217 = pneg %p137
      $region26: #{residual_forward.4} parent=11 // pred_check_branch
        %219 = sbr.rel (%p217) target = $region28
      $region27: #{residual_forward.4} parent=11 // pred_region
        _
      $region28: #{residual_forward.4} parent=11 // pred_fallthru
        _
    $region12: #{residual_forward.4} parent=5 // pred_fallthru
      _
    %p220 = scmp.lt.s32.totalorder %s13, 4
    // Predicated region
    $region29: #{residual_forward.4} parent=5 // pred_check
      %p221 = pneg %p220
    $region30: #{residual_forward.4} parent=5 // pred_check_branch
      %223 = sbr.rel (%p221) target = $region32
    $region31: #{residual_forward.4} parent=5 // pred_region
      // Predicated region
      $region33: #{residual_forward.4} parent=31 // pred_check
        %p224 = pneg %p47
      $region34: #{residual_forward.4} parent=31 // pred_check_branch
        %226 = sbr.rel (%p224) target = $region36
      $region35: #{residual_forward.4} parent=31 // pred_region
        %p227 = scmp.lt.s32.totalorder %s20, 1
        %s228 = scalar_select %p227, %s20, 1
        %p229 = scmp.lt.s32.totalorder %s21, 1
        %s230 = scalar_select %p229, %s21, 1
        %s231 = smul.addr %s230, 23
        %s232 = smul.addr %s228, 46
        %s233 = sadd.s32 %s231, %s232
        %s234 = smul.addr %s233, 4
        %s235 = scalar_lea.vmem %s0, %s234
      $region36: #{residual_forward.4} parent=31 // pred_fallthru
        _
    $region32: #{residual_forward.4} parent=5 // pred_fallthru
      _
    %p236 = scmp.le.s32.totalorder 1, %s13
    %p237 = scmp.lt.s32.totalorder %s13, 5
    %p238 = pnand %p236, %p237
    %p239 = pneg %p238
    // Predicated region
    $region37: #{residual_forward.4} parent=5 // pred_check
      _
    $region38: #{residual_forward.4} parent=5 // pred_check_branch
      %241 = sbr.rel (%p238) target = $region40
    $region39: #{residual_forward.4} parent=5 // pred_region
      %s242 = ssub.s32 %s13, 1
      %p243 = scmp.lt.s32.totalorder %s22, 1
      %s244 = scalar_select %p243, %s22, 1
      %p245 = scmp.lt.s32.totalorder %s23, 1
      %s246 = scalar_select %p245, %s23, 1
      %s247 = smul.addr %s246, 23
      %s248 = smul.addr %s244, 46
      %s249 = sadd.s32 %s247, %s248
      %s250 = smul.addr %s249, 4
      %s251 = scalar_lea.vmem %s0, %s250
      %p252 = pneg %p53
      %p253 = pneg %p50
      %p254 = pneg %p74
      %p255 = pneg %p71
      %p256 = pneg %p95
      %p257 = pneg %p92
      %p258 = pneg %p116
      %p259 = pneg %p113
      %p260 = pneg %p137
      %p261 = pneg %p134
      %p262 = pneg %p165
      %p263 = pneg %p162
      %p264 = scmp.lt.s32.totalorder %s22, 1
      %s265 = scalar_select %p264, %s22, 1
      %p266 = scmp.lt.s32.totalorder %s23, 1
      %s267 = scalar_select %p266, %s23, 1
      %s268 = smul.addr %s267, 18
      %s269 = smul.addr %s265, 36
      %s270 = sadd.s32 %s268, %s269
      %s271 = smul.addr %s270, 4
      %s272 = scalar_lea.vmem %s5, %s271
      %p273 = pneg %p193
      %p274 = pneg %p190
      %p275 = scmp.lt.s32.totalorder %s22, 1
      %s276 = scalar_select %p275, %s22, 1
      %p277 = scmp.lt.s32.totalorder %s23, 1
      %s278 = scalar_select %p277, %s23, 1
      %s279 = smul.addr %s276, 2
      %s280 = sadd.s32 %s278, %s279
      %s281 = smul.addr %s280, 2
      %s282 = scalar_lea.vmem %s6, %s281
      %p283 = scmp.lt.s32.totalorder %s22, 1
      %s284 = scalar_select %p283, %s22, 1
      %p285 = scmp.lt.s32.totalorder %s23, 1
      %s286 = scalar_select %p285, %s23, 1
      %s287 = smul.addr %s286, 23
      %s288 = smul.addr %s284, 46
      %s289 = sadd.s32 %s287, %s288
      %s290 = smul.addr %s289, 4
      %s291 = scalar_lea.vmem %s0, %s290
      %p292 = scmp.lt.s32.totalorder %s22, 1
      %s293 = scalar_select %p292, %s22, 1
      %p294 = scmp.lt.s32.totalorder %s23, 1
      %s295 = scalar_select %p294, %s23, 1
      %s296 = smul.addr %s295, 18
      %s297 = smul.addr %s293, 36
      %s298 = sadd.s32 %s296, %s297
      %s299 = smul.addr %s298, 4
      %s300 = scalar_lea.vmem %s5, %s299
      %p301 = scmp.lt.s32.totalorder %s22, 1
      %s302 = scalar_select %p301, %s22, 1
      %p303 = scmp.lt.s32.totalorder %s23, 1
      %s304 = scalar_select %p303, %s23, 1
      %s305 = smul.addr %s302, 2
      %s306 = sadd.s32 %s304, %s305
      %s307 = smul.addr %s306, 2
      %s308 = scalar_lea.vmem %s6, %s307
      %v310 = vld [vmem:[%s291] sm:$0xf]
      %v311 = vld [vmem:[%s291 + $0x4] sm:$0xf]
      %v312 = vld [vmem:[%s291 + $0x8] sm:$0xf]
      %v313 = vld [vmem:[%s291 + $0xc] sm:$0xf]
      %v314 = vld [vmem:[%s291 + $0x10] sm:$0xf]
      %v315 = vld [vmem:[%s291 + $0x14] sm:$0xf]
      %v316 = vld [vmem:[%s291 + $0x18] sm:$0xf]
      %v317 = vld [vmem:[%s291 + $0x1c] sm:$0xf]
      %v318 = vld [vmem:[%s291 + $0x20] sm:$0xf]
      %v319 = vld [vmem:[%s291 + $0x24] sm:$0xf]
      %v320 = vld [vmem:[%s291 + $0x28] sm:$0xf]
      %v321 = vld [vmem:[%s291 + $0x2c] sm:$0xf]
      %v322 = vld [vmem:[%s291 + $0x30] sm:$0xf]
      %v323 = vld [vmem:[%s291 + $0x34] sm:$0xf]
      %v324 = vld [vmem:[%s291 + $0x38] sm:$0xf]
      %v325 = vld [vmem:[%s291 + $0x3c] sm:$0xf]
      %v326 = vld [vmem:[%s291 + $0x40] sm:$0xf]
      %v327 = vld [vmem:[%s291 + $0x44] sm:$0xf]
      %v328 = vld [vmem:[%s291 + $0x48] sm:$0xf]
      %v329 = vld [vmem:[%s291 + $0x4c] sm:$0xf]
      %v330 = vld [vmem:[%s291 + $0x50] sm:$0xf]
      %v331 = vld [vmem:[%s291 + $0x54] sm:$0xf]
      %v332 = vld [vmem:[%s291 + $0x58] sm:$0xf]
      %v333 = vunpack.c.l.bf16 %v310
      %v334 = vunpack.c.l.bf16 %v311
      %v335 = vunpack.c.l.bf16 %v312
      %v336 = vunpack.c.l.bf16 %v313
      %v337 = vunpack.c.l.bf16 %v314
      %v338 = vunpack.c.l.bf16 %v315
      %v339 = vunpack.c.l.bf16 %v316
      %v340 = vunpack.c.l.bf16 %v317
      %v341 = vunpack.c.l.bf16 %v318
      %v342 = vunpack.c.l.bf16 %v319
      %v343 = vunpack.c.l.bf16 %v320
      %v344 = vunpack.c.l.bf16 %v321
      %v345 = vunpack.c.l.bf16 %v322
      %v346 = vunpack.c.l.bf16 %v323
      %v347 = vunpack.c.l.bf16 %v324
      %v348 = vunpack.c.l.bf16 %v325
      %v349 = vunpack.c.l.bf16 %v326
      %v350 = vunpack.c.l.bf16 %v327
      %v351 = vunpack.c.l.bf16 %v328
      %v352 = vunpack.c.l.bf16 %v329
      %v353 = vunpack.c.l.bf16 %v330
      %v354 = vunpack.c.l.bf16 %v331
      %v355 = vunpack.c.l.bf16 %v332
      %v356 = vpack.c.bf16 %v334, %v333
      %v357 = vpack.c.bf16 %v336, %v335
      %v358 = vpack.c.bf16 %v338, %v337
      %v359 = vpack.c.bf16 %v340, %v339
      %v360 = vpack.c.bf16 %v342, %v341
      %v361 = vpack.c.bf16 %v344, %v343
      %v362 = vpack.c.bf16 %v346, %v345
      %v363 = vpack.c.bf16 %v348, %v347
      %v364 = vpack.c.bf16 %v350, %v349
      %v365 = vld [vmem:[%s1] sm:$0x3]
      %v366 = vpack.c.bf16 %v351, %v351
      %s367 = scalar_lea.vmem %s1, 2
      %v368 = vld [vmem:[%s367] sm:$0x3]
      %vm369 = vsmask.f32 7424
      %v371 = vshrl.u32 %v356, 16
      %v373 = vshll.u32 %v356, 16
      %v375 = vrot.slane %v373, 1
      %v376 = vor.u32 %v371, %v375
      %v378 = vshll.u32 %v357, 16
      %v380 = vrot.slane %v378, 1
      %v381 = vsel %vm369, %v376, %v380
      %v382 = vshrl.u32 %v357, 16
      %v384 = vor.u32 %v382, %v380
      %v386 = vshll.u32 %v358, 16
      %v388 = vrot.slane %v386, 1
      %v389 = vsel %vm369, %v384, %v388
      %v390 = vshrl.u32 %v358, 16
      %v392 = vor.u32 %v390, %v388
      %v394 = vshll.u32 %v359, 16
      %v396 = vrot.slane %v394, 1
      %v397 = vsel %vm369, %v392, %v396
      %v398 = vshrl.u32 %v359, 16
      %v400 = vor.u32 %v398, %v396
      %v402 = vshll.u32 %v360, 16
      %v404 = vrot.slane %v402, 1
      %v405 = vsel %vm369, %v400, %v404
      %v406 = vshrl.u32 %v360, 16
      %v408 = vor.u32 %v406, %v404
      %v410 = vshll.u32 %v361, 16
      %v412 = vrot.slane %v410, 1
      %v413 = vsel %vm369, %v408, %v412
      %v414 = vshrl.u32 %v361, 16
      %v416 = vor.u32 %v414, %v412
      %v418 = vshll.u32 %v362, 16
      %v420 = vrot.slane %v418, 1
      %v421 = vsel %vm369, %v416, %v420
      %v422 = vshrl.u32 %v362, 16
      %v424 = vor.u32 %v422, %v420
      %v426 = vshll.u32 %v363, 16
      %v428 = vrot.slane %v426, 1
      %v429 = vsel %vm369, %v424, %v428
      %v430 = vshrl.u32 %v363, 16
      %v432 = vor.u32 %v430, %v428
      %v434 = vshll.u32 %v364, 16
      %v436 = vrot.slane %v434, 1
      %v437 = vsel %vm369, %v432, %v436
      %v438 = vshrl.u32 %v364, 16
      %v440 = vor.u32 %v438, %v436
      %v442 = vshll.u32 %v366, 16
      %v444 = vrot.slane %v442, 1
      %v445 = vsel %vm369, %v440, %v444
      %vm446 = vcmask 31744
      %v448 = vsel %vm446, %v381, 0
      %v451 = vsel %vm446, %v389, 0
      %v454 = vsel %vm446, %v397, 0
      %v457 = vsel %vm446, %v405, 0
      %v460 = vsel %vm446, %v413, 0
      %v463 = vsel %vm446, %v421, 0
      %v466 = vsel %vm446, %v429, 0
      %v469 = vsel %vm446, %v437, 0
      %v472 = vsel %vm446, %v445, 0
      %vm474 = vcmask 1041408
      %v476 = vsel %vm474, %v368, 0
      %478 = vmatprep.subr.bf16.mxu0 0
      %479 = vmatpush1.bf16.msra.mxu0 %v476
      %480 = vmatprep.subr.bf16.mxu0 0
      %481 = vmatpush1.bf16.msra.mxu0 0
      %482 = vmatprep.subr.bf16.mxu0 0
      %483 = vmatpush1.bf16.msra.mxu0 0
      %484 = vmatprep.subr.bf16.mxu0 0
      %485 = vmatpush1.bf16.msra.mxu0 0
      %486 = vmatprep.subr.bf16.mxu0 0
      %487 = vmatpush1.bf16.msra.mxu0 0
      %488 = vmatprep.subr.bf16.mxu0 0
      %489 = vmatpush1.bf16.msra.mxu0 0
      %490 = vmatprep.subr.bf16.mxu0 0
      %491 = vmatpush1.bf16.msra.mxu0 0
      %492 = vmatprep.subr.bf16.mxu0 0
      %493 = vmatpush1.bf16.msra.mxu0 0
      %494 = vmatprep.subr.bf16.mxu0 0
      %495 = vmatpush1.bf16.msra.mxu0 0
      %496 = vmatprep.subr.bf16.mxu0 0
      %497 = vmatpush1.bf16.msra.mxu0 0
      %498 = vmatprep.subr.bf16.mxu0 0
      %499 = vmatpush1.bf16.msra.mxu0 0
      %500 = vmatprep.subr.bf16.mxu0 0
      %501 = vmatpush1.bf16.msra.mxu0 0
      %502 = vmatprep.subr.bf16.mxu0 0
      %503 = vmatpush1.bf16.msra.mxu0 0
      %504 = vmatprep.subr.bf16.mxu0 0
      %505 = vmatpush1.bf16.msra.mxu0 0
      %506 = vmatprep.subr.bf16.mxu0 0
      %507 = vmatpush1.bf16.msra.mxu0 0
      %508 = vmatprep.subr.bf16.mxu0 0
      %509 = vmatpush1.bf16.msra.mxu0 0
      %510 = vmatprep.mubr.bf16.mxu0 0
      %511 = vmatmul.mubr.bf16.gmra.mrb[0].mxu0 %v448
      %v512 = vpop.f32.mrb[0].mxu0
      %v513 = vadd.f32 0.0, %v512
      %v514 = vpop.f32.mrb[0].mxu0
      %v515 = vpop.f32.mrb[0].mxu0
      %v516 = vadd.f32 0.0, %v515
      %v517 = vpop.f32.mrb[0].mxu0
      %518 = vmatprep.mubr.bf16.mxu0 0
      %519 = vmatmul.mubr.bf16.gmra.mrb[0].mxu0 %v451
      %v520 = vpop.f32.mrb[0].mxu0
      %v521 = vadd.f32 0.0, %v520
      %v522 = vpop.f32.mrb[0].mxu0
      %v523 = vpop.f32.mrb[0].mxu0
      %v524 = vadd.f32 0.0, %v523
      %v525 = vpop.f32.mrb[0].mxu0
      %526 = vmatprep.mubr.bf16.mxu0 0
      %527 = vmatmul.mubr.bf16.gmra.mrb[0].mxu0 %v454
      %v528 = vpop.f32.mrb[0].mxu0
      %v529 = vadd.f32 0.0, %v528
      %v530 = vpop.f32.mrb[0].mxu0
      %v531 = vpop.f32.mrb[0].mxu0
      %v532 = vadd.f32 0.0, %v531
      %v533 = vpop.f32.mrb[0].mxu0
      %534 = vmatprep.mubr.bf16.mxu0 0
      %535 = vmatmul.mubr.bf16.gmra.mrb[0].mxu0 %v457
      %v536 = vpop.f32.mrb[0].mxu0
      %v537 = vadd.f32 0.0, %v536
      %v538 = vpop.f32.mrb[0].mxu0
      %v539 = vpop.f32.mrb[0].mxu0
      %v540 = vadd.f32 0.0, %v539
      %v541 = vpop.f32.mrb[0].mxu0
      %542 = vmatprep.mubr.bf16.mxu0 0
      %543 = vmatmul.mubr.bf16.gmra.mrb[0].mxu0 %v460
      %v544 = vpop.f32.mrb[0].mxu0
      %v545 = vadd.f32 0.0, %v544
      %v546 = vpop.f32.mrb[0].mxu0
      %v547 = vpop.f32.mrb[0].mxu0
      %v548 = vadd.f32 0.0, %v547
      %v549 = vpop.f32.mrb[0].mxu0
      %550 = vmatprep.mubr.bf16.mxu0 0
      %551 = vmatmul.mubr.bf16.gmra.mrb[0].mxu0 %v463
      %v552 = vpop.f32.mrb[0].mxu0
      %v553 = vadd.f32 0.0, %v552
      %v554 = vpop.f32.mrb[0].mxu0
      %v555 = vpop.f32.mrb[0].mxu0
      %v556 = vadd.f32 0.0, %v555
      %v557 = vpop.f32.mrb[0].mxu0
      %558 = vmatprep.mubr.bf16.mxu0 0
      %559 = vmatmul.mubr.bf16.gmra.mrb[0].mxu0 %v466
      %v560 = vpop.f32.mrb[0].mxu0
      %v561 = vadd.f32 0.0, %v560
      %v562 = vpop.f32.mrb[0].mxu0
      %v563 = vpop.f32.mrb[0].mxu0
      %v564 = vadd.f32 0.0, %v563
      %v565 = vpop.f32.mrb[0].mxu0
      %566 = vmatprep.mubr.bf16.mxu0 0
      %567 = vmatmul.mubr.bf16.gmra.mrb[0].mxu0 %v469
      %v568 = vpop.f32.mrb[0].mxu0
      %v569 = vadd.f32 0.0, %v568
      %v570 = vpop.f32.mrb[0].mxu0
      %v571 = vpop.f32.mrb[0].mxu0
      %v572 = vadd.f32 0.0, %v571
      %v573 = vpop.f32.mrb[0].mxu0
      %574 = vmatprep.mubr.bf16.mxu0 0
      %575 = vmatmul.mubr.bf16.gmra.mrb[0].mxu0 %v472
      %v576 = vpop.f32.mrb[0].mxu0
      %v577 = vadd.f32 0.0, %v576
      %v578 = vpop.f32.mrb[0].mxu0
      %v579 = vpop.f32.mrb[0].mxu0
      %v580 = vadd.f32 0.0, %v579
      %v581 = vpop.f32.mrb[0].mxu0
      %582 = vdwg.mxu0
      %v583 = vsel %vm446, %v356, 0
      %v585 = vsel %vm446, %v357, 0
      %v587 = vsel %vm446, %v358, 0
      %v589 = vsel %vm446, %v359, 0
      %v591 = vsel %vm446, %v360, 0
      %v593 = vsel %vm446, %v361, 0
      %v595 = vsel %vm446, %v362, 0
      %v597 = vsel %vm446, %v363, 0
      %v599 = vsel %vm446, %v364, 0
      %v602 = vsel %vm474, %v365, 0
      %604 = vmatprep.subr.bf16.mxu0 0
      %605 = vmatpush1.bf16.msra.mxu0 %v602
      %606 = vmatprep.subr.bf16.mxu0 0
      %607 = vmatpush1.bf16.msra.mxu0 0
      %608 = vmatprep.subr.bf16.mxu0 0
      %609 = vmatpush1.bf16.msra.mxu0 0
      %610 = vmatprep.subr.bf16.mxu0 0
      %611 = vmatpush1.bf16.msra.mxu0 0
      %612 = vmatprep.subr.bf16.mxu0 0
      %613 = vmatpush1.bf16.msra.mxu0 0
      %614 = vmatprep.subr.bf16.mxu0 0
      %615 = vmatpush1.bf16.msra.mxu0 0
      %616 = vmatprep.subr.bf16.mxu0 0
      %617 = vmatpush1.bf16.msra.mxu0 0
      %618 = vmatprep.subr.bf16.mxu0 0
      %619 = vmatpush1.bf16.msra.mxu0 0
      %620 = vmatprep.subr.bf16.mxu0 0
      %621 = vmatpush1.bf16.msra.mxu0 0
      %622 = vmatprep.subr.bf16.mxu0 0
      %623 = vmatpush1.bf16.msra.mxu0 0
      %624 = vmatprep.subr.bf16.mxu0 0
      %625 = vmatpush1.bf16.msra.mxu0 0
      %626 = vmatprep.subr.bf16.mxu0 0
      %627 = vmatpush1.bf16.msra.mxu0 0
      %628 = vmatprep.subr.bf16.mxu0 0
      %629 = vmatpush1.bf16.msra.mxu0 0
      %630 = vmatprep.subr.bf16.mxu0 0
      %631 = vmatpush1.bf16.msra.mxu0 0
      %632 = vmatprep.subr.bf16.mxu0 0
      %633 = vmatpush1.bf16.msra.mxu0 0
      %634 = vmatprep.subr.bf16.mxu0 0
      %635 = vmatpush1.bf16.msra.mxu0 0
      %636 = vmatprep.mubr.bf16.mxu0 0
      %637 = vmatmul.mubr.bf16.gmra.mrb[0].mxu0 %v583
      %v638 = vpop.f32.mrb[0].mxu0
      %v639 = vadd.f32 %v513, %v638
      %v640 = vpop.f32.mrb[0].mxu0
      %v641 = vpop.f32.mrb[0].mxu0
      %v642 = vadd.f32 %v516, %v641
      %v643 = vpop.f32.mrb[0].mxu0
      %644 = vmatprep.mubr.bf16.mxu0 0
      %645 = vmatmul.mubr.bf16.gmra.mrb[0].mxu0 %v585
      %v646 = vpop.f32.mrb[0].mxu0
      %v647 = vadd.f32 %v521, %v646
      %v648 = vpop.f32.mrb[0].mxu0
      %v649 = vpop.f32.mrb[0].mxu0
      %v650 = vadd.f32 %v524, %v649
      %v651 = vpop.f32.mrb[0].mxu0
      %652 = vmatprep.mubr.bf16.mxu0 0
      %653 = vmatmul.mubr.bf16.gmra.mrb[0].mxu0 %v587
      %v654 = vpop.f32.mrb[0].mxu0
      %v655 = vadd.f32 %v529, %v654
      %v656 = vpop.f32.mrb[0].mxu0
      %v657 = vpop.f32.mrb[0].mxu0
      %v658 = vadd.f32 %v532, %v657
      %v659 = vpop.f32.mrb[0].mxu0
      %660 = vmatprep.mubr.bf16.mxu0 0
      %661 = vmatmul.mubr.bf16.gmra.mrb[0].mxu0 %v589
      %v662 = vpop.f32.mrb[0].mxu0
      %v663 = vadd.f32 %v537, %v662
      %v664 = vpop.f32.mrb[0].mxu0
      %v665 = vpop.f32.mrb[0].mxu0
      %v666 = vadd.f32 %v540, %v665
      %v667 = vpop.f32.mrb[0].mxu0
      %668 = vmatprep.mubr.bf16.mxu0 0
      %669 = vmatmul.mubr.bf16.gmra.mrb[0].mxu0 %v591
      %v670 = vpop.f32.mrb[0].mxu0
      %v671 = vadd.f32 %v545, %v670
      %v672 = vpop.f32.mrb[0].mxu0
      %v673 = vpop.f32.mrb[0].mxu0
      %v674 = vadd.f32 %v548, %v673
      %v675 = vpop.f32.mrb[0].mxu0
      %676 = vmatprep.mubr.bf16.mxu0 0
      %677 = vmatmul.mubr.bf16.gmra.mrb[0].mxu0 %v593
      %v678 = vpop.f32.mrb[0].mxu0
      %v679 = vadd.f32 %v553, %v678
      %v680 = vpop.f32.mrb[0].mxu0
      %v681 = vpop.f32.mrb[0].mxu0
      %v682 = vadd.f32 %v556, %v681
      %v683 = vpop.f32.mrb[0].mxu0
      %684 = vmatprep.mubr.bf16.mxu0 0
      %685 = vmatmul.mubr.bf16.gmra.mrb[0].mxu0 %v595
      %v686 = vpop.f32.mrb[0].mxu0
      %v687 = vadd.f32 %v561, %v686
      %v688 = vpop.f32.mrb[0].mxu0
      %v689 = vpop.f32.mrb[0].mxu0
      %v690 = vadd.f32 %v564, %v689
      %v691 = vpop.f32.mrb[0].mxu0
      %692 = vmatprep.mubr.bf16.mxu0 0
      %693 = vmatmul.mubr.bf16.gmra.mrb[0].mxu0 %v597
      %v694 = vpop.f32.mrb[0].mxu0
      %v695 = vadd.f32 %v569, %v694
      %v696 = vpop.f32.mrb[0].mxu0
      %v697 = vpop.f32.mrb[0].mxu0
      %v698 = vadd.f32 %v572, %v697
      %v699 = vpop.f32.mrb[0].mxu0
      %700 = vmatprep.mubr.bf16.mxu0 0
      %701 = vmatmul.mubr.bf16.gmra.mrb[0].mxu0 %v599
      %v702 = vpop.f32.mrb[0].mxu0
      %v703 = vadd.f32 %v577, %v702
      %v704 = vpop.f32.mrb[0].mxu0
      %v705 = vpop.f32.mrb[0].mxu0
      %v706 = vadd.f32 %v580, %v705
      %v707 = vpop.f32.mrb[0].mxu0
      %708 = vdwg.mxu0
      %s709 = scalar_lea.vmem %s1, 4
      %v710 = vld [vmem:[%s709] sm:$0x3]
      %vm721 = vcmask 1046528
      %v722 = vrot.slane %v356, 1
      %v723 = vrot.slane %v357, 1
      %v724 = vsel %vm721, %v722, %v723
      %v725 = vrot.slane %v358, 1
      %v726 = vsel %vm721, %v723, %v725
      %v727 = vrot.slane %v359, 1
      %v728 = vsel %vm721, %v725, %v727
      %v729 = vrot.slane %v360, 1
      %v730 = vsel %vm721, %v727, %v729
      %v731 = vrot.slane %v361, 1
      %v732 = vsel %vm721, %v729, %v731
      %v733 = vrot.slane %v362, 1
      %v734 = vsel %vm721, %v731, %v733
      %v735 = vrot.slane %v363, 1
      %v736 = vsel %vm721, %v733, %v735
      %v737 = vrot.slane %v364, 1
      %v738 = vsel %vm721, %v735, %v737
      %v739 = vrot.slane %v366, 1
      %v740 = vsel %vm721, %v737, %v739
      %v742 = vsel %vm446, %v724, 0
      %v745 = vsel %vm446, %v726, 0
      %v748 = vsel %vm446, %v728, 0
      %v751 = vsel %vm446, %v730, 0
      %v754 = vsel %vm446, %v732, 0
      %v757 = vsel %vm446, %v734, 0
      %v760 = vsel %vm446, %v736, 0
      %v763 = vsel %vm446, %v738, 0
      %v766 = vsel %vm446, %v740, 0
      %v769 = vsel %vm474, %v710, 0
      %771 = vmatprep.subr.bf16.mxu0 0
      %772 = vmatpush1.bf16.msra.mxu0 %v769
      %773 = vmatprep.subr.bf16.mxu0 0
      %774 = vmatpush1.bf16.msra.mxu0 0
      %775 = vmatprep.subr.bf16.mxu0 0
      %776 = vmatpush1.bf16.msra.mxu0 0
      %777 = vmatprep.subr.bf16.mxu0 0
      %778 = vmatpush1.bf16.msra.mxu0 0
      %779 = vmatprep.subr.bf16.mxu0 0
      %780 = vmatpush1.bf16.msra.mxu0 0
      %781 = vmatprep.subr.bf16.mxu0 0
      %782 = vmatpush1.bf16.msra.mxu0 0
      %783 = vmatprep.subr.bf16.mxu0 0
      %784 = vmatpush1.bf16.msra.mxu0 0
      %785 = vmatprep.subr.bf16.mxu0 0
      %786 = vmatpush1.bf16.msra.mxu0 0
      %787 = vmatprep.subr.bf16.mxu0 0
      %788 = vmatpush1.bf16.msra.mxu0 0
      %789 = vmatprep.subr.bf16.mxu0 0
      %790 = vmatpush1.bf16.msra.mxu0 0
      %791 = vmatprep.subr.bf16.mxu0 0
      %792 = vmatpush1.bf16.msra.mxu0 0
      %793 = vmatprep.subr.bf16.mxu0 0
      %794 = vmatpush1.bf16.msra.mxu0 0
      %795 = vmatprep.subr.bf16.mxu0 0
      %796 = vmatpush1.bf16.msra.mxu0 0
      %797 = vmatprep.subr.bf16.mxu0 0
      %798 = vmatpush1.bf16.msra.mxu0 0
      %799 = vmatprep.subr.bf16.mxu0 0
      %800 = vmatpush1.bf16.msra.mxu0 0
      %801 = vmatprep.subr.bf16.mxu0 0
      %802 = vmatpush1.bf16.msra.mxu0 0
      %803 = vmatprep.mubr.bf16.mxu0 0
      %804 = vmatmul.mubr.bf16.gmra.mrb[0].mxu0 %v742
      %v805 = vpop.f32.mrb[0].mxu0
      %v806 = vadd.f32 0.0, %v805
      %v807 = vpop.f32.mrb[0].mxu0
      %v808 = vpop.f32.mrb[0].mxu0
      %v809 = vadd.f32 0.0, %v808
      %v810 = vpop.f32.mrb[0].mxu0
      %811 = vmatprep.mubr.bf16.mxu0 0
      %812 = vmatmul.mubr.bf16.gmra.mrb[0].mxu0 %v745
      %v813 = vpop.f32.mrb[0].mxu0
      %v814 = vadd.f32 0.0, %v813
      %v815 = vpop.f32.mrb[0].mxu0
      %v816 = vpop.f32.mrb[0].mxu0
      %v817 = vadd.f32 0.0, %v816
      %v818 = vpop.f32.mrb[0].mxu0
      %819 = vmatprep.mubr.bf16.mxu0 0
      %820 = vmatmul.mubr.bf16.gmra.mrb[0].mxu0 %v748
      %v821 = vpop.f32.mrb[0].mxu0
      %v822 = vadd.f32 0.0, %v821
      %v823 = vpop.f32.mrb[0].mxu0
      %v824 = vpop.f32.mrb[0].mxu0
      %v825 = vadd.f32 0.0, %v824
      %v826 = vpop.f32.mrb[0].mxu0
      %827 = vmatprep.mubr.bf16.mxu0 0
      %828 = vmatmul.mubr.bf16.gmra.mrb[0].mxu0 %v751
      %v829 = vpop.f32.mrb[0].mxu0
      %v830 = vadd.f32 0.0, %v829
      %v831 = vpop.f32.mrb[0].mxu0
      %v832 = vpop.f32.mrb[0].mxu0
      %v833 = vadd.f32 0.0, %v832
      %v834 = vpop.f32.mrb[0].mxu0
      %835 = vmatprep.mubr.bf16.mxu0 0
      %836 = vmatmul.mubr.bf16.gmra.mrb[0].mxu0 %v754
      %v837 = vpop.f32.mrb[0].mxu0
      %v838 = vadd.f32 0.0, %v837
      %v839 = vpop.f32.mrb[0].mxu0
      %v840 = vpop.f32.mrb[0].mxu0
      %v841 = vadd.f32 0.0, %v840
      %v842 = vpop.f32.mrb[0].mxu0
      %843 = vmatprep.mubr.bf16.mxu0 0
      %844 = vmatmul.mubr.bf16.gmra.mrb[0].mxu0 %v757
      %v845 = vpop.f32.mrb[0].mxu0
      %v846 = vadd.f32 0.0, %v845
      %v847 = vpop.f32.mrb[0].mxu0
      %v848 = vpop.f32.mrb[0].mxu0
      %v849 = vadd.f32 0.0, %v848
      %v850 = vpop.f32.mrb[0].mxu0
      %851 = vmatprep.mubr.bf16.mxu0 0
      %852 = vmatmul.mubr.bf16.gmra.mrb[0].mxu0 %v760
      %v853 = vpop.f32.mrb[0].mxu0
      %v854 = vadd.f32 0.0, %v853
      %v855 = vpop.f32.mrb[0].mxu0
      %v856 = vpop.f32.mrb[0].mxu0
      %v857 = vadd.f32 0.0, %v856
      %v858 = vpop.f32.mrb[0].mxu0
      %859 = vmatprep.mubr.bf16.mxu0 0
      %860 = vmatmul.mubr.bf16.gmra.mrb[0].mxu0 %v763
      %v861 = vpop.f32.mrb[0].mxu0
      %v862 = vadd.f32 0.0, %v861
      %v863 = vpop.f32.mrb[0].mxu0
      %v864 = vpop.f32.mrb[0].mxu0
      %v865 = vadd.f32 0.0, %v864
      %v866 = vpop.f32.mrb[0].mxu0
      %867 = vmatprep.mubr.bf16.mxu0 0
      %868 = vmatmul.mubr.bf16.gmra.mrb[0].mxu0 %v766
      %v869 = vpop.f32.mrb[0].mxu0
      %v870 = vadd.f32 0.0, %v869
      %v871 = vpop.f32.mrb[0].mxu0
      %v872 = vpop.f32.mrb[0].mxu0
      %v873 = vadd.f32 0.0, %v872
      %v874 = vpop.f32.mrb[0].mxu0
      %875 = vdwg.mxu0
      %v876 = vadd.f32 %v639, %v806
      %v877 = vadd.f32 %v642, %v809
      %v878 = vadd.f32 %v647, %v814
      %v879 = vadd.f32 %v650, %v817
      %v880 = vadd.f32 %v655, %v822
      %v881 = vadd.f32 %v658, %v825
      %v882 = vadd.f32 %v663, %v830
      %v883 = vadd.f32 %v666, %v833
      %v884 = vadd.f32 %v671, %v838
      %v885 = vadd.f32 %v674, %v841
      %v886 = vadd.f32 %v679, %v846
      %v887 = vadd.f32 %v682, %v849
      %v888 = vadd.f32 %v687, %v854
      %v889 = vadd.f32 %v690, %v857
      %v890 = vadd.f32 %v695, %v862
      %v891 = vadd.f32 %v698, %v865
      %v892 = vadd.f32 %v703, %v870
      %v893 = vadd.f32 %v706, %v873
      %v894 = vpack.c.bf16 %v352, %v351
      %v895 = vpack.c.bf16 %v353, %v353
      %s896 = scalar_lea.vmem %s1, 6
      %v897 = vld [vmem:[%s896] sm:$0x3]
      %v900 = vrot.slane %v894, 1
      %v901 = vsel %vm721, %v737, %v900
      %v902 = vrot.slane %v895, 1
      %v903 = vsel %vm721, %v900, %v902
      %v905 = vsel %vm446, %v901, 0
      %v908 = vsel %vm446, %v903, 0
      %v911 = vsel %vm474, %v897, 0
      %913 = vmatprep.subr.bf16.mxu0 0
      %914 = vmatpush1.bf16.msra.mxu0 %v911
      %915 = vmatprep.subr.bf16.mxu0 0
      %916 = vmatpush1.bf16.msra.mxu0 0
      %917 = vmatprep.subr.bf16.mxu0 0
      %918 = vmatpush1.bf16.msra.mxu0 0
      %919 = vmatprep.subr.bf16.mxu0 0
      %920 = vmatpush1.bf16.msra.mxu0 0
      %921 = vmatprep.subr.bf16.mxu0 0
      %922 = vmatpush1.bf16.msra.mxu0 0
      %923 = vmatprep.subr.bf16.mxu0 0
      %924 = vmatpush1.bf16.msra.mxu0 0
      %925 = vmatprep.subr.bf16.mxu0 0
      %926 = vmatpush1.bf16.msra.mxu0 0
      %927 = vmatprep.subr.bf16.mxu0 0
      %928 = vmatpush1.bf16.msra.mxu0 0
      %929 = vmatprep.subr.bf16.mxu0 0
      %930 = vmatpush1.bf16.msra.mxu0 0
      %931 = vmatprep.subr.bf16.mxu0 0
      %932 = vmatpush1.bf16.msra.mxu0 0
      %933 = vmatprep.subr.bf16.mxu0 0
      %934 = vmatpush1.bf16.msra.mxu0 0
      %935 = vmatprep.subr.bf16.mxu0 0
      %936 = vmatpush1.bf16.msra.mxu0 0
      %937 = vmatprep.subr.bf16.mxu0 0
      %938 = vmatpush1.bf16.msra.mxu0 0
      %939 = vmatprep.subr.bf16.mxu0 0
      %940 = vmatpush1.bf16.msra.mxu0 0
      %941 = vmatprep.subr.bf16.mxu0 0
      %942 = vmatpush1.bf16.msra.mxu0 0
      %943 = vmatprep.subr.bf16.mxu0 0
      %944 = vmatpush1.bf16.msra.mxu0 0
      %945 = vmatprep.mubr.bf16.mxu0 0
      %946 = vmatmul.mubr.bf16.gmra.mrb[0].mxu0 %v745
      %v947 = vpop.f32.mrb[0].mxu0
      %v948 = vadd.f32 0.0, %v947
      %v949 = vpop.f32.mrb[0].mxu0
      %v950 = vpop.f32.mrb[0].mxu0
      %v951 = vadd.f32 0.0, %v950
      %v952 = vpop.f32.mrb[0].mxu0
      %953 = vmatprep.mubr.bf16.mxu0 0
      %954 = vmatmul.mubr.bf16.gmra.mrb[0].mxu0 %v748
      %v955 = vpop.f32.mrb[0].mxu0
      %v956 = vadd.f32 0.0, %v955
      %v957 = vpop.f32.mrb[0].mxu0
      %v958 = vpop.f32.mrb[0].mxu0
      %v959 = vadd.f32 0.0, %v958
      %v960 = vpop.f32.mrb[0].mxu0
      %961 = vmatprep.mubr.bf16.mxu0 0
      %962 = vmatmul.mubr.bf16.gmra.mrb[0].mxu0 %v751
      %v963 = vpop.f32.mrb[0].mxu0
      %v964 = vadd.f32 0.0, %v963
      %v965 = vpop.f32.mrb[0].mxu0
      %v966 = vpop.f32.mrb[0].mxu0
      %v967 = vadd.f32 0.0, %v966
      %v968 = vpop.f32.mrb[0].mxu0
      %969 = vmatprep.mubr.bf16.mxu0 0
      %970 = vmatmul.mubr.bf16.gmra.mrb[0].mxu0 %v754
      %v971 = vpop.f32.mrb[0].mxu0
      %v972 = vadd.f32 0.0, %v971
      %v973 = vpop.f32.mrb[0].mxu0
      %v974 = vpop.f32.mrb[0].mxu0
      %v975 = vadd.f32 0.0, %v974
      %v976 = vpop.f32.mrb[0].mxu0
      %977 = vmatprep.mubr.bf16.mxu0 0
      %978 = vmatmul.mubr.bf16.gmra.mrb[0].mxu0 %v757
      %v979 = vpop.f32.mrb[0].mxu0
      %v980 = vadd.f32 0.0, %v979
      %v981 = vpop.f32.mrb[0].mxu0
      %v982 = vpop.f32.mrb[0].mxu0
      %v983 = vadd.f32 0.0, %v982
      %v984 = vpop.f32.mrb[0].mxu0
      %985 = vmatprep.mubr.bf16.mxu0 0
      %986 = vmatmul.mubr.bf16.gmra.mrb[0].mxu0 %v760
      %v987 = vpop.f32.mrb[0].mxu0
      %v988 = vadd.f32 0.0, %v987
      %v989 = vpop.f32.mrb[0].mxu0
      %v990 = vpop.f32.mrb[0].mxu0
      %v991 = vadd.f32 0.0, %v990
      %v992 = vpop.f32.mrb[0].mxu0
      %993 = vmatprep.mubr.bf16.mxu0 0
      %994 = vmatmul.mubr.bf16.gmra.mrb[0].mxu0 %v763
      %v995 = vpop.f32.mrb[0].mxu0
      %v996 = vadd.f32 0.0, %v995
      %v997 = vpop.f32.mrb[0].mxu0
      %v998 = vpop.f32.mrb[0].mxu0
      %v999 = vadd.f32 0.0, %v998
      %v1000 = vpop.f32.mrb[0].mxu0
      %1001 = vmatprep.mubr.bf16.mxu0 0
      %1002 = vmatmul.mubr.bf16.gmra.mrb[0].mxu0 %v905
      %v1003 = vpop.f32.mrb[0].mxu0
      %v1004 = vadd.f32 0.0, %v1003
      %v1005 = vpop.f32.mrb[0].mxu0
      %v1006 = vpop.f32.mrb[0].mxu0
      %v1007 = vadd.f32 0.0, %v1006
      %v1008 = vpop.f32.mrb[0].mxu0
      %1009 = vmatprep.mubr.bf16.mxu0 0
      %1010 = vmatmul.mubr.bf16.gmra.mrb[0].mxu0 %v908
      %v1011 = vpop.f32.mrb[0].mxu0
      %v1012 = vadd.f32 0.0, %v1011
      %v1013 = vpop.f32.mrb[0].mxu0
      %v1014 = vpop.f32.mrb[0].mxu0
      %v1015 = vadd.f32 0.0, %v1014
      %v1016 = vpop.f32.mrb[0].mxu0
      %1017 = vdwg.mxu0
      %v1018 = vadd.f32 %v876, %v948
      %v1019 = vadd.f32 %v877, %v951
      %v1020 = vadd.f32 %v878, %v956
      %v1021 = vadd.f32 %v879, %v959
      %v1022 = vadd.f32 %v880, %v964
      %v1023 = vadd.f32 %v881, %v967
      %v1024 = vadd.f32 %v882, %v972
      %v1025 = vadd.f32 %v883, %v975
      %v1026 = vadd.f32 %v884, %v980
      %v1027 = vadd.f32 %v885, %v983
      %v1028 = vadd.f32 %v886, %v988
      %v1029 = vadd.f32 %v887, %v991
      %v1030 = vadd.f32 %v888, %v996
      %v1031 = vadd.f32 %v889, %v999
      %v1032 = vadd.f32 %v890, %v1004
      %v1033 = vadd.f32 %v891, %v1007
      %v1034 = vadd.f32 %v892, %v1012
      %v1035 = vadd.f32 %v893, %v1015
      %s1036 = scalar_lea.vmem %s1, 8
      %v1037 = vld [vmem:[%s1036] sm:$0x3]
      %vm1038 = vsmask.f32 6400
      %v1039 = vrot.slane %v382, 1
      %v1040 = vrot.slane %v378, 2
      %v1041 = vor.u32 %v1039, %v1040
      %v1042 = vrot.slane %v390, 1
      %v1043 = vrot.slane %v386, 2
      %v1044 = vor.u32 %v1042, %v1043
      %v1045 = vsel %vm1038, %v1041, %v1044
      %v1046 = vrot.slane %v398, 1
      %v1047 = vrot.slane %v394, 2
      %v1048 = vor.u32 %v1046, %v1047
      %v1049 = vsel %vm1038, %v1044, %v1048
      %v1050 = vrot.slane %v406, 1
      %v1051 = vrot.slane %v402, 2
      %v1052 = vor.u32 %v1050, %v1051
      %v1053 = vsel %vm1038, %v1048, %v1052
      %v1054 = vrot.slane %v414, 1
      %v1055 = vrot.slane %v410, 2
      %v1056 = vor.u32 %v1054, %v1055
      %v1057 = vsel %vm1038, %v1052, %v1056
      %v1058 = vrot.slane %v422, 1
      %v1059 = vrot.slane %v418, 2
      %v1060 = vor.u32 %v1058, %v1059
      %v1061 = vsel %vm1038, %v1056, %v1060
      %v1062 = vrot.slane %v430, 1
      %v1063 = vrot.slane %v426, 2
      %v1064 = vor.u32 %v1062, %v1063
      %v1065 = vsel %vm1038, %v1060, %v1064
      %v1066 = vrot.slane %v438, 1
      %v1067 = vrot.slane %v434, 2
      %v1068 = vor.u32 %v1066, %v1067
      %v1069 = vsel %vm1038, %v1064, %v1068
      %v1071 = vshrl.u32 %v894, 16
      %v1073 = vrot.slane %v1071, 1
      %v1074 = vshll.u32 %v894, 16
      %v1076 = vrot.slane %v1074, 2
      %v1077 = vor.u32 %v1073, %v1076
      %v1078 = vsel %vm1038, %v1068, %v1077
      %v1080 = vshrl.u32 %v895, 16
      %v1082 = vrot.slane %v1080, 1
      %v1083 = vshll.u32 %v895, 16
      %v1085 = vrot.slane %v1083, 2
      %v1086 = vor.u32 %v1082, %v1085
      %v1087 = vsel %vm1038, %v1077, %v1086
      %v1089 = vsel %vm446, %v1045, 0
      %v1092 = vsel %vm446, %v1049, 0
      %v1095 = vsel %vm446, %v1053, 0
      %v1098 = vsel %vm446, %v1057, 0
      %v1101 = vsel %vm446, %v1061, 0
      %v1104 = vsel %vm446, %v1065, 0
      %v1107 = vsel %vm446, %v1069, 0
      %v1110 = vsel %vm446, %v1078, 0
      %v1113 = vsel %vm446, %v1087, 0
      %v1116 = vsel %vm474, %v1037, 0
      %1118 = vmatprep.subr.bf16.mxu0 0
      %1119 = vmatpush1.bf16.msra.mxu0 %v1116
      %1120 = vmatprep.subr.bf16.mxu0 0
      %1121 = vmatpush1.bf16.msra.mxu0 0
      %1122 = vmatprep.subr.bf16.mxu0 0
      %1123 = vmatpush1.bf16.msra.mxu0 0
      %1124 = vmatprep.subr.bf16.mxu0 0
      %1125 = vmatpush1.bf16.msra.mxu0 0
      %1126 = vmatprep.subr.bf16.mxu0 0
      %1127 = vmatpush1.bf16.msra.mxu0 0
      %1128 = vmatprep.subr.bf16.mxu0 0
      %1129 = vmatpush1.bf16.msra.mxu0 0
      %1130 = vmatprep.subr.bf16.mxu0 0
      %1131 = vmatpush1.bf16.msra.mxu0 0
      %1132 = vmatprep.subr.bf16.mxu0 0
      %1133 = vmatpush1.bf16.msra.mxu0 0
      %1134 = vmatprep.subr.bf16.mxu0 0
      %1135 = vmatpush1.bf16.msra.mxu0 0
      %1136 = vmatprep.subr.bf16.mxu0 0
      %1137 = vmatpush1.bf16.msra.mxu0 0
      %1138 = vmatprep.subr.bf16.mxu0 0
      %1139 = vmatpush1.bf16.msra.mxu0 0
      %1140 = vmatprep.subr.bf16.mxu0 0
      %1141 = vmatpush1.bf16.msra.mxu0 0
      %1142 = vmatprep.subr.bf16.mxu0 0
      %1143 = vmatpush1.bf16.msra.mxu0 0
      %1144 = vmatprep.subr.bf16.mxu0 0
      %1145 = vmatpush1.bf16.msra.mxu0 0
      %1146 = vmatprep.subr.bf16.mxu0 0
      %1147 = vmatpush1.bf16.msra.mxu0 0
      %1148 = vmatprep.subr.bf16.mxu0 0
      %1149 = vmatpush1.bf16.msra.mxu0 0
      %1150 = vmatprep.mubr.bf16.mxu0 0
      %1151 = vmatmul.mubr.bf16.gmra.mrb[0].mxu0 %v1089
      %v1152 = vpop.f32.mrb[0].mxu0
      %v1153 = vadd.f32 0.0, %v1152
      %v1154 = vpop.f32.mrb[0].mxu0
      %v1155 = vpop.f32.mrb[0].mxu0
      %v1156 = vadd.f32 0.0, %v1155
      %v1157 = vpop.f32.mrb[0].mxu0
      %1158 = vmatprep.mubr.bf16.mxu0 0
      %1159 = vmatmul.mubr.bf16.gmra.mrb[0].mxu0 %v1092
      %v1160 = vpop.f32.mrb[0].mxu0
      %v1161 = vadd.f32 0.0, %v1160
      %v1162 = vpop.f32.mrb[0].mxu0
      %v1163 = vpop.f32.mrb[0].mxu0
      %v1164 = vadd.f32 0.0, %v1163
      %v1165 = vpop.f32.mrb[0].mxu0
      %1166 = vmatprep.mubr.bf16.mxu0 0
      %1167 = vmatmul.mubr.bf16.gmra.mrb[0].mxu0 %v1095
      %v1168 = vpop.f32.mrb[0].mxu0
      %v1169 = vadd.f32 0.0, %v1168
      %v1170 = vpop.f32.mrb[0].mxu0
      %v1171 = vpop.f32.mrb[0].mxu0
      %v1172 = vadd.f32 0.0, %v1171
      %v1173 = vpop.f32.mrb[0].mxu0
      %1174 = vmatprep.mubr.bf16.mxu0 0
      %1175 = vmatmul.mubr.bf16.gmra.mrb[0].mxu0 %v1098
      %v1176 = vpop.f32.mrb[0].mxu0
      %v1177 = vadd.f32 0.0, %v1176
      %v1178 = vpop.f32.mrb[0].mxu0
      %v1179 = vpop.f32.mrb[0].mxu0
      %v1180 = vadd.f32 0.0, %v1179
      %v1181 = vpop.f32.mrb[0].mxu0
      %1182 = vmatprep.mubr.bf16.mxu0 0
      %1183 = vmatmul.mubr.bf16.gmra.mrb[0].mxu0 %v1101
      %v1184 = vpop.f32.mrb[0].mxu0
      %v1185 = vadd.f32 0.0, %v1184
      %v1186 = vpop.f32.mrb[0].mxu0
      %v1187 = vpop.f32.mrb[0].mxu0
      %v1188 = vadd.f32 0.0, %v1187
      %v1189 = vpop.f32.mrb[0].mxu0
      %1190 = vmatprep.mubr.bf16.mxu0 0
      %1191 = vmatmul.mubr.bf16.gmra.mrb[0].mxu0 %v1104
      %v1192 = vpop.f32.mrb[0].mxu0
      %v1193 = vadd.f32 0.0, %v1192
      %v1194 = vpop.f32.mrb[0].mxu0
      %v1195 = vpop.f32.mrb[0].mxu0
      %v1196 = vadd.f32 0.0, %v1195
      %v1197 = vpop.f32.mrb[0].mxu0
      %1198 = vmatprep.mubr.bf16.mxu0 0
      %1199 = vmatmul.mubr.bf16.gmra.mrb[0].mxu0 %v1107
      %v1200 = vpop.f32.mrb[0].mxu0
      %v1201 = vadd.f32 0.0, %v1200
      %v1202 = vpop.f32.mrb[0].mxu0
      %v1203 = vpop.f32.mrb[0].mxu0
      %v1204 = vadd.f32 0.0, %v1203
      %v1205 = vpop.f32.mrb[0].mxu0
      %1206 = vmatprep.mubr.bf16.mxu0 0
      %1207 = vmatmul.mubr.bf16.gmra.mrb[0].mxu0 %v1110
      %v1208 = vpop.f32.mrb[0].mxu0
      %v1209 = vadd.f32 0.0, %v1208
      %v1210 = vpop.f32.mrb[0].mxu0
      %v1211 = vpop.f32.mrb[0].mxu0
      %v1212 = vadd.f32 0.0, %v1211
      %v1213 = vpop.f32.mrb[0].mxu0
      %1214 = vmatprep.mubr.bf16.mxu0 0
      %1215 = vmatmul.mubr.bf16.gmra.mrb[0].mxu0 %v1113
      %v1216 = vpop.f32.mrb[0].mxu0
      %v1217 = vadd.f32 0.0, %v1216
      %v1218 = vpop.f32.mrb[0].mxu0
      %v1219 = vpop.f32.mrb[0].mxu0
      %v1220 = vadd.f32 0.0, %v1219
      %v1221 = vpop.f32.mrb[0].mxu0
      %1222 = vdwg.mxu0
      %v1223 = vadd.f32 %v1018, %v1153
      %v1224 = vadd.f32 %v1019, %v1156
      %v1225 = vadd.f32 %v1020, %v1161
      %v1226 = vadd.f32 %v1021, %v1164
      %v1227 = vadd.f32 %v1022, %v1169
      %v1228 = vadd.f32 %v1023, %v1172
      %v1229 = vadd.f32 %v1024, %v1177
      %v1230 = vadd.f32 %v1025, %v1180
      %v1231 = vadd.f32 %v1026, %v1185
      %v1232 = vadd.f32 %v1027, %v1188
      %v1233 = vadd.f32 %v1028, %v1193
      %v1234 = vadd.f32 %v1029, %v1196
      %v1235 = vadd.f32 %v1030, %v1201
      %v1236 = vadd.f32 %v1031, %v1204
      %v1237 = vadd.f32 %v1032, %v1209
      %v1238 = vadd.f32 %v1033, %v1212
      %v1239 = vadd.f32 %v1034, %v1217
      %v1240 = vadd.f32 %v1035, %v1220
      %s1241 = scalar_lea.vmem %s1, 10
      %v1242 = vld [vmem:[%s1241] sm:$0x3]
      %vm1243 = vcmask 1045504
      %v1244 = vrot.slane %v357, 2
      %v1245 = vrot.slane %v358, 2
      %v1246 = vsel %vm1243, %v1244, %v1245
      %v1247 = vrot.slane %v359, 2
      %v1248 = vsel %vm1243, %v1245, %v1247
      %v1249 = vrot.slane %v360, 2
      %v1250 = vsel %vm1243, %v1247, %v1249
      %v1251 = vrot.slane %v361, 2
      %v1252 = vsel %vm1243, %v1249, %v1251
      %v1253 = vrot.slane %v362, 2
      %v1254 = vsel %vm1243, %v1251, %v1253
      %v1255 = vrot.slane %v363, 2
      %v1256 = vsel %vm1243, %v1253, %v1255
      %v1257 = vrot.slane %v364, 2
      %v1258 = vsel %vm1243, %v1255, %v1257
      %v1259 = vrot.slane %v894, 2
      %v1260 = vsel %vm1243, %v1257, %v1259
      %v1261 = vrot.slane %v895, 2
      %v1262 = vsel %vm1243, %v1259, %v1261
      %v1264 = vsel %vm446, %v1246, 0
      %v1267 = vsel %vm446, %v1248, 0
      %v1270 = vsel %vm446, %v1250, 0
      %v1273 = vsel %vm446, %v1252, 0
      %v1276 = vsel %vm446, %v1254, 0
      %v1279 = vsel %vm446, %v1256, 0
      %v1282 = vsel %vm446, %v1258, 0
      %v1285 = vsel %vm446, %v1260, 0
      %v1288 = vsel %vm446, %v1262, 0
      %v1291 = vsel %vm474, %v1242, 0
      %1293 = vmatprep.subr.bf16.mxu0 0
      %1294 = vmatpush1.bf16.msra.mxu0 %v1291
      %1295 = vmatprep.subr.bf16.mxu0 0
      %1296 = vmatpush1.bf16.msra.mxu0 0
      %1297 = vmatprep.subr.bf16.mxu0 0
      %1298 = vmatpush1.bf16.msra.mxu0 0
      %1299 = vmatprep.subr.bf16.mxu0 0
      %1300 = vmatpush1.bf16.msra.mxu0 0
      %1301 = vmatprep.subr.bf16.mxu0 0
      %1302 = vmatpush1.bf16.msra.mxu0 0
      %1303 = vmatprep.subr.bf16.mxu0 0
      %1304 = vmatpush1.bf16.msra.mxu0 0
      %1305 = vmatprep.subr.bf16.mxu0 0
      %1306 = vmatpush1.bf16.msra.mxu0 0
      %1307 = vmatprep.subr.bf16.mxu0 0
      %1308 = vmatpush1.bf16.msra.mxu0 0
      %1309 = vmatprep.subr.bf16.mxu0 0
      %1310 = vmatpush1.bf16.msra.mxu0 0
      %1311 = vmatprep.subr.bf16.mxu0 0
      %1312 = vmatpush1.bf16.msra.mxu0 0
      %1313 = vmatprep.subr.bf16.mxu0 0
      %1314 = vmatpush1.bf16.msra.mxu0 0
      %1315 = vmatprep.subr.bf16.mxu0 0
      %1316 = vmatpush1.bf16.msra.mxu0 0
      %1317 = vmatprep.subr.bf16.mxu0 0
      %1318 = vmatpush1.bf16.msra.mxu0 0
      %1319 = vmatprep.subr.bf16.mxu0 0
      %1320 = vmatpush1.bf16.msra.mxu0 0
      %1321 = vmatprep.subr.bf16.mxu0 0
      %1322 = vmatpush1.bf16.msra.mxu0 0
      %1323 = vmatprep.subr.bf16.mxu0 0
      %1324 = vmatpush1.bf16.msra.mxu0 0
      %1325 = vmatprep.mubr.bf16.mxu0 0
      %1326 = vmatmul.mubr.bf16.gmra.mrb[0].mxu0 %v1264
      %v1327 = vpop.f32.mrb[0].mxu0
      %v1328 = vadd.f32 0.0, %v1327
      %v1329 = vpop.f32.mrb[0].mxu0
      %v1330 = vpop.f32.mrb[0].mxu0
      %v1331 = vadd.f32 0.0, %v1330
      %v1332 = vpop.f32.mrb[0].mxu0
      %1333 = vmatprep.mubr.bf16.mxu0 0
      %1334 = vmatmul.mubr.bf16.gmra.mrb[0].mxu0 %v1267
      %v1335 = vpop.f32.mrb[0].mxu0
      %v1336 = vadd.f32 0.0, %v1335
      %v1337 = vpop.f32.mrb[0].mxu0
      %v1338 = vpop.f32.mrb[0].mxu0
      %v1339 = vadd.f32 0.0, %v1338
      %v1340 = vpop.f32.mrb[0].mxu0
      %1341 = vmatprep.mubr.bf16.mxu0 0
      %1342 = vmatmul.mubr.bf16.gmra.mrb[0].mxu0 %v1270
      %v1343 = vpop.f32.mrb[0].mxu0
      %v1344 = vadd.f32 0.0, %v1343
      %v1345 = vpop.f32.mrb[0].mxu0
      %v1346 = vpop.f32.mrb[0].mxu0
      %v1347 = vadd.f32 0.0, %v1346
      %v1348 = vpop.f32.mrb[0].mxu0
      %1349 = vmatprep.mubr.bf16.mxu0 0
      %1350 = vmatmul.mubr.bf16.gmra.mrb[0].mxu0 %v1273
      %v1351 = vpop.f32.mrb[0].mxu0
      %v1352 = vadd.f32 0.0, %v1351
      %v1353 = vpop.f32.mrb[0].mxu0
      %v1354 = vpop.f32.mrb[0].mxu0
      %v1355 = vadd.f32 0.0, %v1354
      %v1356 = vpop.f32.mrb[0].mxu0
      %1357 = vmatprep.mubr.bf16.mxu0 0
      %1358 = vmatmul.mubr.bf16.gmra.mrb[0].mxu0 %v1276
      %v1359 = vpop.f32.mrb[0].mxu0
      %v1360 = vadd.f32 0.0, %v1359
      %v1361 = vpop.f32.mrb[0].mxu0
      %v1362 = vpop.f32.mrb[0].mxu0
      %v1363 = vadd.f32 0.0, %v1362
      %v1364 = vpop.f32.mrb[0].mxu0
      %1365 = vmatprep.mubr.bf16.mxu0 0
      %1366 = vmatmul.mubr.bf16.gmra.mrb[0].mxu0 %v1279
      %v1367 = vpop.f32.mrb[0].mxu0
      %v1368 = vadd.f32 0.0, %v1367
      %v1369 = vpop.f32.mrb[0].mxu0
      %v1370 = vpop.f32.mrb[0].mxu0
      %v1371 = vadd.f32 0.0, %v1370
      %v1372 = vpop.f32.mrb[0].mxu0
      %1373 = vmatprep.mubr.bf16.mxu0 0
      %1374 = vmatmul.mubr.bf16.gmra.mrb[0].mxu0 %v1282
      %v1375 = vpop.f32.mrb[0].mxu0
      %v1376 = vadd.f32 0.0, %v1375
      %v1377 = vpop.f32.mrb[0].mxu0
      %v1378 = vpop.f32.mrb[0].mxu0
      %v1379 = vadd.f32 0.0, %v1378
      %v1380 = vpop.f32.mrb[0].mxu0
      %1381 = vmatprep.mubr.bf16.mxu0 0
      %1382 = vmatmul.mubr.bf16.gmra.mrb[0].mxu0 %v1285
      %v1383 = vpop.f32.mrb[0].mxu0
      %v1384 = vadd.f32 0.0, %v1383
      %v1385 = vpop.f32.mrb[0].mxu0
      %v1386 = vpop.f32.mrb[0].mxu0
      %v1387 = vadd.f32 0.0, %v1386
      %v1388 = vpop.f32.mrb[0].mxu0
      %1389 = vmatprep.mubr.bf16.mxu0 0
      %1390 = vmatmul.mubr.bf16.gmra.mrb[0].mxu0 %v1288
      %v1391 = vpop.f32.mrb[0].mxu0
      %v1392 = vadd.f32 0.0, %v1391
      %v1393 = vpop.f32.mrb[0].mxu0
      %v1394 = vpop.f32.mrb[0].mxu0
      %v1395 = vadd.f32 0.0, %v1394
      %v1396 = vpop.f32.mrb[0].mxu0
      %1397 = vdwg.mxu0
      %v1398 = vadd.f32 %v1223, %v1328
      %v1399 = vadd.f32 %v1224, %v1331
      %v1400 = vadd.f32 %v1225, %v1336
      %v1401 = vadd.f32 %v1226, %v1339
      %v1402 = vadd.f32 %v1227, %v1344
      %v1403 = vadd.f32 %v1228, %v1347
      %v1404 = vadd.f32 %v1229, %v1352
      %v1405 = vadd.f32 %v1230, %v1355
      %v1406 = vadd.f32 %v1231, %v1360
      %v1407 = vadd.f32 %v1232, %v1363
      %v1408 = vadd.f32 %v1233, %v1368
      %v1409 = vadd.f32 %v1234, %v1371
      %v1410 = vadd.f32 %v1235, %v1376
      %v1411 = vadd.f32 %v1236, %v1379
      %v1412 = vadd.f32 %v1237, %v1384
      %v1413 = vadd.f32 %v1238, %v1387
      %v1414 = vadd.f32 %v1239, %v1392
      %v1415 = vadd.f32 %v1240, %v1395
      %v1416 = vpack.c.bf16 %v354, %v353
      %v1417 = vpack.c.bf16 %v355, %v355
      %s1418 = scalar_lea.vmem %s1, 12
      %v1419 = vld [vmem:[%s1418] sm:$0x3]
      %v1422 = vrot.slane %v1416, 2
      %v1423 = vsel %vm1243, %v1259, %v1422
      %v1424 = vrot.slane %v1417, 2
      %v1425 = vsel %vm1243, %v1422, %v1424
      %v1427 = vsel %vm446, %v1423, 0
      %v1430 = vsel %vm446, %v1425, 0
      %v1433 = vsel %vm474, %v1419, 0
      %1435 = vmatprep.subr.bf16.mxu0 0
      %1436 = vmatpush1.bf16.msra.mxu0 %v1433
      %1437 = vmatprep.subr.bf16.mxu0 0
      %1438 = vmatpush1.bf16.msra.mxu0 0
      %1439 = vmatprep.subr.bf16.mxu0 0
      %1440 = vmatpush1.bf16.msra.mxu0 0
      %1441 = vmatprep.subr.bf16.mxu0 0
      %1442 = vmatpush1.bf16.msra.mxu0 0
      %1443 = vmatprep.subr.bf16.mxu0 0
      %1444 = vmatpush1.bf16.msra.mxu0 0
      %1445 = vmatprep.subr.bf16.mxu0 0
      %1446 = vmatpush1.bf16.msra.mxu0 0
      %1447 = vmatprep.subr.bf16.mxu0 0
      %1448 = vmatpush1.bf16.msra.mxu0 0
      %1449 = vmatprep.subr.bf16.mxu0 0
      %1450 = vmatpush1.bf16.msra.mxu0 0
      %1451 = vmatprep.subr.bf16.mxu0 0
      %1452 = vmatpush1.bf16.msra.mxu0 0
      %1453 = vmatprep.subr.bf16.mxu0 0
      %1454 = vmatpush1.bf16.msra.mxu0 0
      %1455 = vmatprep.subr.bf16.mxu0 0
      %1456 = vmatpush1.bf16.msra.mxu0 0
      %1457 = vmatprep.subr.bf16.mxu0 0
      %1458 = vmatpush1.bf16.msra.mxu0 0
      %1459 = vmatprep.subr.bf16.mxu0 0
      %1460 = vmatpush1.bf16.msra.mxu0 0
      %1461 = vmatprep.subr.bf16.mxu0 0
      %1462 = vmatpush1.bf16.msra.mxu0 0
      %1463 = vmatprep.subr.bf16.mxu0 0
      %1464 = vmatpush1.bf16.msra.mxu0 0
      %1465 = vmatprep.subr.bf16.mxu0 0
      %1466 = vmatpush1.bf16.msra.mxu0 0
      %1467 = vmatprep.mubr.bf16.mxu0 0
      %1468 = vmatmul.mubr.bf16.gmra.mrb[0].mxu0 %v1267
      %v1469 = vpop.f32.mrb[0].mxu0
      %v1470 = vadd.f32 0.0, %v1469
      %v1471 = vpop.f32.mrb[0].mxu0
      %v1472 = vpop.f32.mrb[0].mxu0
      %v1473 = vadd.f32 0.0, %v1472
      %v1474 = vpop.f32.mrb[0].mxu0
      %1475 = vmatprep.mubr.bf16.mxu0 0
      %1476 = vmatmul.mubr.bf16.gmra.mrb[0].mxu0 %v1270
      %v1477 = vpop.f32.mrb[0].mxu0
      %v1478 = vadd.f32 0.0, %v1477
      %v1479 = vpop.f32.mrb[0].mxu0
      %v1480 = vpop.f32.mrb[0].mxu0
      %v1481 = vadd.f32 0.0, %v1480
      %v1482 = vpop.f32.mrb[0].mxu0
      %1483 = vmatprep.mubr.bf16.mxu0 0
      %1484 = vmatmul.mubr.bf16.gmra.mrb[0].mxu0 %v1273
      %v1485 = vpop.f32.mrb[0].mxu0
      %v1486 = vadd.f32 0.0, %v1485
      %v1487 = vpop.f32.mrb[0].mxu0
      %v1488 = vpop.f32.mrb[0].mxu0
      %v1489 = vadd.f32 0.0, %v1488
      %v1490 = vpop.f32.mrb[0].mxu0
      %1491 = vmatprep.mubr.bf16.mxu0 0
      %1492 = vmatmul.mubr.bf16.gmra.mrb[0].mxu0 %v1276
      %v1493 = vpop.f32.mrb[0].mxu0
      %v1494 = vadd.f32 0.0, %v1493
      %v1495 = vpop.f32.mrb[0].mxu0
      %v1496 = vpop.f32.mrb[0].mxu0
      %v1497 = vadd.f32 0.0, %v1496
      %v1498 = vpop.f32.mrb[0].mxu0
      %1499 = vmatprep.mubr.bf16.mxu0 0
      %1500 = vmatmul.mubr.bf16.gmra.mrb[0].mxu0 %v1279
      %v1501 = vpop.f32.mrb[0].mxu0
      %v1502 = vadd.f32 0.0, %v1501
      %v1503 = vpop.f32.mrb[0].mxu0
      %v1504 = vpop.f32.mrb[0].mxu0
      %v1505 = vadd.f32 0.0, %v1504
      %v1506 = vpop.f32.mrb[0].mxu0
      %1507 = vmatprep.mubr.bf16.mxu0 0
      %1508 = vmatmul.mubr.bf16.gmra.mrb[0].mxu0 %v1282
      %v1509 = vpop.f32.mrb[0].mxu0
      %v1510 = vadd.f32 0.0, %v1509
      %v1511 = vpop.f32.mrb[0].mxu0
      %v1512 = vpop.f32.mrb[0].mxu0
      %v1513 = vadd.f32 0.0, %v1512
      %v1514 = vpop.f32.mrb[0].mxu0
      %1515 = vmatprep.mubr.bf16.mxu0 0
      %1516 = vmatmul.mubr.bf16.gmra.mrb[0].mxu0 %v1285
      %v1517 = vpop.f32.mrb[0].mxu0
      %v1518 = vadd.f32 0.0, %v1517
      %v1519 = vpop.f32.mrb[0].mxu0
      %v1520 = vpop.f32.mrb[0].mxu0
      %v1521 = vadd.f32 0.0, %v1520
      %v1522 = vpop.f32.mrb[0].mxu0
      %1523 = vmatprep.mubr.bf16.mxu0 0
      %1524 = vmatmul.mubr.bf16.gmra.mrb[0].mxu0 %v1427
      %v1525 = vpop.f32.mrb[0].mxu0
      %v1526 = vadd.f32 0.0, %v1525
      %v1527 = vpop.f32.mrb[0].mxu0
      %v1528 = vpop.f32.mrb[0].mxu0
      %v1529 = vadd.f32 0.0, %v1528
      %v1530 = vpop.f32.mrb[0].mxu0
      %1531 = vmatprep.mubr.bf16.mxu0 0
      %1532 = vmatmul.mubr.bf16.gmra.mrb[0].mxu0 %v1430
      %v1533 = vpop.f32.mrb[0].mxu0
      %v1534 = vadd.f32 0.0, %v1533
      %v1535 = vpop.f32.mrb[0].mxu0
      %v1536 = vpop.f32.mrb[0].mxu0
      %v1537 = vadd.f32 0.0, %v1536
      %v1538 = vpop.f32.mrb[0].mxu0
      %1539 = vdwg.mxu0
      %v1540 = vadd.f32 %v1398, %v1470
      %v1541 = vadd.f32 %v1399, %v1473
      %v1542 = vadd.f32 %v1400, %v1478
      %v1543 = vadd.f32 %v1401, %v1481
      %v1544 = vadd.f32 %v1402, %v1486
      %v1545 = vadd.f32 %v1403, %v1489
      %v1546 = vadd.f32 %v1404, %v1494
      %v1547 = vadd.f32 %v1405, %v1497
      %v1548 = vadd.f32 %v1406, %v1502
      %v1549 = vadd.f32 %v1407, %v1505
      %v1550 = vadd.f32 %v1408, %v1510
      %v1551 = vadd.f32 %v1409, %v1513
      %v1552 = vadd.f32 %v1410, %v1518
      %v1553 = vadd.f32 %v1411, %v1521
      %v1554 = vadd.f32 %v1412, %v1526
      %v1555 = vadd.f32 %v1413, %v1529
      %v1556 = vadd.f32 %v1414, %v1534
      %v1557 = vadd.f32 %v1415, %v1537
      %s1558 = scalar_lea.vmem %s1, 14
      %v1559 = vld [vmem:[%s1558] sm:$0x3]
      %vm1560 = vsmask.f32 5376
      %v1561 = vrot.slane %v390, 2
      %v1562 = vrot.slane %v386, 3
      %v1563 = vor.u32 %v1561, %v1562
      %v1564 = vrot.slane %v398, 2
      %v1565 = vrot.slane %v394, 3
      %v1566 = vor.u32 %v1564, %v1565
      %v1567 = vsel %vm1560, %v1563, %v1566
      %v1568 = vrot.slane %v406, 2
      %v1569 = vrot.slane %v402, 3
      %v1570 = vor.u32 %v1568, %v1569
      %v1571 = vsel %vm1560, %v1566, %v1570
      %v1572 = vrot.slane %v414, 2
      %v1573 = vrot.slane %v410, 3
      %v1574 = vor.u32 %v1572, %v1573
      %v1575 = vsel %vm1560, %v1570, %v1574
      %v1576 = vrot.slane %v422, 2
      %v1577 = vrot.slane %v418, 3
      %v1578 = vor.u32 %v1576, %v1577
      %v1579 = vsel %vm1560, %v1574, %v1578
      %v1580 = vrot.slane %v430, 2
      %v1581 = vrot.slane %v426, 3
      %v1582 = vor.u32 %v1580, %v1581
      %v1583 = vsel %vm1560, %v1578, %v1582
      %v1584 = vrot.slane %v438, 2
      %v1585 = vrot.slane %v434, 3
      %v1586 = vor.u32 %v1584, %v1585
      %v1587 = vsel %vm1560, %v1582, %v1586
      %v1588 = vrot.slane %v1071, 2
      %v1589 = vrot.slane %v1074, 3
      %v1590 = vor.u32 %v1588, %v1589
      %v1591 = vsel %vm1560, %v1586, %v1590
      %v1593 = vshrl.u32 %v1416, 16
      %v1595 = vrot.slane %v1593, 2
      %v1596 = vshll.u32 %v1416, 16
      %v1598 = vrot.slane %v1596, 3
      %v1599 = vor.u32 %v1595, %v1598
      %v1600 = vsel %vm1560, %v1590, %v1599
      %v1602 = vshrl.u32 %v1417, 16
      %v1604 = vrot.slane %v1602, 2
      %v1605 = vshll.u32 %v1417, 16
      %v1607 = vrot.slane %v1605, 3
      %v1608 = vor.u32 %v1604, %v1607
      %v1609 = vsel %vm1560, %v1599, %v1608
      %v1611 = vsel %vm446, %v1567, 0
      %v1614 = vsel %vm446, %v1571, 0
      %v1617 = vsel %vm446, %v1575, 0
      %v1620 = vsel %vm446, %v1579, 0
      %v1623 = vsel %vm446, %v1583, 0
      %v1626 = vsel %vm446, %v1587, 0
      %v1629 = vsel %vm446, %v1591, 0
      %v1632 = vsel %vm446, %v1600, 0
      %v1635 = vsel %vm446, %v1609, 0
      %v1638 = vsel %vm474, %v1559, 0
      %1640 = vmatprep.subr.bf16.mxu0 0
      %1641 = vmatpush1.bf16.msra.mxu0 %v1638
      %1642 = vmatprep.subr.bf16.mxu0 0
      %1643 = vmatpush1.bf16.msra.mxu0 0
      %1644 = vmatprep.subr.bf16.mxu0 0
      %1645 = vmatpush1.bf16.msra.mxu0 0
      %1646 = vmatprep.subr.bf16.mxu0 0
      %1647 = vmatpush1.bf16.msra.mxu0 0
      %1648 = vmatprep.subr.bf16.mxu0 0
      %1649 = vmatpush1.bf16.msra.mxu0 0
      %1650 = vmatprep.subr.bf16.mxu0 0
      %1651 = vmatpush1.bf16.msra.mxu0 0
      %1652 = vmatprep.subr.bf16.mxu0 0
      %1653 = vmatpush1.bf16.msra.mxu0 0
      %1654 = vmatprep.subr.bf16.mxu0 0
      %1655 = vmatpush1.bf16.msra.mxu0 0
      %1656 = vmatprep.subr.bf16.mxu0 0
      %1657 = vmatpush1.bf16.msra.mxu0 0
      %1658 = vmatprep.subr.bf16.mxu0 0
      %1659 = vmatpush1.bf16.msra.mxu0 0
      %1660 = vmatprep.subr.bf16.mxu0 0
      %1661 = vmatpush1.bf16.msra.mxu0 0
      %1662 = vmatprep.subr.bf16.mxu0 0
      %1663 = vmatpush1.bf16.msra.mxu0 0
      %1664 = vmatprep.subr.bf16.mxu0 0
      %1665 = vmatpush1.bf16.msra.mxu0 0
      %1666 = vmatprep.subr.bf16.mxu0 0
      %1667 = vmatpush1.bf16.msra.mxu0 0
      %1668 = vmatprep.subr.bf16.mxu0 0
      %1669 = vmatpush1.bf16.msra.mxu0 0
      %1670 = vmatprep.subr.bf16.mxu0 0
      %1671 = vmatpush1.bf16.msra.mxu0 0
      %1672 = vmatprep.mubr.bf16.mxu0 0
      %1673 = vmatmul.mubr.bf16.gmra.mrb[0].mxu0 %v1611
      %v1674 = vpop.f32.mrb[0].mxu0
      %v1675 = vadd.f32 0.0, %v1674
      %v1676 = vpop.f32.mrb[0].mxu0
      %v1677 = vpop.f32.mrb[0].mxu0
      %v1678 = vadd.f32 0.0, %v1677
      %v1679 = vpop.f32.mrb[0].mxu0
      %1680 = vmatprep.mubr.bf16.mxu0 0
      %1681 = vmatmul.mubr.bf16.gmra.mrb[0].mxu0 %v1614
      %v1682 = vpop.f32.mrb[0].mxu0
      %v1683 = vadd.f32 0.0, %v1682
      %v1684 = vpop.f32.mrb[0].mxu0
      %v1685 = vpop.f32.mrb[0].mxu0
      %v1686 = vadd.f32 0.0, %v1685
      %v1687 = vpop.f32.mrb[0].mxu0
      %1688 = vmatprep.mubr.bf16.mxu0 0
      %1689 = vmatmul.mubr.bf16.gmra.mrb[0].mxu0 %v1617
      %v1690 = vpop.f32.mrb[0].mxu0
      %v1691 = vadd.f32 0.0, %v1690
      %v1692 = vpop.f32.mrb[0].mxu0
      %v1693 = vpop.f32.mrb[0].mxu0
      %v1694 = vadd.f32 0.0, %v1693
      %v1695 = vpop.f32.mrb[0].mxu0
      %1696 = vmatprep.mubr.bf16.mxu0 0
      %1697 = vmatmul.mubr.bf16.gmra.mrb[0].mxu0 %v1620
      %v1698 = vpop.f32.mrb[0].mxu0
      %v1699 = vadd.f32 0.0, %v1698
      %v1700 = vpop.f32.mrb[0].mxu0
      %v1701 = vpop.f32.mrb[0].mxu0
      %v1702 = vadd.f32 0.0, %v1701
      %v1703 = vpop.f32.mrb[0].mxu0
      %1704 = vmatprep.mubr.bf16.mxu0 0
      %1705 = vmatmul.mubr.bf16.gmra.mrb[0].mxu0 %v1623
      %v1706 = vpop.f32.mrb[0].mxu0
      %v1707 = vadd.f32 0.0, %v1706
      %v1708 = vpop.f32.mrb[0].mxu0
      %v1709 = vpop.f32.mrb[0].mxu0
      %v1710 = vadd.f32 0.0, %v1709
      %v1711 = vpop.f32.mrb[0].mxu0
      %1712 = vmatprep.mubr.bf16.mxu0 0
      %1713 = vmatmul.mubr.bf16.gmra.mrb[0].mxu0 %v1626
      %v1714 = vpop.f32.mrb[0].mxu0
      %v1715 = vadd.f32 0.0, %v1714
      %v1716 = vpop.f32.mrb[0].mxu0
      %v1717 = vpop.f32.mrb[0].mxu0
      %v1718 = vadd.f32 0.0, %v1717
      %v1719 = vpop.f32.mrb[0].mxu0
      %1720 = vmatprep.mubr.bf16.mxu0 0
      %1721 = vmatmul.mubr.bf16.gmra.mrb[0].mxu0 %v1629
      %v1722 = vpop.f32.mrb[0].mxu0
      %v1723 = vadd.f32 0.0, %v1722
      %v1724 = vpop.f32.mrb[0].mxu0
      %v1725 = vpop.f32.mrb[0].mxu0
      %v1726 = vadd.f32 0.0, %v1725
      %v1727 = vpop.f32.mrb[0].mxu0
      %1728 = vmatprep.mubr.bf16.mxu0 0
      %1729 = vmatmul.mubr.bf16.gmra.mrb[0].mxu0 %v1632
      %v1730 = vpop.f32.mrb[0].mxu0
      %v1731 = vadd.f32 0.0, %v1730
      %v1732 = vpop.f32.mrb[0].mxu0
      %v1733 = vpop.f32.mrb[0].mxu0
      %v1734 = vadd.f32 0.0, %v1733
      %v1735 = vpop.f32.mrb[0].mxu0
      %1736 = vmatprep.mubr.bf16.mxu0 0
      %1737 = vmatmul.mubr.bf16.gmra.mrb[0].mxu0 %v1635
      %v1738 = vpop.f32.mrb[0].mxu0
      %v1739 = vadd.f32 0.0, %v1738
      %v1740 = vpop.f32.mrb[0].mxu0
      %v1741 = vpop.f32.mrb[0].mxu0
      %v1742 = vadd.f32 0.0, %v1741
      %v1743 = vpop.f32.mrb[0].mxu0
      %1744 = vdwg.mxu0
      %v1745 = vadd.f32 %v1540, %v1675
      %v1746 = vadd.f32 %v1541, %v1678
      %v1747 = vadd.f32 %v1542, %v1683
      %v1748 = vadd.f32 %v1543, %v1686
      %v1749 = vadd.f32 %v1544, %v1691
      %v1750 = vadd.f32 %v1545, %v1694
      %v1751 = vadd.f32 %v1546, %v1699
      %v1752 = vadd.f32 %v1547, %v1702
      %v1753 = vadd.f32 %v1548, %v1707
      %v1754 = vadd.f32 %v1549, %v1710
      %v1755 = vadd.f32 %v1550, %v1715
      %v1756 = vadd.f32 %v1551, %v1718
      %v1757 = vadd.f32 %v1552, %v1723
      %v1758 = vadd.f32 %v1553, %v1726
      %v1759 = vadd.f32 %v1554, %v1731
      %v1760 = vadd.f32 %v1555, %v1734
      %v1761 = vadd.f32 %v1556, %v1739
      %v1762 = vadd.f32 %v1557, %v1742
      %s1763 = scalar_lea.vmem %s1, 16
      %v1764 = vld [vmem:[%s1763] sm:$0x3]
      %vm1765 = vcmask 1044480
      %v1766 = vrot.slane %v358, 3
      %v1767 = vrot.slane %v359, 3
      %v1768 = vsel %vm1765, %v1766, %v1767
      %v1769 = vrot.slane %v360, 3
      %v1770 = vsel %vm1765, %v1767, %v1769
      %v1771 = vrot.slane %v361, 3
      %v1772 = vsel %vm1765, %v1769, %v1771
      %v1773 = vrot.slane %v362, 3
      %v1774 = vsel %vm1765, %v1771, %v1773
      %v1775 = vrot.slane %v363, 3
      %v1776 = vsel %vm1765, %v1773, %v1775
      %v1777 = vrot.slane %v364, 3
      %v1778 = vsel %vm1765, %v1775, %v1777
      %v1779 = vrot.slane %v894, 3
      %v1780 = vsel %vm1765, %v1777, %v1779
      %v1781 = vrot.slane %v1416, 3
      %v1782 = vsel %vm1765, %v1779, %v1781
      %v1783 = vrot.slane %v1417, 3
      %v1784 = vsel %vm1765, %v1781, %v1783
      %v1786 = vsel %vm446, %v1768, 0
      %v1789 = vsel %vm446, %v1770, 0
      %v1792 = vsel %vm446, %v1772, 0
      %v1795 = vsel %vm446, %v1774, 0
      %v1798 = vsel %vm446, %v1776, 0
      %v1801 = vsel %vm446, %v1778, 0
      %v1804 = vsel %vm446, %v1780, 0
      %v1807 = vsel %vm446, %v1782, 0
      %v1810 = vsel %vm446, %v1784, 0
      %v1813 = vsel %vm474, %v1764, 0
      %1815 = vmatprep.subr.bf16.mxu0 0
      %1816 = vmatpush1.bf16.msra.mxu0 %v1813
      %1817 = vmatprep.subr.bf16.mxu0 0
      %1818 = vmatpush1.bf16.msra.mxu0 0
      %1819 = vmatprep.subr.bf16.mxu0 0
      %1820 = vmatpush1.bf16.msra.mxu0 0
      %1821 = vmatprep.subr.bf16.mxu0 0
      %1822 = vmatpush1.bf16.msra.mxu0 0
      %1823 = vmatprep.subr.bf16.mxu0 0
      %1824 = vmatpush1.bf16.msra.mxu0 0
      %1825 = vmatprep.subr.bf16.mxu0 0
      %1826 = vmatpush1.bf16.msra.mxu0 0
      %1827 = vmatprep.subr.bf16.mxu0 0
      %1828 = vmatpush1.bf16.msra.mxu0 0
      %1829 = vmatprep.subr.bf16.mxu0 0
      %1830 = vmatpush1.bf16.msra.mxu0 0
      %1831 = vmatprep.subr.bf16.mxu0 0
      %1832 = vmatpush1.bf16.msra.mxu0 0
      %1833 = vmatprep.subr.bf16.mxu0 0
      %1834 = vmatpush1.bf16.msra.mxu0 0
      %1835 = vmatprep.subr.bf16.mxu0 0
      %1836 = vmatpush1.bf16.msra.mxu0 0
      %1837 = vmatprep.subr.bf16.mxu0 0
      %1838 = vmatpush1.bf16.msra.mxu0 0
      %1839 = vmatprep.subr.bf16.mxu0 0
      %1840 = vmatpush1.bf16.msra.mxu0 0
      %1841 = vmatprep.subr.bf16.mxu0 0
      %1842 = vmatpush1.bf16.msra.mxu0 0
      %1843 = vmatprep.subr.bf16.mxu0 0
      %1844 = vmatpush1.bf16.msra.mxu0 0
      %1845 = vmatprep.subr.bf16.mxu0 0
      %1846 = vmatpush1.bf16.msra.mxu0 0
      %1847 = vmatprep.mubr.bf16.mxu0 0
      %1848 = vmatmul.mubr.bf16.gmra.mrb[0].mxu0 %v1786
      %v1849 = vpop.f32.mrb[0].mxu0
      %v1850 = vadd.f32 0.0, %v1849
      %v1851 = vpop.f32.mrb[0].mxu0
      %v1852 = vpop.f32.mrb[0].mxu0
      %v1853 = vadd.f32 0.0, %v1852
      %v1854 = vpop.f32.mrb[0].mxu0
      %1855 = vmatprep.mubr.bf16.mxu0 0
      %1856 = vmatmul.mubr.bf16.gmra.mrb[0].mxu0 %v1789
      %v1857 = vpop.f32.mrb[0].mxu0
      %v1858 = vadd.f32 0.0, %v1857
      %v1859 = vpop.f32.mrb[0].mxu0
      %v1860 = vpop.f32.mrb[0].mxu0
      %v1861 = vadd.f32 0.0, %v1860
      %v1862 = vpop.f32.mrb[0].mxu0
      %1863 = vmatprep.mubr.bf16.mxu0 0
      %1864 = vmatmul.mubr.bf16.gmra.mrb[0].mxu0 %v1792
      %v1865 = vpop.f32.mrb[0].mxu0
      %v1866 = vadd.f32 0.0, %v1865
      %v1867 = vpop.f32.mrb[0].mxu0
      %v1868 = vpop.f32.mrb[0].mxu0
      %v1869 = vadd.f32 0.0, %v1868
      %v1870 = vpop.f32.mrb[0].mxu0
      %1871 = vmatprep.mubr.bf16.mxu0 0
      %1872 = vmatmul.mubr.bf16.gmra.mrb[0].mxu0 %v1795
      %v1873 = vpop.f32.mrb[0].mxu0
      %v1874 = vadd.f32 0.0, %v1873
      %v1875 = vpop.f32.mrb[0].mxu0
      %v1876 = vpop.f32.mrb[0].mxu0
      %v1877 = vadd.f32 0.0, %v1876
      %v1878 = vpop.f32.mrb[0].mxu0
      %1879 = vmatprep.mubr.bf16.mxu0 0
      %1880 = vmatmul.mubr.bf16.gmra.mrb[0].mxu0 %v1798
      %v1881 = vpop.f32.mrb[0].mxu0
      %v1882 = vadd.f32 0.0, %v1881
      %v1883 = vpop.f32.mrb[0].mxu0
      %v1884 = vpop.f32.mrb[0].mxu0
      %v1885 = vadd.f32 0.0, %v1884
      %v1886 = vpop.f32.mrb[0].mxu0
      %1887 = vmatprep.mubr.bf16.mxu0 0
      %1888 = vmatmul.mubr.bf16.gmra.mrb[0].mxu0 %v1801
      %v1889 = vpop.f32.mrb[0].mxu0
      %v1890 = vadd.f32 0.0, %v1889
      %v1891 = vpop.f32.mrb[0].mxu0
      %v1892 = vpop.f32.mrb[0].mxu0
      %v1893 = vadd.f32 0.0, %v1892
      %v1894 = vpop.f32.mrb[0].mxu0
      %1895 = vmatprep.mubr.bf16.mxu0 0
      %1896 = vmatmul.mubr.bf16.gmra.mrb[0].mxu0 %v1804
      %v1897 = vpop.f32.mrb[0].mxu0
      %v1898 = vadd.f32 0.0, %v1897
      %v1899 = vpop.f32.mrb[0].mxu0
      %v1900 = vpop.f32.mrb[0].mxu0
      %v1901 = vadd.f32 0.0, %v1900
      %v1902 = vpop.f32.mrb[0].mxu0
      %1903 = vmatprep.mubr.bf16.mxu0 0
      %1904 = vmatmul.mubr.bf16.gmra.mrb[0].mxu0 %v1807
      %v1905 = vpop.f32.mrb[0].mxu0
      %v1906 = vadd.f32 0.0, %v1905
      %v1907 = vpop.f32.mrb[0].mxu0
      %v1908 = vpop.f32.mrb[0].mxu0
      %v1909 = vadd.f32 0.0, %v1908
      %v1910 = vpop.f32.mrb[0].mxu0
      %1911 = vmatprep.mubr.bf16.mxu0 0
      %1912 = vmatmul.mubr.bf16.gmra.mrb[0].mxu0 %v1810
      %v1913 = vpop.f32.mrb[0].mxu0
      %v1914 = vadd.f32 0.0, %v1913
      %v1915 = vpop.f32.mrb[0].mxu0
      %v1916 = vpop.f32.mrb[0].mxu0
      %v1917 = vadd.f32 0.0, %v1916
      %v1918 = vpop.f32.mrb[0].mxu0
      %1919 = vdwg.mxu0
      %v1920 = vadd.f32 %v1745, %v1850
      %v1921 = vadd.f32 %v1746, %v1853
      %v1922 = vadd.f32 %v1747, %v1858
      %v1923 = vadd.f32 %v1748, %v1861
      %v1924 = vadd.f32 %v1749, %v1866
      %v1925 = vadd.f32 %v1750, %v1869
      %v1926 = vadd.f32 %v1751, %v1874
      %v1927 = vadd.f32 %v1752, %v1877
      %v1928 = vadd.f32 %v1753, %v1882
      %v1929 = vadd.f32 %v1754, %v1885
      %v1930 = vadd.f32 %v1755, %v1890
      %v1931 = vadd.f32 %v1756, %v1893
      %v1932 = vadd.f32 %v1757, %v1898
      %v1933 = vadd.f32 %v1758, %v1901
      %v1934 = vadd.f32 %v1759, %v1906
      %v1935 = vadd.f32 %v1760, %v1909
      %v1936 = vadd.f32 %v1761, %v1914
      %v1937 = vadd.f32 %v1762, %v1917
      %v1938 = vpack.c.bf16 %v1921, %v1920
      %v1939 = vpack.c.bf16 %v1923, %v1922
      %v1940 = vpack.c.bf16 %v1925, %v1924
      %v1941 = vpack.c.bf16 %v1927, %v1926
      %v1942 = vpack.c.bf16 %v1929, %v1928
      %v1943 = vpack.c.bf16 %v1931, %v1930
      %v1944 = vpack.c.bf16 %v1933, %v1932
      %v1945 = vpack.c.bf16 %v1935, %v1934
      %v1946 = vpack.c.bf16 %v1937, %v1936
      %v1956 = vunpack.c.l.b16 %v1938
      %v1957 = vunpack.c.h.b16 %v1938
      %v1958 = vunpack.c.l.b16 %v1939
      %v1959 = vunpack.c.h.b16 %v1939
      %v1960 = vunpack.c.l.b16 %v1940
      %v1961 = vunpack.c.h.b16 %v1940
      %v1962 = vunpack.c.l.b16 %v1941
      %v1963 = vunpack.c.h.b16 %v1941
      %v1964 = vunpack.c.l.b16 %v1942
      %v1965 = vunpack.c.h.b16 %v1942
      %v1966 = vunpack.c.l.b16 %v1943
      %v1967 = vunpack.c.h.b16 %v1943
      %v1968 = vunpack.c.l.b16 %v1944
      %v1969 = vunpack.c.h.b16 %v1944
      %v1970 = vunpack.c.l.b16 %v1945
      %v1971 = vunpack.c.h.b16 %v1945
      %v1972 = vunpack.c.l.b16 %v1946
      %v1973 = vunpack.c.h.b16 %v1946
      %v1974 = vpack.c.b16 %v1956, %v1956
      %v1975 = vpack.c.b16 %v1957, %v1957
      %v1976 = vpack.c.b16 %v1958, %v1958
      %v1977 = vpack.c.b16 %v1959, %v1959
      %v1978 = vpack.c.b16 %v1960, %v1960
      %v1979 = vpack.c.b16 %v1961, %v1961
      %v1980 = vpack.c.b16 %v1962, %v1962
      %v1981 = vpack.c.b16 %v1963, %v1963
      %v1982 = vpack.c.b16 %v1964, %v1964
      %v1983 = vpack.c.b16 %v1965, %v1965
      %v1984 = vpack.c.b16 %v1966, %v1966
      %v1985 = vpack.c.b16 %v1967, %v1967
      %v1986 = vpack.c.b16 %v1968, %v1968
      %v1987 = vpack.c.b16 %v1969, %v1969
      %v1988 = vpack.c.b16 %v1970, %v1970
      %v1989 = vpack.c.b16 %v1971, %v1971
      %v1990 = vpack.c.b16 %v1972, %v1972
      %v1991 = vpack.c.b16 %v1973, %v1973
      %vm2010 = vcmask 27648
      %2011 = vst.msk [vmem:[%s300] sm:$0xf] %vm2010, %v1974
      %2012 = vst.msk [vmem:[%s300 + $0x4] sm:$0xf] %vm2010, %v1975
      %2013 = vst.msk [vmem:[%s300 + $0x8] sm:$0xf] %vm2010, %v1976
      %2014 = vst.msk [vmem:[%s300 + $0xc] sm:$0xf] %vm2010, %v1977
      %2015 = vst.msk [vmem:[%s300 + $0x10] sm:$0xf] %vm2010, %v1978
      %2016 = vst.msk [vmem:[%s300 + $0x14] sm:$0xf] %vm2010, %v1979
      %2017 = vst.msk [vmem:[%s300 + $0x18] sm:$0xf] %vm2010, %v1980
      %2018 = vst.msk [vmem:[%s300 + $0x1c] sm:$0xf] %vm2010, %v1981
      %2019 = vst.msk [vmem:[%s300 + $0x20] sm:$0xf] %vm2010, %v1982
      %2020 = vst.msk [vmem:[%s300 + $0x24] sm:$0xf] %vm2010, %v1983
      %2021 = vst.msk [vmem:[%s300 + $0x28] sm:$0xf] %vm2010, %v1984
      %2022 = vst.msk [vmem:[%s300 + $0x2c] sm:$0xf] %vm2010, %v1985
      %2023 = vst.msk [vmem:[%s300 + $0x30] sm:$0xf] %vm2010, %v1986
      %2024 = vst.msk [vmem:[%s300 + $0x34] sm:$0xf] %vm2010, %v1987
      %2025 = vst.msk [vmem:[%s300 + $0x38] sm:$0xf] %vm2010, %v1988
      %2026 = vst.msk [vmem:[%s300 + $0x3c] sm:$0xf] %vm2010, %v1989
      %2027 = vst.msk [vmem:[%s300 + $0x40] sm:$0xf] %vm2010, %v1990
      %2028 = vst.msk [vmem:[%s300 + $0x44] sm:$0xf] %vm2010, %v1991
      %v2029 = vld [vmem:[%s4] sm:$0xff]
      %v2030 = vld [vmem:[%s4 + $0x8] sm:$0xff]
      %v2031 = vld [vmem:[%s4 + $0x10] sm:$0xff]
      %v2032 = vld [vmem:[%s4 + $0x18] sm:$0xff]
      %v2033 = vld [vmem:[%s4 + $0x20] sm:$0xff]
      %v2034 = vld [vmem:[%s4 + $0x28] sm:$0xff]
      %v2035 = vld [vmem:[%s4 + $0x30] sm:$0xff]
      %v2036 = vld [vmem:[%s4 + $0x38] sm:$0xff]
      %v2037 = vld [vmem:[%s4 + $0x40] sm:$0xff]
      %v2038 = vld [vmem:[%s4 + $0x48] sm:$0xff]
      %v2039 = vld [vmem:[%s4 + $0x50] sm:$0xff]
      %v2040 = vld [vmem:[%s4 + $0x58] sm:$0xff]
      %v2041 = vld [vmem:[%s4 + $0x60] sm:$0xff]
      %v2042 = vld [vmem:[%s4 + $0x68] sm:$0xff]
      %v2043 = vld [vmem:[%s4 + $0x70] sm:$0xff]
      %v2044 = vld [vmem:[%s4 + $0x78] sm:$0xff]
      %v2045 = vld [vmem:[%s4 + $0x80] sm:$0xff]
      %v2046 = vld [vmem:[%s4 + $0x88] sm:$0xff]
      %2048 = vset.pattern.permute.xlu0 0
      %2049 = vperm.xlu0 %2048, %v2029
      %v2050 = vpop.permute.xlu0 %2049
      %2053 = vset.pattern.permute.xlu0 0
      %2054 = vperm.xlu0 %2053, %v2030
      %v2055 = vpop.permute.xlu0 %2054
      %2058 = vset.pattern.permute.xlu0 0
      %2059 = vperm.xlu0 %2058, %v2031
      %v2060 = vpop.permute.xlu0 %2059
      %2063 = vset.pattern.permute.xlu0 0
      %2064 = vperm.xlu0 %2063, %v2032
      %v2065 = vpop.permute.xlu0 %2064
      %2068 = vset.pattern.permute.xlu0 0
      %2069 = vperm.xlu0 %2068, %v2033
      %v2070 = vpop.permute.xlu0 %2069
      %2073 = vset.pattern.permute.xlu0 0
      %2074 = vperm.xlu0 %2073, %v2034
      %v2075 = vpop.permute.xlu0 %2074
      %2078 = vset.pattern.permute.xlu0 0
      %2079 = vperm.xlu0 %2078, %v2035
      %v2080 = vpop.permute.xlu0 %2079
      %2083 = vset.pattern.permute.xlu0 0
      %2084 = vperm.xlu0 %2083, %v2036
      %v2085 = vpop.permute.xlu0 %2084
      %2088 = vset.pattern.permute.xlu0 0
      %2089 = vperm.xlu0 %2088, %v2037
      %v2090 = vpop.permute.xlu0 %2089
      %2093 = vset.pattern.permute.xlu0 0
      %2094 = vperm.xlu0 %2093, %v2038
      %v2095 = vpop.permute.xlu0 %2094
      %2098 = vset.pattern.permute.xlu0 0
      %2099 = vperm.xlu0 %2098, %v2039
      %v2100 = vpop.permute.xlu0 %2099
      %2103 = vset.pattern.permute.xlu0 0
      %2104 = vperm.xlu0 %2103, %v2040
      %v2105 = vpop.permute.xlu0 %2104
      %2108 = vset.pattern.permute.xlu0 0
      %2109 = vperm.xlu0 %2108, %v2041
      %v2110 = vpop.permute.xlu0 %2109
      %2113 = vset.pattern.permute.xlu0 0
      %2114 = vperm.xlu0 %2113, %v2042
      %v2115 = vpop.permute.xlu0 %2114
      %2118 = vset.pattern.permute.xlu0 0
      %2119 = vperm.xlu0 %2118, %v2043
      %v2120 = vpop.permute.xlu0 %2119
      %2123 = vset.pattern.permute.xlu0 0
      %2124 = vperm.xlu0 %2123, %v2044
      %v2125 = vpop.permute.xlu0 %2124
      %2128 = vset.pattern.permute.xlu0 0
      %2129 = vperm.xlu0 %2128, %v2045
      %v2130 = vpop.permute.xlu0 %2129
      %2133 = vset.pattern.permute.xlu0 0
      %2134 = vperm.xlu0 %2133, %v2046
      %v2135 = vpop.permute.xlu0 %2134
      %v2137 = vmul.f32 %v1920, %v2050
      %v2138 = vmul.f32 %v1921, %v2055
      %v2139 = vmul.f32 %v1922, %v2060
      %v2140 = vmul.f32 %v1923, %v2065
      %v2141 = vmul.f32 %v1924, %v2070
      %v2142 = vmul.f32 %v1925, %v2075
      %v2143 = vmul.f32 %v1926, %v2080
      %v2144 = vmul.f32 %v1927, %v2085
      %v2145 = vmul.f32 %v1928, %v2090
      %v2146 = vmul.f32 %v1929, %v2095
      %v2147 = vmul.f32 %v1930, %v2100
      %v2148 = vmul.f32 %v1931, %v2105
      %v2149 = vmul.f32 %v1932, %v2110
      %v2150 = vmul.f32 %v1933, %v2115
      %v2151 = vmul.f32 %v1934, %v2120
      %v2152 = vmul.f32 %v1935, %v2125
      %v2153 = vmul.f32 %v1936, %v2130
      %v2154 = vmul.f32 %v1937, %v2135
      %v2155 = vsel %vm446, %v2137, 0.0
      %v2156 = vsel %vm446, %v2138, 0.0
      %v2157 = vadd.f32 %v2155, %v2156
      %v2158 = vsel %vm446, %v2139, 0.0
      %v2159 = vadd.f32 %v2157, %v2158
      %v2160 = vsel %vm446, %v2140, 0.0
      %v2161 = vadd.f32 %v2159, %v2160
      %v2162 = vsel %vm446, %v2141, 0.0
      %v2163 = vadd.f32 %v2161, %v2162
      %v2164 = vsel %vm446, %v2142, 0.0
      %v2165 = vadd.f32 %v2163, %v2164
      %v2166 = vsel %vm446, %v2143, 0.0
      %v2167 = vadd.f32 %v2165, %v2166
      %v2168 = vsel %vm446, %v2144, 0.0
      %v2169 = vadd.f32 %v2167, %v2168
      %v2170 = vsel %vm446, %v2145, 0.0
      %v2171 = vadd.f32 %v2169, %v2170
      %v2172 = vsel %vm446, %v2146, 0.0
      %v2173 = vadd.f32 %v2171, %v2172
      %v2174 = vsel %vm446, %v2147, 0.0
      %v2175 = vadd.f32 %v2173, %v2174
      %v2176 = vsel %vm446, %v2148, 0.0
      %v2177 = vadd.f32 %v2175, %v2176
      %v2178 = vsel %vm446, %v2149, 0.0
      %v2179 = vadd.f32 %v2177, %v2178
      %v2180 = vsel %vm446, %v2150, 0.0
      %v2181 = vadd.f32 %v2179, %v2180
      %v2182 = vsel %vm446, %v2151, 0.0
      %v2183 = vadd.f32 %v2181, %v2182
      %v2184 = vsel %vm446, %v2152, 0.0
      %v2185 = vadd.f32 %v2183, %v2184
      %v2186 = vsel %vm446, %v2153, 0.0
      %v2187 = vadd.f32 %v2185, %v2186
      %v2188 = vsel %vm446, %v2154, 0.0
      %v2189 = vadd.f32 %v2187, %v2188
      %v2190 = vrot.slane %v2189, 4
      %v2191 = vadd.f32 %v2189, %v2190
      %v2192 = vrot.slane %v2191, 2
      %v2193 = vadd.f32 %v2191, %v2192
      %v2194 = vrot.slane %v2193, 1
      %v2195 = vadd.f32 %v2193, %v2194
      %v2196 = vmul.f32 %v1920, %v1920
      %v2197 = vmul.f32 %v1921, %v1921
      %v2198 = vmul.f32 %v1922, %v1922
      %v2199 = vmul.f32 %v1923, %v1923
      %v2200 = vmul.f32 %v1924, %v1924
      %v2201 = vmul.f32 %v1925, %v1925
      %v2202 = vmul.f32 %v1926, %v1926
      %v2203 = vmul.f32 %v1927, %v1927
      %v2204 = vmul.f32 %v1928, %v1928
      %v2205 = vmul.f32 %v1929, %v1929
      %v2206 = vmul.f32 %v1930, %v1930
      %v2207 = vmul.f32 %v1931, %v1931
      %v2208 = vmul.f32 %v1932, %v1932
      %v2209 = vmul.f32 %v1933, %v1933
      %v2210 = vmul.f32 %v1934, %v1934
      %v2211 = vmul.f32 %v1935, %v1935
      %v2212 = vmul.f32 %v1936, %v1936
      %v2213 = vmul.f32 %v1937, %v1937
      %v2214 = vmul.f32 %v2196, %v2050
      %v2215 = vmul.f32 %v2197, %v2055
      %v2216 = vmul.f32 %v2198, %v2060
      %v2217 = vmul.f32 %v2199, %v2065
      %v2218 = vmul.f32 %v2200, %v2070
      %v2219 = vmul.f32 %v2201, %v2075
      %v2220 = vmul.f32 %v2202, %v2080
      %v2221 = vmul.f32 %v2203, %v2085
      %v2222 = vmul.f32 %v2204, %v2090
      %v2223 = vmul.f32 %v2205, %v2095
      %v2224 = vmul.f32 %v2206, %v2100
      %v2225 = vmul.f32 %v2207, %v2105
      %v2226 = vmul.f32 %v2208, %v2110
      %v2227 = vmul.f32 %v2209, %v2115
      %v2228 = vmul.f32 %v2210, %v2120
      %v2229 = vmul.f32 %v2211, %v2125
      %v2230 = vmul.f32 %v2212, %v2130
      %v2231 = vmul.f32 %v2213, %v2135
      %v2232 = vsel %vm446, %v2214, 0.0
      %v2233 = vsel %vm446, %v2215, 0.0
      %v2234 = vadd.f32 %v2232, %v2233
      %v2235 = vsel %vm446, %v2216, 0.0
      %v2236 = vadd.f32 %v2234, %v2235
      %v2237 = vsel %vm446, %v2217, 0.0
      %v2238 = vadd.f32 %v2236, %v2237
      %v2239 = vsel %vm446, %v2218, 0.0
      %v2240 = vadd.f32 %v2238, %v2239
      %v2241 = vsel %vm446, %v2219, 0.0
      %v2242 = vadd.f32 %v2240, %v2241
      %v2243 = vsel %vm446, %v2220, 0.0
      %v2244 = vadd.f32 %v2242, %v2243
      %v2245 = vsel %vm446, %v2221, 0.0
      %v2246 = vadd.f32 %v2244, %v2245
      %v2247 = vsel %vm446, %v2222, 0.0
      %v2248 = vadd.f32 %v2246, %v2247
      %v2249 = vsel %vm446, %v2223, 0.0
      %v2250 = vadd.f32 %v2248, %v2249
      %v2251 = vsel %vm446, %v2224, 0.0
      %v2252 = vadd.f32 %v2250, %v2251
      %v2253 = vsel %vm446, %v2225, 0.0
      %v2254 = vadd.f32 %v2252, %v2253
      %v2255 = vsel %vm446, %v2226, 0.0
      %v2256 = vadd.f32 %v2254, %v2255
      %v2257 = vsel %vm446, %v2227, 0.0
      %v2258 = vadd.f32 %v2256, %v2257
      %v2259 = vsel %vm446, %v2228, 0.0
      %v2260 = vadd.f32 %v2258, %v2259
      %v2261 = vsel %vm446, %v2229, 0.0
      %v2262 = vadd.f32 %v2260, %v2261
      %v2263 = vsel %vm446, %v2230, 0.0
      %v2264 = vadd.f32 %v2262, %v2263
      %v2265 = vsel %vm446, %v2231, 0.0
      %v2266 = vadd.f32 %v2264, %v2265
      %v2267 = vrot.slane %v2266, 4
      %v2268 = vadd.f32 %v2266, %v2267
      %v2269 = vrot.slane %v2268, 2
      %v2270 = vadd.f32 %v2268, %v2269
      %v2271 = vrot.slane %v2270, 1
      %v2272 = vadd.f32 %v2270, %v2271
      %vm2273 = vcmask 1040384
      %v2274 = vsel %vm2273, %v2195, %v2272
      %vm2275 = vcmask 25600
      %2276 = vst.msk [vmem:[%s308] sm:$0x3] %vm2275, %v2274
      %p2277 = scmp.lt.s32.totalorder %s22, 1
      %s2278 = scalar_select %p2277, %s22, 1
      %p2279 = scmp.lt.s32.totalorder %s23, 1
      %s2280 = scalar_select %p2279, %s23, 1
      %s2281 = smul.addr %s2280, 18
      %s2282 = smul.addr %s2278, 36
      %s2283 = sadd.s32 %s2281, %s2282
      %s2284 = smul.addr %s2283, 4
      %s2285 = scalar_lea.vmem %s5, %s2284
      %p2286 = scmp.lt.s32.totalorder %s22, 1
      %s2287 = scalar_select %p2286, %s22, 1
      %p2288 = scmp.lt.s32.totalorder %s23, 1
      %s2289 = scalar_select %p2288, %s23, 1
      %s2290 = smul.addr %s2287, 2
      %s2291 = sadd.s32 %s2289, %s2290
      %s2292 = smul.addr %s2291, 2
      %s2293 = scalar_lea.vmem %s6, %s2292
      // Predicated region
      $region41: #{residual_forward.4} parent=39 // pred_check
        %p2294 = pneg %p162
      $region42: #{residual_forward.4} parent=39 // pred_check_branch
        %2296 = sbr.rel (%p2294) target = $region44
      $region43: #{residual_forward.4} parent=39 // pred_region
        _
      $region44: #{residual_forward.4} parent=39 // pred_fallthru
        _
      // Predicated region
      $region45: #{residual_forward.4} parent=39 // pred_check
        %p2297 = pneg %p190
      $region46: #{residual_forward.4} parent=39 // pred_check_branch
        %2299 = sbr.rel (%p2297) target = $region48
      $region47: #{residual_forward.4} parent=39 // pred_region
        _
      $region48: #{residual_forward.4} parent=39 // pred_fallthru
        _
    $region40: #{residual_forward.4} parent=5 // pred_fallthru
      _
    %p2300 = scmp.le.s32.totalorder 2, %s13
    // Predicated region
    $region49: #{residual_forward.4} parent=5 // pred_check
      %p2301 = pneg %p2300
    $region50: #{residual_forward.4} parent=5 // pred_check_branch
      %2303 = sbr.rel (%p2301) target = $region52
    $region51: #{residual_forward.4} parent=5 // pred_region
      %s2304 = ssub.s32 %s13, 2
      // Predicated region
      $region53: #{residual_forward.4} parent=51 // pred_check
        %p2305 = pneg %p168
      $region54: #{residual_forward.4} parent=51 // pred_check_branch
        %2307 = sbr.rel (%p2305) target = $region56
      $region55: #{residual_forward.4} parent=51 // pred_region
        %p2308 = scmp.lt.s32.totalorder %s24, 1
        %s2309 = scalar_select %p2308, %s24, 1
        %p2310 = scmp.lt.s32.totalorder %s25, 1
        %s2311 = scalar_select %p2310, %s25, 1
        %s2312 = smul.addr %s2311, 18
        %s2313 = smul.addr %s2309, 36
        %s2314 = sadd.s32 %s2312, %s2313
        %s2315 = smul.addr %s2314, 4
        %s2316 = scalar_lea.vmem %s5, %s2315
      $region56: #{residual_forward.4} parent=51 // pred_fallthru
        _
      // Predicated region
      $region57: #{residual_forward.4} parent=51 // pred_check
        %p2317 = pneg %p196
      $region58: #{residual_forward.4} parent=51 // pred_check_branch
        %2319 = sbr.rel (%p2317) target = $region60
      $region59: #{residual_forward.4} parent=51 // pred_region
        %p2320 = scmp.lt.s32.totalorder %s24, 1
        %s2321 = scalar_select %p2320, %s24, 1
        %p2322 = scmp.lt.s32.totalorder %s25, 1
        %s2323 = scalar_select %p2322, %s25, 1
        %s2324 = smul.addr %s2321, 2
        %s2325 = sadd.s32 %s2323, %s2324
        %s2326 = smul.addr %s2325, 2
        %s2327 = scalar_lea.vmem %s6, %s2326
      $region60: #{residual_forward.4} parent=51 // pred_fallthru
        _
    $region52: #{residual_forward.4} parent=5 // pred_fallthru
      _
  $region6: #{residual_forward.4} parent=0 // loop_footer
    %s17 = sadd.s32 1, %s13
  $region7: #{residual_forward.4} parent=0 // loop_footer_branch
    %12 = sbr.rel target = $region3
  $region8: #{residual_forward.4} parent=0 // loop_exit
    _

// kernel: residual_forward.5
$region0: #{residual_forward.5}
  #allocation0 [shape = 'u32[]', space=smem, size = 0x4, offset = 0x4, fixed_abs, tag = 'smem constant byte address 0x4 - core index']
  #allocation1 [shape = 'u32[144,128]{1,0:T(1,128)}', space=vmem, size = 0x12000, scoped, tag = 'internal scratch']
  %s0 = inlined_call_operand.vmem [shape: bf16[2,2,184,4], index: 0, kind: input, shape index: {}]
  %s1 = inlined_call_operand.vmem [shape: bf16[9,4,4], index: 1, kind: input, shape index: {}]
  %s2 = inlined_call_operand.vmem [shape: f32[1,4], index: 2, kind: input, shape index: {}]
  %s3 = inlined_call_operand.vmem [shape: f32[1,4], index: 3, kind: input, shape index: {}]
  %s4 = inlined_call_operand.vmem [shape: f32[144,1], index: 4, kind: input, shape index: {}]
  %s5 = inlined_call_operand.vmem [shape: bf16[2,2,144,4], index: 5, kind: output, shape index: {0}]
  %s6 = inlined_call_operand.vmem [shape: f32[2,2,2,4], index: 6, kind: output, shape index: {1}]
  %7 = xla_tuple %s5, %s6
  %s8 = sld [smem:[#allocation0]]
  $region61: #{residual_forward.5} parent=0
    _
  %s10 = ssub.s32 1, %s8
  %s11 = scalar_select 0, %s10, %s8
  loop: start=0, step=1, limit=6
  $region2: #{residual_forward.5} parent=0 // loop_pre_header
    _
  $region3: #{residual_forward.5} parent=0 // loop_header
    %s13 = sphi 0, %s17
    %p14 = scmp.ge.s32.totalorder %s13, 6
    %s20 = sphi 0, %s32
    %s21 = sphi 0, %s28
    %s22 = sphi 0, %s20
    %s23 = sphi 0, %s21
    %s24 = sphi 0, %s22
    %s25 = sphi 0, %s23
    %s37 = sphi 0, %s39
    %s40 = sphi 0, %s37
    %s41 = sphi 0, %s40
    %s57 = sphi 0, %s41
    %s61 = sphi 0, %s61
    %s63 = sphi 0, %s61
    %s64 = sphi 0, %s63
    %s78 = sphi 0, %s64
    %s82 = sphi 0, %s82
    %s84 = sphi 0, %s82
    %s85 = sphi 0, %s84
    %s99 = sphi 0, %s85
    %s103 = sphi 0, %s103
    %s105 = sphi 0, %s103
    %s106 = sphi 0, %s105
    %s120 = sphi 0, %s106
    %s124 = sphi 0, %s124
    %s126 = sphi 0, %s124
    %s127 = sphi 0, %s126
    %s141 = sphi 0, %s127
    %s149 = sphi 0, %s151
    %s152 = sphi 0, %s149
    %s153 = sphi 0, %s152
    %s169 = sphi 0, %s153
    %s177 = sphi 0, %s179
    %s180 = sphi 0, %s177
    %s181 = sphi 0, %s180
    %s197 = sphi 0, %s181
  $region4: #{residual_forward.5} parent=0 // loop_header_branch
    %16 = sbr.rel (%p14) target = $region8
  $region5: #{residual_forward.5} parent=0 // loop_body
    %s18 = ssub.s32 %s13, 1
    %s19 = ssub.s32 %s13, 2
    %s26 = sadd.s32 1, %s21
    %p27 = scmp.ge.s32.totalorder %s26, 2
    %s28 = scalar_select %p27, 0, %s26
    %s29 = sadd.s32 1, %s20
    %s30 = scalar_select %p27, %s29, %s20
    %p31 = scmp.ge.s32.totalorder %s30, 2
    %s32 = scalar_select %p31, 0, %s30
    %s33 = ssub.s32 %s20, %s32
    %s34 = ssub.s32 %s21, %s28
    %s35 = sor.u32 %s33, %s34
    %p36 = scmp.eq.s32.totalorder %s35, 0
    %s38 = sadd.s32 %s37, 1
    %s39 = scalar_select %p36, %s37, %s38
    %p42 = pneg %p36
    %p43 = scmp.eq.s32.totalorder %s13, 3
    %p44 = por %p42, %p43
    %p45 = scmp.ne.s32.totalorder %s37, %s40
    %p46 = scmp.eq.s32.totalorder %s13, 0
    %p47 = por %p45, %p46
    %p48 = scmp.ne.s32.totalorder %s37, %s40
    %p49 = scmp.eq.s32.totalorder %s18, 3
    %p50 = por %p48, %p49
    %p51 = scmp.ne.s32.totalorder %s40, %s41
    %p52 = scmp.eq.s32.totalorder %s18, 0
    %p53 = por %p51, %p52
    %p54 = scmp.ne.s32.totalorder %s40, %s41
    %p55 = scmp.eq.s32.totalorder %s19, 3
    %p56 = por %p54, %p55
    %p58 = scmp.ne.s32.totalorder %s41, %s57
    %p59 = scmp.eq.s32.totalorder %s19, 0
    %p60 = por %p58, %p59
    %s62 = sadd.s32 %s61, 1
    %p65 = scmp.eq.s32.totalorder %s13, 3
    %p66 = scmp.ne.s32.totalorder %s61, %s63
    %p67 = scmp.eq.s32.totalorder %s13, 0
    %p68 = por %p66, %p67
    %p69 = scmp.ne.s32.totalorder %s61, %s63
    %p70 = scmp.eq.s32.totalorder %s18, 3
    %p71 = por %p69, %p70
    %p72 = scmp.ne.s32.totalorder %s63, %s64
    %p73 = scmp.eq.s32.totalorder %s18, 0
    %p74 = por %p72, %p73
    %p75 = scmp.ne.s32.totalorder %s63, %s64
    %p76 = scmp.eq.s32.totalorder %s19, 3
    %p77 = por %p75, %p76
    %p79 = scmp.ne.s32.totalorder %s64, %s78
    %p80 = scmp.eq.s32.totalorder %s19, 0
    %p81 = por %p79, %p80
    %s83 = sadd.s32 %s82, 1
    %p86 = scmp.eq.s32.totalorder %s13, 3
    %p87 = scmp.ne.s32.totalorder %s82, %s84
    %p88 = scmp.eq.s32.totalorder %s13, 0
    %p89 = por %p87, %p88
    %p90 = scmp.ne.s32.totalorder %s82, %s84
    %p91 = scmp.eq.s32.totalorder %s18, 3
    %p92 = por %p90, %p91
    %p93 = scmp.ne.s32.totalorder %s84, %s85
    %p94 = scmp.eq.s32.totalorder %s18, 0
    %p95 = por %p93, %p94
    %p96 = scmp.ne.s32.totalorder %s84, %s85
    %p97 = scmp.eq.s32.totalorder %s19, 3
    %p98 = por %p96, %p97
    %p100 = scmp.ne.s32.totalorder %s85, %s99
    %p101 = scmp.eq.s32.totalorder %s19, 0
    %p102 = por %p100, %p101
    %s104 = sadd.s32 %s103, 1
    %p107 = scmp.eq.s32.totalorder %s13, 3
    %p108 = scmp.ne.s32.totalorder %s103, %s105
    %p109 = scmp.eq.s32.totalorder %s13, 0
    %p110 = por %p108, %p109
    %p111 = scmp.ne.s32.totalorder %s103, %s105
    %p112 = scmp.eq.s32.totalorder %s18, 3
    %p113 = por %p111, %p112
    %p114 = scmp.ne.s32.totalorder %s105, %s106
    %p115 = scmp.eq.s32.totalorder %s18, 0
    %p116 = por %p114, %p115
    %p117 = scmp.ne.s32.totalorder %s105, %s106
    %p118 = scmp.eq.s32.totalorder %s19, 3
    %p119 = por %p117, %p118
    %p121 = scmp.ne.s32.totalorder %s106, %s120
    %p122 = scmp.eq.s32.totalorder %s19, 0
    %p123 = por %p121, %p122
    %s125 = sadd.s32 %s124, 1
    %p128 = scmp.eq.s32.totalorder %s13, 3
    %p129 = scmp.ne.s32.totalorder %s124, %s126
    %p130 = scmp.eq.s32.totalorder %s13, 0
    %p131 = por %p129, %p130
    %p132 = scmp.ne.s32.totalorder %s124, %s126
    %p133 = scmp.eq.s32.totalorder %s18, 3
    %p134 = por %p132, %p133
    %p135 = scmp.ne.s32.totalorder %s126, %s127
    %p136 = scmp.eq.s32.totalorder %s18, 0
    %p137 = por %p135, %p136
    %p138 = scmp.ne.s32.totalorder %s126, %s127
    %p139 = scmp.eq.s32.totalorder %s19, 3
    %p140 = por %p138, %p139
    %p142 = scmp.ne.s32.totalorder %s127, %s141
    %p143 = scmp.eq.s32.totalorder %s19, 0
    %p144 = por %p142, %p143
    %s145 = ssub.s32 %s20, %s32
    %s146 = ssub.s32 %s21, %s28
    %s147 = sor.u32 %s145, %s146
    %p148 = scmp.eq.s32.totalorder %s147, 0
    %s150 = sadd.s32 %s149, 1
    %s151 = scalar_select %p148, %s149, %s150
    %p154 = pneg %p148
    %p155 = scmp.eq.s32.totalorder %s13, 3
    %p156 = por %p154, %p155
    %p157 = scmp.ne.s32.totalorder %s149, %s152
    %p158 = scmp.eq.s32.totalorder %s13, 0
    %p159 = por %p157, %p158
    %p160 = scmp.ne.s32.totalorder %s149, %s152
    %p161 = scmp.eq.s32.totalorder %s18, 3
    %p162 = por %p160, %p161
    %p163 = scmp.ne.s32.totalorder %s152, %s153
    %p164 = scmp.eq.s32.totalorder %s18, 0
    %p165 = por %p163, %p164
    %p166 = scmp.ne.s32.totalorder %s152, %s153
    %p167 = scmp.eq.s32.totalorder %s19, 3
    %p168 = por %p166, %p167
    %p170 = scmp.ne.s32.totalorder %s153, %s169
    %p171 = scmp.eq.s32.totalorder %s19, 0
    %p172 = por %p170, %p171
    %s173 = ssub.s32 %s20, %s32
    %s174 = ssub.s32 %s21, %s28
    %s175 = sor.u32 %s173, %s174
    %p176 = scmp.eq.s32.totalorder %s175, 0
    %s178 = sadd.s32 %s177, 1
    %s179 = scalar_select %p176, %s177, %s178
    %p182 = pneg %p176
    %p183 = scmp.eq.s32.totalorder %s13, 3
    %p184 = por %p182, %p183
    %p185 = scmp.ne.s32.totalorder %s177, %s180
    %p186 = scmp.eq.s32.totalorder %s13, 0
    %p187 = por %p185, %p186
    %p188 = scmp.ne.s32.totalorder %s177, %s180
    %p189 = scmp.eq.s32.totalorder %s18, 3
    %p190 = por %p188, %p189
    %p191 = scmp.ne.s32.totalorder %s180, %s181
    %p192 = scmp.eq.s32.totalorder %s18, 0
    %p193 = por %p191, %p192
    %p194 = scmp.ne.s32.totalorder %s180, %s181
    %p195 = scmp.eq.s32.totalorder %s19, 3
    %p196 = por %p194, %p195
    %p198 = scmp.ne.s32.totalorder %s181, %s197
    %p199 = scmp.eq.s32.totalorder %s19, 0
    %p200 = por %p198, %p199
    %p201 = scmp.le.s32.totalorder 1, %s13
    %p202 = scmp.lt.s32.totalorder %s13, 5
    %p203 = pnand %p201, %p202
    %p204 = pneg %p203
    // Predicated region
    $region9: #{residual_forward.5} parent=5 // pred_check
      _
    $region10: #{residual_forward.5} parent=5 // pred_check_branch
      %206 = sbr.rel (%p203) target = $region12
    $region11: #{residual_forward.5} parent=5 // pred_region
      %s207 = ssub.s32 %s13, 1
      // Predicated region
      $region13: #{residual_forward.5} parent=11 // pred_check
        %p208 = pneg %p74
      $region14: #{residual_forward.5} parent=11 // pred_check_branch
        %210 = sbr.rel (%p208) target = $region16
      $region15: #{residual_forward.5} parent=11 // pred_region
        _
      $region16: #{residual_forward.5} parent=11 // pred_fallthru
        _
      // Predicated region
      $region17: #{residual_forward.5} parent=11 // pred_check
        %p211 = pneg %p95
      $region18: #{residual_forward.5} parent=11 // pred_check_branch
        %213 = sbr.rel (%p211) target = $region20
      $region19: #{residual_forward.5} parent=11 // pred_region
        _
      $region20: #{residual_forward.5} parent=11 // pred_fallthru
        _
      // Predicated region
      $region21: #{residual_forward.5} parent=11 // pred_check
        %p214 = pneg %p116
      $region22: #{residual_forward.5} parent=11 // pred_check_branch
        %216 = sbr.rel (%p214) target = $region24
      $region23: #{residual_forward.5} parent=11 // pred_region
        _
      $region24: #{residual_forward.5} parent=11 // pred_fallthru
        _
      // Predicated region
      $region25: #{residual_forward.5} parent=11 // pred_check
        %p217 = pneg %p137
      $region26: #{residual_forward.5} parent=11 // pred_check_branch
        %219 = sbr.rel (%p217) target = $region28
      $region27: #{residual_forward.5} parent=11 // pred_region
        _
      $region28: #{residual_forward.5} parent=11 // pred_fallthru
        _
    $region12: #{residual_forward.5} parent=5 // pred_fallthru
      _
    %p220 = scmp.lt.s32.totalorder %s13, 4
    // Predicated region
    $region29: #{residual_forward.5} parent=5 // pred_check
      %p221 = pneg %p220
    $region30: #{residual_forward.5} parent=5 // pred_check_branch
      %223 = sbr.rel (%p221) target = $region32
    $region31: #{residual_forward.5} parent=5 // pred_region
      // Predicated region
      $region33: #{residual_forward.5} parent=31 // pred_check
        %p224 = pneg %p47
      $region34: #{residual_forward.5} parent=31 // pred_check_branch
        %226 = sbr.rel (%p224) target = $region36
      $region35: #{residual_forward.5} parent=31 // pred_region
        %p227 = scmp.lt.s32.totalorder %s20, 1
        %s228 = scalar_select %p227, %s20, 1
        %p229 = scmp.lt.s32.totalorder %s21, 1
        %s230 = scalar_select %p229, %s21, 1
        %s231 = smul.addr %s230, 23
        %s232 = smul.addr %s228, 46
        %s233 = sadd.s32 %s231, %s232
        %s234 = smul.addr %s233, 4
        %s235 = scalar_lea.vmem %s0, %s234
      $region36: #{residual_forward.5} parent=31 // pred_fallthru
        _
    $region32: #{residual_forward.5} parent=5 // pred_fallthru
      _
    %p236 = scmp.le.s32.totalorder 1, %s13
    %p237 = scmp.lt.s32.totalorder %s13, 5
    %p238 = pnand %p236, %p237
    %p239 = pneg %p238
    // Predicated region
    $region37: #{residual_forward.5} parent=5 // pred_check
      _
    $region38: #{residual_forward.5} parent=5 // pred_check_branch
      %241 = sbr.rel (%p238) target = $region40
    $region39: #{residual_forward.5} parent=5 // pred_region
      %s242 = ssub.s32 %s13, 1
      %p243 = scmp.lt.s32.totalorder %s22, 1
      %s244 = scalar_select %p243, %s22, 1
      %p245 = scmp.lt.s32.totalorder %s23, 1
      %s246 = scalar_select %p245, %s23, 1
      %s247 = smul.addr %s246, 23
      %s248 = smul.addr %s244, 46
      %s249 = sadd.s32 %s247, %s248
      %s250 = smul.addr %s249, 4
      %s251 = scalar_lea.vmem %s0, %s250
      %p252 = pneg %p53
      %p253 = pneg %p50
      %p254 = pneg %p74
      %p255 = pneg %p71
      %p256 = pneg %p95
      %p257 = pneg %p92
      %p258 = pneg %p116
      %p259 = pneg %p113
      %p260 = pneg %p137
      %p261 = pneg %p134
      %p262 = pneg %p165
      %p263 = pneg %p162
      %p264 = scmp.lt.s32.totalorder %s22, 1
      %s265 = scalar_select %p264, %s22, 1
      %p266 = scmp.lt.s32.totalorder %s23, 1
      %s267 = scalar_select %p266, %s23, 1
      %s268 = smul.addr %s267, 18
      %s269 = smul.addr %s265, 36
      %s270 = sadd.s32 %s268, %s269
      %s271 = smul.addr %s270, 4
      %s272 = scalar_lea.vmem %s5, %s271
      %p273 = pneg %p193
      %p274 = pneg %p190
      %p275 = scmp.lt.s32.totalorder %s22, 1
      %s276 = scalar_select %p275, %s22, 1
      %p277 = scmp.lt.s32.totalorder %s23, 1
      %s278 = scalar_select %p277, %s23, 1
      %s279 = smul.addr %s276, 2
      %s280 = sadd.s32 %s278, %s279
      %s281 = smul.addr %s280, 2
      %s282 = scalar_lea.vmem %s6, %s281
      %p283 = scmp.lt.s32.totalorder %s22, 1
      %s284 = scalar_select %p283, %s22, 1
      %p285 = scmp.lt.s32.totalorder %s23, 1
      %s286 = scalar_select %p285, %s23, 1
      %s287 = smul.addr %s286, 23
      %s288 = smul.addr %s284, 46
      %s289 = sadd.s32 %s287, %s288
      %s290 = smul.addr %s289, 4
      %s291 = scalar_lea.vmem %s0, %s290
      %p292 = scmp.lt.s32.totalorder %s22, 1
      %s293 = scalar_select %p292, %s22, 1
      %p294 = scmp.lt.s32.totalorder %s23, 1
      %s295 = scalar_select %p294, %s23, 1
      %s296 = smul.addr %s295, 18
      %s297 = smul.addr %s293, 36
      %s298 = sadd.s32 %s296, %s297
      %s299 = smul.addr %s298, 4
      %s300 = scalar_lea.vmem %s5, %s299
      %p301 = scmp.lt.s32.totalorder %s22, 1
      %s302 = scalar_select %p301, %s22, 1
      %p303 = scmp.lt.s32.totalorder %s23, 1
      %s304 = scalar_select %p303, %s23, 1
      %s305 = smul.addr %s302, 2
      %s306 = sadd.s32 %s304, %s305
      %s307 = smul.addr %s306, 2
      %s308 = scalar_lea.vmem %s6, %s307
      %v310 = vld [vmem:[%s291] sm:$0xf]
      %v311 = vld [vmem:[%s291 + $0x4] sm:$0xf]
      %v312 = vld [vmem:[%s291 + $0x8] sm:$0xf]
      %v313 = vld [vmem:[%s291 + $0xc] sm:$0xf]
      %v314 = vld [vmem:[%s291 + $0x10] sm:$0xf]
      %v315 = vld [vmem:[%s291 + $0x14] sm:$0xf]
      %v316 = vld [vmem:[%s291 + $0x18] sm:$0xf]
      %v317 = vld [vmem:[%s291 + $0x1c] sm:$0xf]
      %v318 = vld [vmem:[%s291 + $0x20] sm:$0xf]
      %v319 = vld [vmem:[%s291 + $0x24] sm:$0xf]
      %v320 = vld [vmem:[%s291 + $0x28] sm:$0xf]
      %v321 = vld [vmem:[%s291 + $0x2c] sm:$0xf]
      %v322 = vld [vmem:[%s291 + $0x30] sm:$0xf]
      %v323 = vld [vmem:[%s291 + $0x34] sm:$0xf]
      %v324 = vld [vmem:[%s291 + $0x38] sm:$0xf]
      %v325 = vld [vmem:[%s291 + $0x3c] sm:$0xf]
      %v326 = vld [vmem:[%s291 + $0x40] sm:$0xf]
      %v327 = vld [vmem:[%s291 + $0x44] sm:$0xf]
      %v328 = vld [vmem:[%s291 + $0x48] sm:$0xf]
      %v329 = vld [vmem:[%s291 + $0x4c] sm:$0xf]
      %v330 = vld [vmem:[%s291 + $0x50] sm:$0xf]
      %v331 = vld [vmem:[%s291 + $0x54] sm:$0xf]
      %v332 = vld [vmem:[%s291 + $0x58] sm:$0xf]
      %v333 = vunpack.c.l.bf16 %v310
      %v334 = vunpack.c.l.bf16 %v311
      %v335 = vunpack.c.l.bf16 %v312
      %v336 = vunpack.c.l.bf16 %v313
      %v337 = vunpack.c.l.bf16 %v314
      %v338 = vunpack.c.l.bf16 %v315
      %v339 = vunpack.c.l.bf16 %v316
      %v340 = vunpack.c.l.bf16 %v317
      %v341 = vunpack.c.l.bf16 %v318
      %v342 = vunpack.c.l.bf16 %v319
      %v343 = vunpack.c.l.bf16 %v320
      %v344 = vunpack.c.l.bf16 %v321
      %v345 = vunpack.c.l.bf16 %v322
      %v346 = vunpack.c.l.bf16 %v323
      %v347 = vunpack.c.l.bf16 %v324
      %v348 = vunpack.c.l.bf16 %v325
      %v349 = vunpack.c.l.bf16 %v326
      %v350 = vunpack.c.l.bf16 %v327
      %v351 = vunpack.c.l.bf16 %v328
      %v352 = vunpack.c.l.bf16 %v329
      %v353 = vunpack.c.l.bf16 %v330
      %v354 = vunpack.c.l.bf16 %v331
      %v355 = vunpack.c.l.bf16 %v332
      %v356 = vld [vmem:[%s2] sm:$0x1]
      %v358 = vlaneseq
      %v359 = vshrl.u32 %v358, 7
      %v360 = vsub.s32 0, %v359
      %v361 = vrot.slane %v356, %v360
      %v363 = vmul.f32 %v333, %v361
      %v364 = vmul.f32 %v334, %v361
      %v365 = vmul.f32 %v335, %v361
      %v366 = vmul.f32 %v336, %v361
      %v367 = vmul.f32 %v337, %v361
      %v368 = vmul.f32 %v338, %v361
      %v369 = vmul.f32 %v339, %v361
      %v370 = vmul.f32 %v340, %v361
      %v371 = vmul.f32 %v341, %v361
      %v372 = vmul.f32 %v342, %v361
      %v373 = vmul.f32 %v343, %v361
      %v374 = vmul.f32 %v344, %v361
      %v375 = vmul.f32 %v345, %v361
      %v376 = vmul.f32 %v346, %v361
      %v377 = vmul.f32 %v347, %v361
      %v378 = vmul.f32 %v348, %v361
      %v379 = vmul.f32 %v349, %v361
      %v380 = vmul.f32 %v350, %v361
      %v381 = vmul.f32 %v351, %v361
      %v382 = vmul.f32 %v352, %v361
      %v383 = vmul.f32 %v353, %v361
      %v384 = vmul.f32 %v354, %v361
      %v385 = vmul.f32 %v355, %v361
      %v386 = vld [vmem:[%s3] sm:$0x1]
      %v388 = vlaneseq
      %v389 = vshrl.u32 %v388, 7
      %v390 = vsub.s32 0, %v389
      %v391 = vrot.slane %v386, %v390
      %v393 = vadd.f32 %v363, %v391
      %v394 = vadd.f32 %v364, %v391
      %v395 = vadd.f32 %v365, %v391
      %v396 = vadd.f32 %v366, %v391
      %v397 = vadd.f32 %v367, %v391
      %v398 = vadd.f32 %v368, %v391
      %v399 = vadd.f32 %v369, %v391
      %v400 = vadd.f32 %v370, %v391
      %v401 = vadd.f32 %v371, %v391
      %v402 = vadd.f32 %v372, %v391
      %v403 = vadd.f32 %v373, %v391
      %v404 = vadd.f32 %v374, %v391
      %v405 = vadd.f32 %v375, %v391
      %v406 = vadd.f32 %v376, %v391
      %v407 = vadd.f32 %v377, %v391
      %v408 = vadd.f32 %v378, %v391
      %v409 = vadd.f32 %v379, %v391
      %v410 = vadd.f32 %v380, %v391
      %v411 = vadd.f32 %v381, %v391
      %v412 = vadd.f32 %v382, %v391
      %v413 = vadd.f32 %v383, %v391
      %v414 = vadd.f32 %v384, %v391
      %v415 = vadd.f32 %v385, %v391
      %vm416 = vcmp.gt.f32.partialorder %v393, 0.0
      %vm417 = vcmp.gt.f32.partialorder %v394, 0.0
      %vm418 = vcmp.gt.f32.partialorder %v395, 0.0
      %vm419 = vcmp.gt.f32.partialorder %v396, 0.0
      %vm420 = vcmp.gt.f32.partialorder %v397, 0.0
      %vm421 = vcmp.gt.f32.partialorder %v398, 0.0
      %vm422 = vcmp.gt.f32.partialorder %v399, 0.0
      %vm423 = vcmp.gt.f32.partialorder %v400, 0.0
      %vm424 = vcmp.gt.f32.partialorder %v401, 0.0
      %vm425 = vcmp.gt.f32.partialorder %v402, 0.0
      %vm426 = vcmp.gt.f32.partialorder %v403, 0.0
      %vm427 = vcmp.gt.f32.partialorder %v404, 0.0
      %vm428 = vcmp.gt.f32.partialorder %v405, 0.0
      %vm429 = vcmp.gt.f32.partialorder %v406, 0.0
      %vm430 = vcmp.gt.f32.partialorder %v407, 0.0
      %vm431 = vcmp.gt.f32.partialorder %v408, 0.0
      %vm432 = vcmp.gt.f32.partialorder %v409, 0.0
      %vm433 = vcmp.gt.f32.partialorder %v410, 0.0
      %vm434 = vcmp.gt.f32.partialorder %v411, 0.0
      %vm435 = vcmp.gt.f32.partialorder %v412, 0.0
      %vm436 = vcmp.gt.f32.partialorder %v413, 0.0
      %vm437 = vcmp.gt.f32.partialorder %v414, 0.0
      %vm438 = vcmp.gt.f32.partialorder %v415, 0.0
      %v439 = vmul.f32 %v393, 0.1
      %v440 = vmul.f32 %v394, 0.1
      %v441 = vmul.f32 %v395, 0.1
      %v442 = vmul.f32 %v396, 0.1
      %v443 = vmul.f32 %v397, 0.1
      %v444 = vmul.f32 %v398, 0.1
      %v445 = vmul.f32 %v399, 0.1
      %v446 = vmul.f32 %v400, 0.1
      %v447 = vmul.f32 %v401, 0.1
      %v448 = vmul.f32 %v402, 0.1
      %v449 = vmul.f32 %v403, 0.1
      %v450 = vmul.f32 %v404, 0.1
      %v451 = vmul.f32 %v405, 0.1
      %v452 = vmul.f32 %v406, 0.1
      %v453 = vmul.f32 %v407, 0.1
      %v454 = vmul.f32 %v408, 0.1
      %v455 = vmul.f32 %v409, 0.1
      %v456 = vmul.f32 %v410, 0.1
      %v457 = vmul.f32 %v411, 0.1
      %v458 = vmul.f32 %v412, 0.1
      %v459 = vmul.f32 %v413, 0.1
      %v460 = vmul.f32 %v414, 0.1
      %v461 = vmul.f32 %v415, 0.1
      %v462 = vsel %vm416, %v393, %v439
      %v463 = vsel %vm417, %v394, %v440
      %v464 = vsel %vm418, %v395, %v441
      %v465 = vsel %vm419, %v396, %v442
      %v466 = vsel %vm420, %v397, %v443
      %v467 = vsel %vm421, %v398, %v444
      %v468 = vsel %vm422, %v399, %v445
      %v469 = vsel %vm423, %v400, %v446
      %v470 = vsel %vm424, %v401, %v447
      %v471 = vsel %vm425, %v402, %v448
      %v472 = vsel %vm426, %v403, %v449
      %v473 = vsel %vm427, %v404, %v450
      %v474 = vsel %vm428, %v405, %v451
      %v475 = vsel %vm429, %v406, %v452
      %v476 = vsel %vm430, %v407, %v453
      %v477 = vsel %vm431, %v408, %v454
      %v478 = vsel %vm432, %v409, %v455
      %v479 = vsel %vm433, %v410, %v456
      %v480 = vsel %vm434, %v411, %v457
      %v481 = vsel %vm435, %v412, %v458
      %v482 = vsel %vm436, %v413, %v459
      %v483 = vsel %vm437, %v414, %v460
      %v484 = vsel %vm438, %v415, %v461
      %v485 = vpack.c.bf16 %v463, %v462
      %v486 = vpack.c.bf16 %v465, %v464
      %v487 = vpack.c.bf16 %v467, %v466
      %v488 = vpack.c.bf16 %v469, %v468
      %v489 = vpack.c.bf16 %v471, %v470
      %v490 = vpack.c.bf16 %v473, %v472
      %v491 = vpack.c.bf16 %v475, %v474
      %v492 = vpack.c.bf16 %v477, %v476
      %v493 = vpack.c.bf16 %v479, %v478
      %v494 = vld [vmem:[%s1] sm:$0x3]
      %v495 = vpack.c.bf16 %v480, %v480
      %s496 = scalar_lea.vmem %s1, 2
      %v497 = vld [vmem:[%s496] sm:$0x3]
      %vm498 = vsmask.f32 7424
      %v500 = vshrl.u32 %v485, 16
      %v502 = vshll.u32 %v485, 16
      %v504 = vrot.slane %v502, 1
      %v505 = vor.u32 %v500, %v504
      %v507 = vshll.u32 %v486, 16
      %v509 = vrot.slane %v507, 1
      %v510 = vsel %vm498, %v505, %v509
      %v511 = vshrl.u32 %v486, 16
      %v513 = vor.u32 %v511, %v509
      %v515 = vshll.u32 %v487, 16
      %v517 = vrot.slane %v515, 1
      %v518 = vsel %vm498, %v513, %v517
      %v519 = vshrl.u32 %v487, 16
      %v521 = vor.u32 %v519, %v517
      %v523 = vshll.u32 %v488, 16
      %v525 = vrot.slane %v523, 1
      %v526 = vsel %vm498, %v521, %v525
      %v527 = vshrl.u32 %v488, 16
      %v529 = vor.u32 %v527, %v525
      %v531 = vshll.u32 %v489, 16
      %v533 = vrot.slane %v531, 1
      %v534 = vsel %vm498, %v529, %v533
      %v535 = vshrl.u32 %v489, 16
      %v537 = vor.u32 %v535, %v533
      %v539 = vshll.u32 %v490, 16
      %v541 = vrot.slane %v539, 1
      %v542 = vsel %vm498, %v537, %v541
      %v543 = vshrl.u32 %v490, 16
      %v545 = vor.u32 %v543, %v541
      %v547 = vshll.u32 %v491, 16
      %v549 = vrot.slane %v547, 1
      %v550 = vsel %vm498, %v545, %v549
      %v551 = vshrl.u32 %v491, 16
      %v553 = vor.u32 %v551, %v549
      %v555 = vshll.u32 %v492, 16
      %v557 = vrot.slane %v555, 1
      %v558 = vsel %vm498, %v553, %v557
      %v559 = vshrl.u32 %v492, 16
      %v561 = vor.u32 %v559, %v557
      %v563 = vshll.u32 %v493, 16
      %v565 = vrot.slane %v563, 1
      %v566 = vsel %vm498, %v561, %v565
      %v567 = vshrl.u32 %v493, 16
      %v569 = vor.u32 %v567, %v565
      %v571 = vshll.u32 %v495, 16
      %v573 = vrot.slane %v571, 1
      %v574 = vsel %vm498, %v569, %v573
      %vm575 = vcmask 31744
      %v577 = vsel %vm575, %v510, 0
      %v580 = vsel %vm575, %v518, 0
      %v583 = vsel %vm575, %v526, 0
      %v586 = vsel %vm575, %v534, 0
      %v589 = vsel %vm575, %v542, 0
      %v592 = vsel %vm575, %v550, 0
      %v595 = vsel %vm575, %v558, 0
      %v598 = vsel %vm575, %v566, 0
      %v601 = vsel %vm575, %v574, 0
      %vm603 = vcmask 1041408
      %v605 = vsel %vm603, %v497, 0
      %607 = vmatprep.subr.bf16.mxu0 0
      %608 = vmatpush1.bf16.msra.mxu0 %v605
      %609 = vmatprep.subr.bf16.mxu0 0
      %610 = vmatpush1.bf16.msra.mxu0 0
      %611 = vmatprep.subr.bf16.mxu0 0
      %612 = vmatpush1.bf16.msra.mxu0 0
      %613 = vmatprep.subr.bf16.mxu0 0
      %614 = vmatpush1.bf16.msra.mxu0 0
      %615 = vmatprep.subr.bf16.mxu0 0
      %616 = vmatpush1.bf16.msra.mxu0 0
      %617 = vmatprep.subr.bf16.mxu0 0
      %618 = vmatpush1.bf16.msra.mxu0 0
      %619 = vmatprep.subr.bf16.mxu0 0
      %620 = vmatpush1.bf16.msra.mxu0 0
      %621 = vmatprep.subr.bf16.mxu0 0
      %622 = vmatpush1.bf16.msra.mxu0 0
      %623 = vmatprep.subr.bf16.mxu0 0
      %624 = vmatpush1.bf16.msra.mxu0 0
      %625 = vmatprep.subr.bf16.mxu0 0
      %626 = vmatpush1.bf16.msra.mxu0 0
      %627 = vmatprep.subr.bf16.mxu0 0
      %628 = vmatpush1.bf16.msra.mxu0 0
      %629 = vmatprep.subr.bf16.mxu0 0
      %630 = vmatpush1.bf16.msra.mxu0 0
      %631 = vmatprep.subr.bf16.mxu0 0
      %632 = vmatpush1.bf16.msra.mxu0 0
      %633 = vmatprep.subr.bf16.mxu0 0
      %634 = vmatpush1.bf16.msra.mxu0 0
      %635 = vmatprep.subr.bf16.mxu0 0
      %636 = vmatpush1.bf16.msra.mxu0 0
      %637 = vmatprep.subr.bf16.mxu0 0
      %638 = vmatpush1.bf16.msra.mxu0 0
      %639 = vmatprep.mubr.bf16.mxu0 0
      %640 = vmatmul.mubr.bf16.gmra.mrb[0].mxu0 %v577
      %v641 = vpop.f32.mrb[0].mxu0
      %v642 = vadd.f32 0.0, %v641
      %v643 = vpop.f32.mrb[0].mxu0
      %v644 = vpop.f32.mrb[0].mxu0
      %v645 = vadd.f32 0.0, %v644
      %v646 = vpop.f32.mrb[0].mxu0
      %647 = vmatprep.mubr.bf16.mxu0 0
      %648 = vmatmul.mubr.bf16.gmra.mrb[0].mxu0 %v580
      %v649 = vpop.f32.mrb[0].mxu0
      %v650 = vadd.f32 0.0, %v649
      %v651 = vpop.f32.mrb[0].mxu0
      %v652 = vpop.f32.mrb[0].mxu0
      %v653 = vadd.f32 0.0, %v652
      %v654 = vpop.f32.mrb[0].mxu0
      %655 = vmatprep.mubr.bf16.mxu0 0
      %656 = vmatmul.mubr.bf16.gmra.mrb[0].mxu0 %v583
      %v657 = vpop.f32.mrb[0].mxu0
      %v658 = vadd.f32 0.0, %v657
      %v659 = vpop.f32.mrb[0].mxu0
      %v660 = vpop.f32.mrb[0].mxu0
      %v661 = vadd.f32 0.0, %v660
      %v662 = vpop.f32.mrb[0].mxu0
      %663 = vmatprep.mubr.bf16.mxu0 0
      %664 = vmatmul.mubr.bf16.gmra.mrb[0].mxu0 %v586
      %v665 = vpop.f32.mrb[0].mxu0
      %v666 = vadd.f32 0.0, %v665
      %v667 = vpop.f32.mrb[0].mxu0
      %v668 = vpop.f32.mrb[0].mxu0
      %v669 = vadd.f32 0.0, %v668
      %v670 = vpop.f32.mrb[0].mxu0
      %671 = vmatprep.mubr.bf16.mxu0 0
      %672 = vmatmul.mubr.bf16.gmra.mrb[0].mxu0 %v589
      %v673 = vpop.f32.mrb[0].mxu0
      %v674 = vadd.f32 0.0, %v673
      %v675 = vpop.f32.mrb[0].mxu0
      %v676 = vpop.f32.mrb[0].mxu0
      %v677 = vadd.f32 0.0, %v676
      %v678 = vpop.f32.mrb[0].mxu0
      %679 = vmatprep.mubr.bf16.mxu0 0
      %680 = vmatmul.mubr.bf16.gmra.mrb[0].mxu0 %v592
      %v681 = vpop.f32.mrb[0].mxu0
      %v682 = vadd.f32 0.0, %v681
      %v683 = vpop.f32.mrb[0].mxu0
      %v684 = vpop.f32.mrb[0].mxu0
      %v685 = vadd.f32 0.0, %v684
      %v686 = vpop.f32.mrb[0].mxu0
      %687 = vmatprep.mubr.bf16.mxu0 0
      %688 = vmatmul.mubr.bf16.gmra.mrb[0].mxu0 %v595
      %v689 = vpop.f32.mrb[0].mxu0
      %v690 = vadd.f32 0.0, %v689
      %v691 = vpop.f32.mrb[0].mxu0
      %v692 = vpop.f32.mrb[0].mxu0
      %v693 = vadd.f32 0.0, %v692
      %v694 = vpop.f32.mrb[0].mxu0
      %695 = vmatprep.mubr.bf16.mxu0 0
      %696 = vmatmul.mubr.bf16.gmra.mrb[0].mxu0 %v598
      %v697 = vpop.f32.mrb[0].mxu0
      %v698 = vadd.f32 0.0, %v697
      %v699 = vpop.f32.mrb[0].mxu0
      %v700 = vpop.f32.mrb[0].mxu0
      %v701 = vadd.f32 0.0, %v700
      %v702 = vpop.f32.mrb[0].mxu0
      %703 = vmatprep.mubr.bf16.mxu0 0
      %704 = vmatmul.mubr.bf16.gmra.mrb[0].mxu0 %v601
      %v705 = vpop.f32.mrb[0].mxu0
      %v706 = vadd.f32 0.0, %v705
      %v707 = vpop.f32.mrb[0].mxu0
      %v708 = vpop.f32.mrb[0].mxu0
      %v709 = vadd.f32 0.0, %v708
      %v710 = vpop.f32.mrb[0].mxu0
      %711 = vdwg.mxu0
      %v712 = vsel %vm575, %v485, 0
      %v714 = vsel %vm575, %v486, 0
      %v716 = vsel %vm575, %v487, 0
      %v718 = vsel %vm575, %v488, 0
      %v720 = vsel %vm575, %v489, 0
      %v722 = vsel %vm575, %v490, 0
      %v724 = vsel %vm575, %v491, 0
      %v726 = vsel %vm575, %v492, 0
      %v728 = vsel %vm575, %v493, 0
      %v731 = vsel %vm603, %v494, 0
      %733 = vmatprep.subr.bf16.mxu0 0
      %734 = vmatpush1.bf16.msra.mxu0 %v731
      %735 = vmatprep.subr.bf16.mxu0 0
      %736 = vmatpush1.bf16.msra.mxu0 0
      %737 = vmatprep.subr.bf16.mxu0 0
      %738 = vmatpush1.bf16.msra.mxu0 0
      %739 = vmatprep.subr.bf16.mxu0 0
      %740 = vmatpush1.bf16.msra.mxu0 0
      %741 = vmatprep.subr.bf16.mxu0 0
      %742 = vmatpush1.bf16.msra.mxu0 0
      %743 = vmatprep.subr.bf16.mxu0 0
      %744 = vmatpush1.bf16.msra.mxu0 0
      %745 = vmatprep.subr.bf16.mxu0 0
      %746 = vmatpush1.bf16.msra.mxu0 0
      %747 = vmatprep.subr.bf16.mxu0 0
      %748 = vmatpush1.bf16.msra.mxu0 0
      %749 = vmatprep.subr.bf16.mxu0 0
      %750 = vmatpush1.bf16.msra.mxu0 0
      %751 = vmatprep.subr.bf16.mxu0 0
      %752 = vmatpush1.bf16.msra.mxu0 0
      %753 = vmatprep.subr.bf16.mxu0 0
      %754 = vmatpush1.bf16.msra.mxu0 0
      %755 = vmatprep.subr.bf16.mxu0 0
      %756 = vmatpush1.bf16.msra.mxu0 0
      %757 = vmatprep.subr.bf16.mxu0 0
      %758 = vmatpush1.bf16.msra.mxu0 0
      %759 = vmatprep.subr.bf16.mxu0 0
      %760 = vmatpush1.bf16.msra.mxu0 0
      %761 = vmatprep.subr.bf16.mxu0 0
      %762 = vmatpush1.bf16.msra.mxu0 0
      %763 = vmatprep.subr.bf16.mxu0 0
      %764 = vmatpush1.bf16.msra.mxu0 0
      %765 = vmatprep.mubr.bf16.mxu0 0
      %766 = vmatmul.mubr.bf16.gmra.mrb[0].mxu0 %v712
      %v767 = vpop.f32.mrb[0].mxu0
      %v768 = vadd.f32 %v642, %v767
      %v769 = vpop.f32.mrb[0].mxu0
      %v770 = vpop.f32.mrb[0].mxu0
      %v771 = vadd.f32 %v645, %v770
      %v772 = vpop.f32.mrb[0].mxu0
      %773 = vmatprep.mubr.bf16.mxu0 0
      %774 = vmatmul.mubr.bf16.gmra.mrb[0].mxu0 %v714
      %v775 = vpop.f32.mrb[0].mxu0
      %v776 = vadd.f32 %v650, %v775
      %v777 = vpop.f32.mrb[0].mxu0
      %v778 = vpop.f32.mrb[0].mxu0
      %v779 = vadd.f32 %v653, %v778
      %v780 = vpop.f32.mrb[0].mxu0
      %781 = vmatprep.mubr.bf16.mxu0 0
      %782 = vmatmul.mubr.bf16.gmra.mrb[0].mxu0 %v716
      %v783 = vpop.f32.mrb[0].mxu0
      %v784 = vadd.f32 %v658, %v783
      %v785 = vpop.f32.mrb[0].mxu0
      %v786 = vpop.f32.mrb[0].mxu0
      %v787 = vadd.f32 %v661, %v786
      %v788 = vpop.f32.mrb[0].mxu0
      %789 = vmatprep.mubr.bf16.mxu0 0
      %790 = vmatmul.mubr.bf16.gmra.mrb[0].mxu0 %v718
      %v791 = vpop.f32.mrb[0].mxu0
      %v792 = vadd.f32 %v666, %v791
      %v793 = vpop.f32.mrb[0].mxu0
      %v794 = vpop.f32.mrb[0].mxu0
      %v795 = vadd.f32 %v669, %v794
      %v796 = vpop.f32.mrb[0].mxu0
      %797 = vmatprep.mubr.bf16.mxu0 0
      %798 = vmatmul.mubr.bf16.gmra.mrb[0].mxu0 %v720
      %v799 = vpop.f32.mrb[0].mxu0
      %v800 = vadd.f32 %v674, %v799
      %v801 = vpop.f32.mrb[0].mxu0
      %v802 = vpop.f32.mrb[0].mxu0
      %v803 = vadd.f32 %v677, %v802
      %v804 = vpop.f32.mrb[0].mxu0
      %805 = vmatprep.mubr.bf16.mxu0 0
      %806 = vmatmul.mubr.bf16.gmra.mrb[0].mxu0 %v722
      %v807 = vpop.f32.mrb[0].mxu0
      %v808 = vadd.f32 %v682, %v807
      %v809 = vpop.f32.mrb[0].mxu0
      %v810 = vpop.f32.mrb[0].mxu0
      %v811 = vadd.f32 %v685, %v810
      %v812 = vpop.f32.mrb[0].mxu0
      %813 = vmatprep.mubr.bf16.mxu0 0
      %814 = vmatmul.mubr.bf16.gmra.mrb[0].mxu0 %v724
      %v815 = vpop.f32.mrb[0].mxu0
      %v816 = vadd.f32 %v690, %v815
      %v817 = vpop.f32.mrb[0].mxu0
      %v818 = vpop.f32.mrb[0].mxu0
      %v819 = vadd.f32 %v693, %v818
      %v820 = vpop.f32.mrb[0].mxu0
      %821 = vmatprep.mubr.bf16.mxu0 0
      %822 = vmatmul.mubr.bf16.gmra.mrb[0].mxu0 %v726
      %v823 = vpop.f32.mrb[0].mxu0
      %v824 = vadd.f32 %v698, %v823
      %v825 = vpop.f32.mrb[0].mxu0
      %v826 = vpop.f32.mrb[0].mxu0
      %v827 = vadd.f32 %v701, %v826
      %v828 = vpop.f32.mrb[0].mxu0
      %829 = vmatprep.mubr.bf16.mxu0 0
      %830 = vmatmul.mubr.bf16.gmra.mrb[0].mxu0 %v728
      %v831 = vpop.f32.mrb[0].mxu0
      %v832 = vadd.f32 %v706, %v831
      %v833 = vpop.f32.mrb[0].mxu0
      %v834 = vpop.f32.mrb[0].mxu0
      %v835 = vadd.f32 %v709, %v834
      %v836 = vpop.f32.mrb[0].mxu0
      %837 = vdwg.mxu0
      %s838 = scalar_lea.vmem %s1, 4
      %v839 = vld [vmem:[%s838] sm:$0x3]
      %vm850 = vcmask 1046528
      %v851 = vrot.slane %v485, 1
      %v852 = vrot.slane %v486, 1
      %v853 = vsel %vm850, %v851, %v852
      %v854 = vrot.slane %v487, 1
      %v855 = vsel %vm850, %v852, %v854
      %v856 = vrot.slane %v488, 1
      %v857 = vsel %vm850, %v854, %v856
      %v858 = vrot.slane %v489, 1
      %v859 = vsel %vm850, %v856, %v858
      %v860 = vrot.slane %v490, 1
      %v861 = vsel %vm850, %v858, %v860
      %v862 = vrot.slane %v491, 1
      %v863 = vsel %vm850, %v860, %v862
      %v864 = vrot.slane %v492, 1
      %v865 = vsel %vm850, %v862, %v864
      %v866 = vrot.slane %v493, 1
      %v867 = vsel %vm850, %v864, %v866
      %v868 = vrot.slane %v495, 1
      %v869 = vsel %vm850, %v866, %v868
      %v871 = vsel %vm575, %v853, 0
      %v874 = vsel %vm575, %v855, 0
      %v877 = vsel %vm575, %v857, 0
      %v880 = vsel %vm575, %v859, 0
      %v883 = vsel %vm575, %v861, 0
      %v886 = vsel %vm575, %v863, 0
      %v889 = vsel %vm575, %v865, 0
      %v892 = vsel %vm575, %v867, 0
      %v895 = vsel %vm575, %v869, 0
      %v898 = vsel %vm603, %v839, 0
      %900 = vmatprep.subr.bf16.mxu0 0
      %901 = vmatpush1.bf16.msra.mxu0 %v898
      %902 = vmatprep.subr.bf16.mxu0 0
      %903 = vmatpush1.bf16.msra.mxu0 0
      %904 = vmatprep.subr.bf16.mxu0 0
      %905 = vmatpush1.bf16.msra.mxu0 0
      %906 = vmatprep.subr.bf16.mxu0 0
      %907 = vmatpush1.bf16.msra.mxu0 0
      %908 = vmatprep.subr.bf16.mxu0 0
      %909 = vmatpush1.bf16.msra.mxu0 0
      %910 = vmatprep.subr.bf16.mxu0 0
      %911 = vmatpush1.bf16.msra.mxu0 0
      %912 = vmatprep.subr.bf16.mxu0 0
      %913 = vmatpush1.bf16.msra.mxu0 0
      %914 = vmatprep.subr.bf16.mxu0 0
      %915 = vmatpush1.bf16.msra.mxu0 0
      %916 = vmatprep.subr.bf16.mxu0 0
      %917 = vmatpush1.bf16.msra.mxu0 0
      %918 = vmatprep.subr.bf16.mxu0 0
      %919 = vmatpush1.bf16.msra.mxu0 0
      %920 = vmatprep.subr.bf16.mxu0 0
      %921 = vmatpush1.bf16.msra.mxu0 0
      %922 = vmatprep.subr.bf16.mxu0 0
      %923 = vmatpush1.bf16.msra.mxu0 0
      %924 = vmatprep.subr.bf16.mxu0 0
      %925 = vmatpush1.bf16.msra.mxu0 0
      %926 = vmatprep.subr.bf16.mxu0 0
      %927 = vmatpush1.bf16.msra.mxu0 0
      %928 = vmatprep.subr.bf16.mxu0 0
      %929 = vmatpush1.bf16.msra.mxu0 0
      %930 = vmatprep.subr.bf16.mxu0 0
      %931 = vmatpush1.bf16.msra.mxu0 0
      %932 = vmatprep.mubr.bf16.mxu0 0
      %933 = vmatmul.mubr.bf16.gmra.mrb[0].mxu0 %v871
      %v934 = vpop.f32.mrb[0].mxu0
      %v935 = vadd.f32 0.0, %v934
      %v936 = vpop.f32.mrb[0].mxu0
      %v937 = vpop.f32.mrb[0].mxu0
      %v938 = vadd.f32 0.0, %v937
      %v939 = vpop.f32.mrb[0].mxu0
      %940 = vmatprep.mubr.bf16.mxu0 0
      %941 = vmatmul.mubr.bf16.gmra.mrb[0].mxu0 %v874
      %v942 = vpop.f32.mrb[0].mxu0
      %v943 = vadd.f32 0.0, %v942
      %v944 = vpop.f32.mrb[0].mxu0
      %v945 = vpop.f32.mrb[0].mxu0
      %v946 = vadd.f32 0.0, %v945
      %v947 = vpop.f32.mrb[0].mxu0
      %948 = vmatprep.mubr.bf16.mxu0 0
      %949 = vmatmul.mubr.bf16.gmra.mrb[0].mxu0 %v877
      %v950 = vpop.f32.mrb[0].mxu0
      %v951 = vadd.f32 0.0, %v950
      %v952 = vpop.f32.mrb[0].mxu0
      %v953 = vpop.f32.mrb[0].mxu0
      %v954 = vadd.f32 0.0, %v953
      %v955 = vpop.f32.mrb[0].mxu0
      %956 = vmatprep.mubr.bf16.mxu0 0
      %957 = vmatmul.mubr.bf16.gmra.mrb[0].mxu0 %v880
      %v958 = vpop.f32.mrb[0].mxu0
      %v959 = vadd.f32 0.0, %v958
      %v960 = vpop.f32.mrb[0].mxu0
      %v961 = vpop.f32.mrb[0].mxu0
      %v962 = vadd.f32 0.0, %v961
      %v963 = vpop.f32.mrb[0].mxu0
      %964 = vmatprep.mubr.bf16.mxu0 0
      %965 = vmatmul.mubr.bf16.gmra.mrb[0].mxu0 %v883
      %v966 = vpop.f32.mrb[0].mxu0
      %v967 = vadd.f32 0.0, %v966
      %v968 = vpop.f32.mrb[0].mxu0
      %v969 = vpop.f32.mrb[0].mxu0
      %v970 = vadd.f32 0.0, %v969
      %v971 = vpop.f32.mrb[0].mxu0
      %972 = vmatprep.mubr.bf16.mxu0 0
      %973 = vmatmul.mubr.bf16.gmra.mrb[0].mxu0 %v886
      %v974 = vpop.f32.mrb[0].mxu0
      %v975 = vadd.f32 0.0, %v974
      %v976 = vpop.f32.mrb[0].mxu0
      %v977 = vpop.f32.mrb[0].mxu0
      %v978 = vadd.f32 0.0, %v977
      %v979 = vpop.f32.mrb[0].mxu0
      %980 = vmatprep.mubr.bf16.mxu0 0
      %981 = vmatmul.mubr.bf16.gmra.mrb[0].mxu0 %v889
      %v982 = vpop.f32.mrb[0].mxu0
      %v983 = vadd.f32 0.0, %v982
      %v984 = vpop.f32.mrb[0].mxu0
      %v985 = vpop.f32.mrb[0].mxu0
      %v986 = vadd.f32 0.0, %v985
      %v987 = vpop.f32.mrb[0].mxu0
      %988 = vmatprep.mubr.bf16.mxu0 0
      %989 = vmatmul.mubr.bf16.gmra.mrb[0].mxu0 %v892
      %v990 = vpop.f32.mrb[0].mxu0
      %v991 = vadd.f32 0.0, %v990
      %v992 = vpop.f32.mrb[0].mxu0
      %v993 = vpop.f32.mrb[0].mxu0
      %v994 = vadd.f32 0.0, %v993
      %v995 = vpop.f32.mrb[0].mxu0
      %996 = vmatprep.mubr.bf16.mxu0 0
      %997 = vmatmul.mubr.bf16.gmra.mrb[0].mxu0 %v895
      %v998 = vpop.f32.mrb[0].mxu0
      %v999 = vadd.f32 0.0, %v998
      %v1000 = vpop.f32.mrb[0].mxu0
      %v1001 = vpop.f32.mrb[0].mxu0
      %v1002 = vadd.f32 0.0, %v1001
      %v1003 = vpop.f32.mrb[0].mxu0
      %1004 = vdwg.mxu0
      %v1005 = vadd.f32 %v768, %v935
      %v1006 = vadd.f32 %v771, %v938
      %v1007 = vadd.f32 %v776, %v943
      %v1008 = vadd.f32 %v779, %v946
      %v1009 = vadd.f32 %v784, %v951
      %v1010 = vadd.f32 %v787, %v954
      %v1011 = vadd.f32 %v792, %v959
      %v1012 = vadd.f32 %v795, %v962
      %v1013 = vadd.f32 %v800, %v967
      %v1014 = vadd.f32 %v803, %v970
      %v1015 = vadd.f32 %v808, %v975
      %v1016 = vadd.f32 %v811, %v978
      %v1017 = vadd.f32 %v816, %v983
      %v1018 = vadd.f32 %v819, %v986
      %v1019 = vadd.f32 %v824, %v991
      %v1020 = vadd.f32 %v827, %v994
      %v1021 = vadd.f32 %v832, %v999
      %v1022 = vadd.f32 %v835, %v1002
      %v1023 = vpack.c.bf16 %v481, %v480
      %v1024 = vpack.c.bf16 %v482, %v482
      %s1025 = scalar_lea.vmem %s1, 6
      %v1026 = vld [vmem:[%s1025] sm:$0x3]
      %v1029 = vrot.slane %v1023, 1
      %v1030 = vsel %vm850, %v866, %v1029
      %v1031 = vrot.slane %v1024, 1
      %v1032 = vsel %vm850, %v1029, %v1031
      %v1034 = vsel %vm575, %v1030, 0
      %v1037 = vsel %vm575, %v1032, 0
      %v1040 = vsel %vm603, %v1026, 0
      %1042 = vmatprep.subr.bf16.mxu0 0
      %1043 = vmatpush1.bf16.msra.mxu0 %v1040
      %1044 = vmatprep.subr.bf16.mxu0 0
      %1045 = vmatpush1.bf16.msra.mxu0 0
      %1046 = vmatprep.subr.bf16.mxu0 0
      %1047 = vmatpush1.bf16.msra.mxu0 0
      %1048 = vmatprep.subr.bf16.mxu0 0
      %1049 = vmatpush1.bf16.msra.mxu0 0
      %1050 = vmatprep.subr.bf16.mxu0 0
      %1051 = vmatpush1.bf16.msra.mxu0 0
      %1052 = vmatprep.subr.bf16.mxu0 0
      %1053 = vmatpush1.bf16.msra.mxu0 0
      %1054 = vmatprep.subr.bf16.mxu0 0
      %1055 = vmatpush1.bf16.msra.mxu0 0
      %1056 = vmatprep.subr.bf16.mxu0 0
      %1057 = vmatpush1.bf16.msra.mxu0 0
      %1058 = vmatprep.subr.bf16.mxu0 0
      %1059 = vmatpush1.bf16.msra.mxu0 0
      %1060 = vmatprep.subr.bf16.mxu0 0
      %1061 = vmatpush1.bf16.msra.mxu0 0
      %1062 = vmatprep.subr.bf16.mxu0 0
      %1063 = vmatpush1.bf16.msra.mxu0 0
      %1064 = vmatprep.subr.bf16.mxu0 0
      %1065 = vmatpush1.bf16.msra.mxu0 0
      %1066 = vmatprep.subr.bf16.mxu0 0
      %1067 = vmatpush1.bf16.msra.mxu0 0
      %1068 = vmatprep.subr.bf16.mxu0 0
      %1069 = vmatpush1.bf16.msra.mxu0 0
      %1070 = vmatprep.subr.bf16.mxu0 0
      %1071 = vmatpush1.bf16.msra.mxu0 0
      %1072 = vmatprep.subr.bf16.mxu0 0
      %1073 = vmatpush1.bf16.msra.mxu0 0
      %1074 = vmatprep.mubr.bf16.mxu0 0
      %1075 = vmatmul.mubr.bf16.gmra.mrb[0].mxu0 %v874
      %v1076 = vpop.f32.mrb[0].mxu0
      %v1077 = vadd.f32 0.0, %v1076
      %v1078 = vpop.f32.mrb[0].mxu0
      %v1079 = vpop.f32.mrb[0].mxu0
      %v1080 = vadd.f32 0.0, %v1079
      %v1081 = vpop.f32.mrb[0].mxu0
      %1082 = vmatprep.mubr.bf16.mxu0 0
      %1083 = vmatmul.mubr.bf16.gmra.mrb[0].mxu0 %v877
      %v1084 = vpop.f32.mrb[0].mxu0
      %v1085 = vadd.f32 0.0, %v1084
      %v1086 = vpop.f32.mrb[0].mxu0
      %v1087 = vpop.f32.mrb[0].mxu0
      %v1088 = vadd.f32 0.0, %v1087
      %v1089 = vpop.f32.mrb[0].mxu0
      %1090 = vmatprep.mubr.bf16.mxu0 0
      %1091 = vmatmul.mubr.bf16.gmra.mrb[0].mxu0 %v880
      %v1092 = vpop.f32.mrb[0].mxu0
      %v1093 = vadd.f32 0.0, %v1092
      %v1094 = vpop.f32.mrb[0].mxu0
      %v1095 = vpop.f32.mrb[0].mxu0
      %v1096 = vadd.f32 0.0, %v1095
      %v1097 = vpop.f32.mrb[0].mxu0
      %1098 = vmatprep.mubr.bf16.mxu0 0
      %1099 = vmatmul.mubr.bf16.gmra.mrb[0].mxu0 %v883
      %v1100 = vpop.f32.mrb[0].mxu0
      %v1101 = vadd.f32 0.0, %v1100
      %v1102 = vpop.f32.mrb[0].mxu0
      %v1103 = vpop.f32.mrb[0].mxu0
      %v1104 = vadd.f32 0.0, %v1103
      %v1105 = vpop.f32.mrb[0].mxu0
      %1106 = vmatprep.mubr.bf16.mxu0 0
      %1107 = vmatmul.mubr.bf16.gmra.mrb[0].mxu0 %v886
      %v1108 = vpop.f32.mrb[0].mxu0
      %v1109 = vadd.f32 0.0, %v1108
      %v1110 = vpop.f32.mrb[0].mxu0
      %v1111 = vpop.f32.mrb[0].mxu0
      %v1112 = vadd.f32 0.0, %v1111
      %v1113 = vpop.f32.mrb[0].mxu0
      %1114 = vmatprep.mubr.bf16.mxu0 0
      %1115 = vmatmul.mubr.bf16.gmra.mrb[0].mxu0 %v889
      %v1116 = vpop.f32.mrb[0].mxu0
      %v1117 = vadd.f32 0.0, %v1116
      %v1118 = vpop.f32.mrb[0].mxu0
      %v1119 = vpop.f32.mrb[0].mxu0
      %v1120 = vadd.f32 0.0, %v1119
      %v1121 = vpop.f32.mrb[0].mxu0
      %1122 = vmatprep.mubr.bf16.mxu0 0
      %1123 = vmatmul.mubr.bf16.gmra.mrb[0].mxu0 %v892
      %v1124 = vpop.f32.mrb[0].mxu0
      %v1125 = vadd.f32 0.0, %v1124
      %v1126 = vpop.f32.mrb[0].mxu0
      %v1127 = vpop.f32.mrb[0].mxu0
      %v1128 = vadd.f32 0.0, %v1127
      %v1129 = vpop.f32.mrb[0].mxu0
      %1130 = vmatprep.mubr.bf16.mxu0 0
      %1131 = vmatmul.mubr.bf16.gmra.mrb[0].mxu0 %v1034
      %v1132 = vpop.f32.mrb[0].mxu0
      %v1133 = vadd.f32 0.0, %v1132
      %v1134 = vpop.f32.mrb[0].mxu0
      %v1135 = vpop.f32.mrb[0].mxu0
      %v1136 = vadd.f32 0.0, %v1135
      %v1137 = vpop.f32.mrb[0].mxu0
      %1138 = vmatprep.mubr.bf16.mxu0 0
      %1139 = vmatmul.mubr.bf16.gmra.mrb[0].mxu0 %v1037
      %v1140 = vpop.f32.mrb[0].mxu0
      %v1141 = vadd.f32 0.0, %v1140
      %v1142 = vpop.f32.mrb[0].mxu0
      %v1143 = vpop.f32.mrb[0].mxu0
      %v1144 = vadd.f32 0.0, %v1143
      %v1145 = vpop.f32.mrb[0].mxu0
      %1146 = vdwg.mxu0
      %v1147 = vadd.f32 %v1005, %v1077
      %v1148 = vadd.f32 %v1006, %v1080
      %v1149 = vadd.f32 %v1007, %v1085
      %v1150 = vadd.f32 %v1008, %v1088
      %v1151 = vadd.f32 %v1009, %v1093
      %v1152 = vadd.f32 %v1010, %v1096
      %v1153 = vadd.f32 %v1011, %v1101
      %v1154 = vadd.f32 %v1012, %v1104
      %v1155 = vadd.f32 %v1013, %v1109
      %v1156 = vadd.f32 %v1014, %v1112
      %v1157 = vadd.f32 %v1015, %v1117
      %v1158 = vadd.f32 %v1016, %v1120
      %v1159 = vadd.f32 %v1017, %v1125
      %v1160 = vadd.f32 %v1018, %v1128
      %v1161 = vadd.f32 %v1019, %v1133
      %v1162 = vadd.f32 %v1020, %v1136
      %v1163 = vadd.f32 %v1021, %v1141
      %v1164 = vadd.f32 %v1022, %v1144
      %s1165 = scalar_lea.vmem %s1, 8
      %v1166 = vld [vmem:[%s1165] sm:$0x3]
      %vm1167 = vsmask.f32 6400
      %v1168 = vrot.slane %v511, 1
      %v1169 = vrot.slane %v507, 2
      %v1170 = vor.u32 %v1168, %v1169
      %v1171 = vrot.slane %v519, 1
      %v1172 = vrot.slane %v515, 2
      %v1173 = vor.u32 %v1171, %v1172
      %v1174 = vsel %vm1167, %v1170, %v1173
      %v1175 = vrot.slane %v527, 1
      %v1176 = vrot.slane %v523, 2
      %v1177 = vor.u32 %v1175, %v1176
      %v1178 = vsel %vm1167, %v1173, %v1177
      %v1179 = vrot.slane %v535, 1
      %v1180 = vrot.slane %v531, 2
      %v1181 = vor.u32 %v1179, %v1180
      %v1182 = vsel %vm1167, %v1177, %v1181
      %v1183 = vrot.slane %v543, 1
      %v1184 = vrot.slane %v539, 2
      %v1185 = vor.u32 %v1183, %v1184
      %v1186 = vsel %vm1167, %v1181, %v1185
      %v1187 = vrot.slane %v551, 1
      %v1188 = vrot.slane %v547, 2
      %v1189 = vor.u32 %v1187, %v1188
      %v1190 = vsel %vm1167, %v1185, %v1189
      %v1191 = vrot.slane %v559, 1
      %v1192 = vrot.slane %v555, 2
      %v1193 = vor.u32 %v1191, %v1192
      %v1194 = vsel %vm1167, %v1189, %v1193
      %v1195 = vrot.slane %v567, 1
      %v1196 = vrot.slane %v563, 2
      %v1197 = vor.u32 %v1195, %v1196
      %v1198 = vsel %vm1167, %v1193, %v1197
      %v1200 = vshrl.u32 %v1023, 16
      %v1202 = vrot.slane %v1200, 1
      %v1203 = vshll.u32 %v1023, 16
      %v1205 = vrot.slane %v1203, 2
      %v1206 = vor.u32 %v1202, %v1205
      %v1207 = vsel %vm1167, %v1197, %v1206
      %v1209 = vshrl.u32 %v1024, 16
      %v1211 = vrot.slane %v1209, 1
      %v1212 = vshll.u32 %v1024, 16
      %v1214 = vrot.slane %v1212, 2
      %v1215 = vor.u32 %v1211, %v1214
      %v1216 = vsel %vm1167, %v1206, %v1215
      %v1218 = vsel %vm575, %v1174, 0
      %v1221 = vsel %vm575, %v1178, 0
      %v1224 = vsel %vm575, %v1182, 0
      %v1227 = vsel %vm575, %v1186, 0
      %v1230 = vsel %vm575, %v1190, 0
      %v1233 = vsel %vm575, %v1194, 0
      %v1236 = vsel %vm575, %v1198, 0
      %v1239 = vsel %vm575, %v1207, 0
      %v1242 = vsel %vm575, %v1216, 0
      %v1245 = vsel %vm603, %v1166, 0
      %1247 = vmatprep.subr.bf16.mxu0 0
      %1248 = vmatpush1.bf16.msra.mxu0 %v1245
      %1249 = vmatprep.subr.bf16.mxu0 0
      %1250 = vmatpush1.bf16.msra.mxu0 0
      %1251 = vmatprep.subr.bf16.mxu0 0
      %1252 = vmatpush1.bf16.msra.mxu0 0
      %1253 = vmatprep.subr.bf16.mxu0 0
      %1254 = vmatpush1.bf16.msra.mxu0 0
      %1255 = vmatprep.subr.bf16.mxu0 0
      %1256 = vmatpush1.bf16.msra.mxu0 0
      %1257 = vmatprep.subr.bf16.mxu0 0
      %1258 = vmatpush1.bf16.msra.mxu0 0
      %1259 = vmatprep.subr.bf16.mxu0 0
      %1260 = vmatpush1.bf16.msra.mxu0 0
      %1261 = vmatprep.subr.bf16.mxu0 0
      %1262 = vmatpush1.bf16.msra.mxu0 0
      %1263 = vmatprep.subr.bf16.mxu0 0
      %1264 = vmatpush1.bf16.msra.mxu0 0
      %1265 = vmatprep.subr.bf16.mxu0 0
      %1266 = vmatpush1.bf16.msra.mxu0 0
      %1267 = vmatprep.subr.bf16.mxu0 0
      %1268 = vmatpush1.bf16.msra.mxu0 0
      %1269 = vmatprep.subr.bf16.mxu0 0
      %1270 = vmatpush1.bf16.msra.mxu0 0
      %1271 = vmatprep.subr.bf16.mxu0 0
      %1272 = vmatpush1.bf16.msra.mxu0 0
      %1273 = vmatprep.subr.bf16.mxu0 0
      %1274 = vmatpush1.bf16.msra.mxu0 0
      %1275 = vmatprep.subr.bf16.mxu0 0
      %1276 = vmatpush1.bf16.msra.mxu0 0
      %1277 = vmatprep.subr.bf16.mxu0 0
      %1278 = vmatpush1.bf16.msra.mxu0 0
      %1279 = vmatprep.mubr.bf16.mxu0 0
      %1280 = vmatmul.mubr.bf16.gmra.mrb[0].mxu0 %v1218
      %v1281 = vpop.f32.mrb[0].mxu0
      %v1282 = vadd.f32 0.0, %v1281
      %v1283 = vpop.f32.mrb[0].mxu0
      %v1284 = vpop.f32.mrb[0].mxu0
      %v1285 = vadd.f32 0.0, %v1284
      %v1286 = vpop.f32.mrb[0].mxu0
      %1287 = vmatprep.mubr.bf16.mxu0 0
      %1288 = vmatmul.mubr.bf16.gmra.mrb[0].mxu0 %v1221
      %v1289 = vpop.f32.mrb[0].mxu0
      %v1290 = vadd.f32 0.0, %v1289
      %v1291 = vpop.f32.mrb[0].mxu0
      %v1292 = vpop.f32.mrb[0].mxu0
      %v1293 = vadd.f32 0.0, %v1292
      %v1294 = vpop.f32.mrb[0].mxu0
      %1295 = vmatprep.mubr.bf16.mxu0 0
      %1296 = vmatmul.mubr.bf16.gmra.mrb[0].mxu0 %v1224
      %v1297 = vpop.f32.mrb[0].mxu0
      %v1298 = vadd.f32 0.0, %v1297
      %v1299 = vpop.f32.mrb[0].mxu0
      %v1300 = vpop.f32.mrb[0].mxu0
      %v1301 = vadd.f32 0.0, %v1300
      %v1302 = vpop.f32.mrb[0].mxu0
      %1303 = vmatprep.mubr.bf16.mxu0 0
      %1304 = vmatmul.mubr.bf16.gmra.mrb[0].mxu0 %v1227
      %v1305 = vpop.f32.mrb[0].mxu0
      %v1306 = vadd.f32 0.0, %v1305
      %v1307 = vpop.f32.mrb[0].mxu0
      %v1308 = vpop.f32.mrb[0].mxu0
      %v1309 = vadd.f32 0.0, %v1308
      %v1310 = vpop.f32.mrb[0].mxu0
      %1311 = vmatprep.mubr.bf16.mxu0 0
      %1312 = vmatmul.mubr.bf16.gmra.mrb[0].mxu0 %v1230
      %v1313 = vpop.f32.mrb[0].mxu0
      %v1314 = vadd.f32 0.0, %v1313
      %v1315 = vpop.f32.mrb[0].mxu0
      %v1316 = vpop.f32.mrb[0].mxu0
      %v1317 = vadd.f32 0.0, %v1316
      %v1318 = vpop.f32.mrb[0].mxu0
      %1319 = vmatprep.mubr.bf16.mxu0 0
      %1320 = vmatmul.mubr.bf16.gmra.mrb[0].mxu0 %v1233
      %v1321 = vpop.f32.mrb[0].mxu0
      %v1322 = vadd.f32 0.0, %v1321
      %v1323 = vpop.f32.mrb[0].mxu0
      %v1324 = vpop.f32.mrb[0].mxu0
      %v1325 = vadd.f32 0.0, %v1324
      %v1326 = vpop.f32.mrb[0].mxu0
      %1327 = vmatprep.mubr.bf16.mxu0 0
      %1328 = vmatmul.mubr.bf16.gmra.mrb[0].mxu0 %v1236
      %v1329 = vpop.f32.mrb[0].mxu0
      %v1330 = vadd.f32 0.0, %v1329
      %v1331 = vpop.f32.mrb[0].mxu0
      %v1332 = vpop.f32.mrb[0].mxu0
      %v1333 = vadd.f32 0.0, %v1332
      %v1334 = vpop.f32.mrb[0].mxu0
      %1335 = vmatprep.mubr.bf16.mxu0 0
      %1336 = vmatmul.mubr.bf16.gmra.mrb[0].mxu0 %v1239
      %v1337 = vpop.f32.mrb[0].mxu0
      %v1338 = vadd.f32 0.0, %v1337
      %v1339 = vpop.f32.mrb[0].mxu0
      %v1340 = vpop.f32.mrb[0].mxu0
      %v1341 = vadd.f32 0.0, %v1340
      %v1342 = vpop.f32.mrb[0].mxu0
      %1343 = vmatprep.mubr.bf16.mxu0 0
      %1344 = vmatmul.mubr.bf16.gmra.mrb[0].mxu0 %v1242
      %v1345 = vpop.f32.mrb[0].mxu0
      %v1346 = vadd.f32 0.0, %v1345
      %v1347 = vpop.f32.mrb[0].mxu0
      %v1348 = vpop.f32.mrb[0].mxu0
      %v1349 = vadd.f32 0.0, %v1348
      %v1350 = vpop.f32.mrb[0].mxu0
      %1351 = vdwg.mxu0
      %v1352 = vadd.f32 %v1147, %v1282
      %v1353 = vadd.f32 %v1148, %v1285
      %v1354 = vadd.f32 %v1149, %v1290
      %v1355 = vadd.f32 %v1150, %v1293
      %v1356 = vadd.f32 %v1151, %v1298
      %v1357 = vadd.f32 %v1152, %v1301
      %v1358 = vadd.f32 %v1153, %v1306
      %v1359 = vadd.f32 %v1154, %v1309
      %v1360 = vadd.f32 %v1155, %v1314
      %v1361 = vadd.f32 %v1156, %v1317
      %v1362 = vadd.f32 %v1157, %v1322
      %v1363 = vadd.f32 %v1158, %v1325
      %v1364 = vadd.f32 %v1159, %v1330
      %v1365 = vadd.f32 %v1160, %v1333
      %v1366 = vadd.f32 %v1161, %v1338
      %v1367 = vadd.f32 %v1162, %v1341
      %v1368 = vadd.f32 %v1163, %v1346
      %v1369 = vadd.f32 %v1164, %v1349
      %s1370 = scalar_lea.vmem %s1, 10
      %v1371 = vld [vmem:[%s1370] sm:$0x3]
      %vm1372 = vcmask 1045504
      %v1373 = vrot.slane %v486, 2
      %v1374 = vrot.slane %v487, 2
      %v1375 = vsel %vm1372, %v1373, %v1374
      %v1376 = vrot.slane %v488, 2
      %v1377 = vsel %vm1372, %v1374, %v1376
      %v1378 = vrot.slane %v489, 2
      %v1379 = vsel %vm1372, %v1376, %v1378
      %v1380 = vrot.slane %v490, 2
      %v1381 = vsel %vm1372, %v1378, %v1380
      %v1382 = vrot.slane %v491, 2
      %v1383 = vsel %vm1372, %v1380, %v1382
      %v1384 = vrot.slane %v492, 2
      %v1385 = vsel %vm1372, %v1382, %v1384
      %v1386 = vrot.slane %v493, 2
      %v1387 = vsel %vm1372, %v1384, %v1386
      %v1388 = vrot.slane %v1023, 2
      %v1389 = vsel %vm1372, %v1386, %v1388
      %v1390 = vrot.slane %v1024, 2
      %v1391 = vsel %vm1372, %v1388, %v1390
      %v1393 = vsel %vm575, %v1375, 0
      %v1396 = vsel %vm575, %v1377, 0
      %v1399 = vsel %vm575, %v1379, 0
      %v1402 = vsel %vm575, %v1381, 0
      %v1405 = vsel %vm575, %v1383, 0
      %v1408 = vsel %vm575, %v1385, 0
      %v1411 = vsel %vm575, %v1387, 0
      %v1414 = vsel %vm575, %v1389, 0
      %v1417 = vsel %vm575, %v1391, 0
      %v1420 = vsel %vm603, %v1371, 0
      %1422 = vmatprep.subr.bf16.mxu0 0
      %1423 = vmatpush1.bf16.msra.mxu0 %v1420
      %1424 = vmatprep.subr.bf16.mxu0 0
      %1425 = vmatpush1.bf16.msra.mxu0 0
      %1426 = vmatprep.subr.bf16.mxu0 0
      %1427 = vmatpush1.bf16.msra.mxu0 0
      %1428 = vmatprep.subr.bf16.mxu0 0
      %1429 = vmatpush1.bf16.msra.mxu0 0
      %1430 = vmatprep.subr.bf16.mxu0 0
      %1431 = vmatpush1.bf16.msra.mxu0 0
      %1432 = vmatprep.subr.bf16.mxu0 0
      %1433 = vmatpush1.bf16.msra.mxu0 0
      %1434 = vmatprep.subr.bf16.mxu0 0
      %1435 = vmatpush1.bf16.msra.mxu0 0
      %1436 = vmatprep.subr.bf16.mxu0 0
      %1437 = vmatpush1.bf16.msra.mxu0 0
      %1438 = vmatprep.subr.bf16.mxu0 0
      %1439 = vmatpush1.bf16.msra.mxu0 0
      %1440 = vmatprep.subr.bf16.mxu0 0
      %1441 = vmatpush1.bf16.msra.mxu0 0
      %1442 = vmatprep.subr.bf16.mxu0 0
      %1443 = vmatpush1.bf16.msra.mxu0 0
      %1444 = vmatprep.subr.bf16.mxu0 0
      %1445 = vmatpush1.bf16.msra.mxu0 0
      %1446 = vmatprep.subr.bf16.mxu0 0
      %1447 = vmatpush1.bf16.msra.mxu0 0
      %1448 = vmatprep.subr.bf16.mxu0 0
      %1449 = vmatpush1.bf16.msra.mxu0 0
      %1450 = vmatprep.subr.bf16.mxu0 0
      %1451 = vmatpush1.bf16.msra.mxu0 0
      %1452 = vmatprep.subr.bf16.mxu0 0
      %1453 = vmatpush1.bf16.msra.mxu0 0
      %1454 = vmatprep.mubr.bf16.mxu0 0
      %1455 = vmatmul.mubr.bf16.gmra.mrb[0].mxu0 %v1393
      %v1456 = vpop.f32.mrb[0].mxu0
      %v1457 = vadd.f32 0.0, %v1456
      %v1458 = vpop.f32.mrb[0].mxu0
      %v1459 = vpop.f32.mrb[0].mxu0
      %v1460 = vadd.f32 0.0, %v1459
      %v1461 = vpop.f32.mrb[0].mxu0
      %1462 = vmatprep.mubr.bf16.mxu0 0
      %1463 = vmatmul.mubr.bf16.gmra.mrb[0].mxu0 %v1396
      %v1464 = vpop.f32.mrb[0].mxu0
      %v1465 = vadd.f32 0.0, %v1464
      %v1466 = vpop.f32.mrb[0].mxu0
      %v1467 = vpop.f32.mrb[0].mxu0
      %v1468 = vadd.f32 0.0, %v1467
      %v1469 = vpop.f32.mrb[0].mxu0
      %1470 = vmatprep.mubr.bf16.mxu0 0
      %1471 = vmatmul.mubr.bf16.gmra.mrb[0].mxu0 %v1399
      %v1472 = vpop.f32.mrb[0].mxu0
      %v1473 = vadd.f32 0.0, %v1472
      %v1474 = vpop.f32.mrb[0].mxu0
      %v1475 = vpop.f32.mrb[0].mxu0
      %v1476 = vadd.f32 0.0, %v1475
      %v1477 = vpop.f32.mrb[0].mxu0
      %1478 = vmatprep.mubr.bf16.mxu0 0
      %1479 = vmatmul.mubr.bf16.gmra.mrb[0].mxu0 %v1402
      %v1480 = vpop.f32.mrb[0].mxu0
      %v1481 = vadd.f32 0.0, %v1480
      %v1482 = vpop.f32.mrb[0].mxu0
      %v1483 = vpop.f32.mrb[0].mxu0
      %v1484 = vadd.f32 0.0, %v1483
      %v1485 = vpop.f32.mrb[0].mxu0
      %1486 = vmatprep.mubr.bf16.mxu0 0
      %1487 = vmatmul.mubr.bf16.gmra.mrb[0].mxu0 %v1405
      %v1488 = vpop.f32.mrb[0].mxu0
      %v1489 = vadd.f32 0.0, %v1488
      %v1490 = vpop.f32.mrb[0].mxu0
      %v1491 = vpop.f32.mrb[0].mxu0
      %v1492 = vadd.f32 0.0, %v1491
      %v1493 = vpop.f32.mrb[0].mxu0
      %1494 = vmatprep.mubr.bf16.mxu0 0
      %1495 = vmatmul.mubr.bf16.gmra.mrb[0].mxu0 %v1408
      %v1496 = vpop.f32.mrb[0].mxu0
      %v1497 = vadd.f32 0.0, %v1496
      %v1498 = vpop.f32.mrb[0].mxu0
      %v1499 = vpop.f32.mrb[0].mxu0
      %v1500 = vadd.f32 0.0, %v1499
      %v1501 = vpop.f32.mrb[0].mxu0
      %1502 = vmatprep.mubr.bf16.mxu0 0
      %1503 = vmatmul.mubr.bf16.gmra.mrb[0].mxu0 %v1411
      %v1504 = vpop.f32.mrb[0].mxu0
      %v1505 = vadd.f32 0.0, %v1504
      %v1506 = vpop.f32.mrb[0].mxu0
      %v1507 = vpop.f32.mrb[0].mxu0
      %v1508 = vadd.f32 0.0, %v1507
      %v1509 = vpop.f32.mrb[0].mxu0
      %1510 = vmatprep.mubr.bf16.mxu0 0
      %1511 = vmatmul.mubr.bf16.gmra.mrb[0].mxu0 %v1414
      %v1512 = vpop.f32.mrb[0].mxu0
      %v1513 = vadd.f32 0.0, %v1512
      %v1514 = vpop.f32.mrb[0].mxu0
      %v1515 = vpop.f32.mrb[0].mxu0
      %v1516 = vadd.f32 0.0, %v1515
      %v1517 = vpop.f32.mrb[0].mxu0
      %1518 = vmatprep.mubr.bf16.mxu0 0
      %1519 = vmatmul.mubr.bf16.gmra.mrb[0].mxu0 %v1417
      %v1520 = vpop.f32.mrb[0].mxu0
      %v1521 = vadd.f32 0.0, %v1520
      %v1522 = vpop.f32.mrb[0].mxu0
      %v1523 = vpop.f32.mrb[0].mxu0
      %v1524 = vadd.f32 0.0, %v1523
      %v1525 = vpop.f32.mrb[0].mxu0
      %1526 = vdwg.mxu0
      %v1527 = vadd.f32 %v1352, %v1457
      %v1528 = vadd.f32 %v1353, %v1460
      %v1529 = vadd.f32 %v1354, %v1465
      %v1530 = vadd.f32 %v1355, %v1468
      %v1531 = vadd.f32 %v1356, %v1473
      %v1532 = vadd.f32 %v1357, %v1476
      %v1533 = vadd.f32 %v1358, %v1481
      %v1534 = vadd.f32 %v1359, %v1484
      %v1535 = vadd.f32 %v1360, %v1489
      %v1536 = vadd.f32 %v1361, %v1492
      %v1537 = vadd.f32 %v1362, %v1497
      %v1538 = vadd.f32 %v1363, %v1500
      %v1539 = vadd.f32 %v1364, %v1505
      %v1540 = vadd.f32 %v1365, %v1508
      %v1541 = vadd.f32 %v1366, %v1513
      %v1542 = vadd.f32 %v1367, %v1516
      %v1543 = vadd.f32 %v1368, %v1521
      %v1544 = vadd.f32 %v1369, %v1524
      %v1545 = vpack.c.bf16 %v483, %v482
      %v1546 = vpack.c.bf16 %v484, %v484
      %s1547 = scalar_lea.vmem %s1, 12
      %v1548 = vld [vmem:[%s1547] sm:$0x3]
      %v1551 = vrot.slane %v1545, 2
      %v1552 = vsel %vm1372, %v1388, %v1551
      %v1553 = vrot.slane %v1546, 2
      %v1554 = vsel %vm1372, %v1551, %v1553
      %v1556 = vsel %vm575, %v1552, 0
      %v1559 = vsel %vm575, %v1554, 0
      %v1562 = vsel %vm603, %v1548, 0
      %1564 = vmatprep.subr.bf16.mxu0 0
      %1565 = vmatpush1.bf16.msra.mxu0 %v1562
      %1566 = vmatprep.subr.bf16.mxu0 0
      %1567 = vmatpush1.bf16.msra.mxu0 0
      %1568 = vmatprep.subr.bf16.mxu0 0
      %1569 = vmatpush1.bf16.msra.mxu0 0
      %1570 = vmatprep.subr.bf16.mxu0 0
      %1571 = vmatpush1.bf16.msra.mxu0 0
      %1572 = vmatprep.subr.bf16.mxu0 0
      %1573 = vmatpush1.bf16.msra.mxu0 0
      %1574 = vmatprep.subr.bf16.mxu0 0
      %1575 = vmatpush1.bf16.msra.mxu0 0
      %1576 = vmatprep.subr.bf16.mxu0 0
      %1577 = vmatpush1.bf16.msra.mxu0 0
      %1578 = vmatprep.subr.bf16.mxu0 0
      %1579 = vmatpush1.bf16.msra.mxu0 0
      %1580 = vmatprep.subr.bf16.mxu0 0
      %1581 = vmatpush1.bf16.msra.mxu0 0
      %1582 = vmatprep.subr.bf16.mxu0 0
      %1583 = vmatpush1.bf16.msra.mxu0 0
      %1584 = vmatprep.subr.bf16.mxu0 0
      %1585 = vmatpush1.bf16.msra.mxu0 0
      %1586 = vmatprep.subr.bf16.mxu0 0
      %1587 = vmatpush1.bf16.msra.mxu0 0
      %1588 = vmatprep.subr.bf16.mxu0 0
      %1589 = vmatpush1.bf16.msra.mxu0 0
      %1590 = vmatprep.subr.bf16.mxu0 0
      %1591 = vmatpush1.bf16.msra.mxu0 0
      %1592 = vmatprep.subr.bf16.mxu0 0
      %1593 = vmatpush1.bf16.msra.mxu0 0
      %1594 = vmatprep.subr.bf16.mxu0 0
      %1595 = vmatpush1.bf16.msra.mxu0 0
      %1596 = vmatprep.mubr.bf16.mxu0 0
      %1597 = vmatmul.mubr.bf16.gmra.mrb[0].mxu0 %v1396
      %v1598 = vpop.f32.mrb[0].mxu0
      %v1599 = vadd.f32 0.0, %v1598
      %v1600 = vpop.f32.mrb[0].mxu0
      %v1601 = vpop.f32.mrb[0].mxu0
      %v1602 = vadd.f32 0.0, %v1601
      %v1603 = vpop.f32.mrb[0].mxu0
      %1604 = vmatprep.mubr.bf16.mxu0 0
      %1605 = vmatmul.mubr.bf16.gmra.mrb[0].mxu0 %v1399
      %v1606 = vpop.f32.mrb[0].mxu0
      %v1607 = vadd.f32 0.0, %v1606
      %v1608 = vpop.f32.mrb[0].mxu0
      %v1609 = vpop.f32.mrb[0].mxu0
      %v1610 = vadd.f32 0.0, %v1609
      %v1611 = vpop.f32.mrb[0].mxu0
      %1612 = vmatprep.mubr.bf16.mxu0 0
      %1613 = vmatmul.mubr.bf16.gmra.mrb[0].mxu0 %v1402
      %v1614 = vpop.f32.mrb[0].mxu0
      %v1615 = vadd.f32 0.0, %v1614
      %v1616 = vpop.f32.mrb[0].mxu0
      %v1617 = vpop.f32.mrb[0].mxu0
      %v1618 = vadd.f32 0.0, %v1617
      %v1619 = vpop.f32.mrb[0].mxu0
      %1620 = vmatprep.mubr.bf16.mxu0 0
      %1621 = vmatmul.mubr.bf16.gmra.mrb[0].mxu0 %v1405
      %v1622 = vpop.f32.mrb[0].mxu0
      %v1623 = vadd.f32 0.0, %v1622
      %v1624 = vpop.f32.mrb[0].mxu0
      %v1625 = vpop.f32.mrb[0].mxu0
      %v1626 = vadd.f32 0.0, %v1625
      %v1627 = vpop.f32.mrb[0].mxu0
      %1628 = vmatprep.mubr.bf16.mxu0 0
      %1629 = vmatmul.mubr.bf16.gmra.mrb[0].mxu0 %v1408
      %v1630 = vpop.f32.mrb[0].mxu0
      %v1631 = vadd.f32 0.0, %v1630
      %v1632 = vpop.f32.mrb[0].mxu0
      %v1633 = vpop.f32.mrb[0].mxu0
      %v1634 = vadd.f32 0.0, %v1633
      %v1635 = vpop.f32.mrb[0].mxu0
      %1636 = vmatprep.mubr.bf16.mxu0 0
      %1637 = vmatmul.mubr.bf16.gmra.mrb[0].mxu0 %v1411
      %v1638 = vpop.f32.mrb[0].mxu0
      %v1639 = vadd.f32 0.0, %v1638
      %v1640 = vpop.f32.mrb[0].mxu0
      %v1641 = vpop.f32.mrb[0].mxu0
      %v1642 = vadd.f32 0.0, %v1641
      %v1643 = vpop.f32.mrb[0].mxu0
      %1644 = vmatprep.mubr.bf16.mxu0 0
      %1645 = vmatmul.mubr.bf16.gmra.mrb[0].mxu0 %v1414
      %v1646 = vpop.f32.mrb[0].mxu0
      %v1647 = vadd.f32 0.0, %v1646
      %v1648 = vpop.f32.mrb[0].mxu0
      %v1649 = vpop.f32.mrb[0].mxu0
      %v1650 = vadd.f32 0.0, %v1649
      %v1651 = vpop.f32.mrb[0].mxu0
      %1652 = vmatprep.mubr.bf16.mxu0 0
      %1653 = vmatmul.mubr.bf16.gmra.mrb[0].mxu0 %v1556
      %v1654 = vpop.f32.mrb[0].mxu0
      %v1655 = vadd.f32 0.0, %v1654
      %v1656 = vpop.f32.mrb[0].mxu0
      %v1657 = vpop.f32.mrb[0].mxu0
      %v1658 = vadd.f32 0.0, %v1657
      %v1659 = vpop.f32.mrb[0].mxu0
      %1660 = vmatprep.mubr.bf16.mxu0 0
      %1661 = vmatmul.mubr.bf16.gmra.mrb[0].mxu0 %v1559
      %v1662 = vpop.f32.mrb[0].mxu0
      %v1663 = vadd.f32 0.0, %v1662
      %v1664 = vpop.f32.mrb[0].mxu0
      %v1665 = vpop.f32.mrb[0].mxu0
      %v1666 = vadd.f32 0.0, %v1665
      %v1667 = vpop.f32.mrb[0].mxu0
      %1668 = vdwg.mxu0
      %v1669 = vadd.f32 %v1527, %v1599
      %v1670 = vadd.f32 %v1528, %v1602
      %v1671 = vadd.f32 %v1529, %v1607
      %v1672 = vadd.f32 %v1530, %v1610
      %v1673 = vadd.f32 %v1531, %v1615
      %v1674 = vadd.f32 %v1532, %v1618
      %v1675 = vadd.f32 %v1533, %v1623
      %v1676 = vadd.f32 %v1534, %v1626
      %v1677 = vadd.f32 %v1535, %v1631
      %v1678 = vadd.f32 %v1536, %v1634
      %v1679 = vadd.f32 %v1537, %v1639
      %v1680 = vadd.f32 %v1538, %v1642
      %v1681 = vadd.f32 %v1539, %v1647
      %v1682 = vadd.f32 %v1540, %v1650
      %v1683 = vadd.f32 %v1541, %v1655
      %v1684 = vadd.f32 %v1542, %v1658
      %v1685 = vadd.f32 %v1543, %v1663
      %v1686 = vadd.f32 %v1544, %v1666
      %s1687 = scalar_lea.vmem %s1, 14
      %v1688 = vld [vmem:[%s1687] sm:$0x3]
      %vm1689 = vsmask.f32 5376
      %v1690 = vrot.slane %v519, 2
      %v1691 = vrot.slane %v515, 3
      %v1692 = vor.u32 %v1690, %v1691
      %v1693 = vrot.slane %v527, 2
      %v1694 = vrot.slane %v523, 3
      %v1695 = vor.u32 %v1693, %v1694
      %v1696 = vsel %vm1689, %v1692, %v1695
      %v1697 = vrot.slane %v535, 2
      %v1698 = vrot.slane %v531, 3
      %v1699 = vor.u32 %v1697, %v1698
      %v1700 = vsel %vm1689, %v1695, %v1699
      %v1701 = vrot.slane %v543, 2
      %v1702 = vrot.slane %v539, 3
      %v1703 = vor.u32 %v1701, %v1702
      %v1704 = vsel %vm1689, %v1699, %v1703
      %v1705 = vrot.slane %v551, 2
      %v1706 = vrot.slane %v547, 3
      %v1707 = vor.u32 %v1705, %v1706
      %v1708 = vsel %vm1689, %v1703, %v1707
      %v1709 = vrot.slane %v559, 2
      %v1710 = vrot.slane %v555, 3
      %v1711 = vor.u32 %v1709, %v1710
      %v1712 = vsel %vm1689, %v1707, %v1711
      %v1713 = vrot.slane %v567, 2
      %v1714 = vrot.slane %v563, 3
      %v1715 = vor.u32 %v1713, %v1714
      %v1716 = vsel %vm1689, %v1711, %v1715
      %v1717 = vrot.slane %v1200, 2
      %v1718 = vrot.slane %v1203, 3
      %v1719 = vor.u32 %v1717, %v1718
      %v1720 = vsel %vm1689, %v1715, %v1719
      %v1722 = vshrl.u32 %v1545, 16
      %v1724 = vrot.slane %v1722, 2
      %v1725 = vshll.u32 %v1545, 16
      %v1727 = vrot.slane %v1725, 3
      %v1728 = vor.u32 %v1724, %v1727
      %v1729 = vsel %vm1689, %v1719, %v1728
      %v1731 = vshrl.u32 %v1546, 16
      %v1733 = vrot.slane %v1731, 2
      %v1734 = vshll.u32 %v1546, 16
      %v1736 = vrot.slane %v1734, 3
      %v1737 = vor.u32 %v1733, %v1736
      %v1738 = vsel %vm1689, %v1728, %v1737
      %v1740 = vsel %vm575, %v1696, 0
      %v1743 = vsel %vm575, %v1700, 0
      %v1746 = vsel %vm575, %v1704, 0
      %v1749 = vsel %vm575, %v1708, 0
      %v1752 = vsel %vm575, %v1712, 0
      %v1755 = vsel %vm575, %v1716, 0
      %v1758 = vsel %vm575, %v1720, 0
      %v1761 = vsel %vm575, %v1729, 0
      %v1764 = vsel %vm575, %v1738, 0
      %v1767 = vsel %vm603, %v1688, 0
      %1769 = vmatprep.subr.bf16.mxu0 0
      %1770 = vmatpush1.bf16.msra.mxu0 %v1767
      %1771 = vmatprep.subr.bf16.mxu0 0
      %1772 = vmatpush1.bf16.msra.mxu0 0
      %1773 = vmatprep.subr.bf16.mxu0 0
      %1774 = vmatpush1.bf16.msra.mxu0 0
      %1775 = vmatprep.subr.bf16.mxu0 0
      %1776 = vmatpush1.bf16.msra.mxu0 0
      %1777 = vmatprep.subr.bf16.mxu0 0
      %1778 = vmatpush1.bf16.msra.mxu0 0
      %1779 = vmatprep.subr.bf16.mxu0 0
      %1780 = vmatpush1.bf16.msra.mxu0 0
      %1781 = vmatprep.subr.bf16.mxu0 0
      %1782 = vmatpush1.bf16.msra.mxu0 0
      %1783 = vmatprep.subr.bf16.mxu0 0
      %1784 = vmatpush1.bf16.msra.mxu0 0
      %1785 = vmatprep.subr.bf16.mxu0 0
      %1786 = vmatpush1.bf16.msra.mxu0 0
      %1787 = vmatprep.subr.bf16.mxu0 0
      %1788 = vmatpush1.bf16.msra.mxu0 0
      %1789 = vmatprep.subr.bf16.mxu0 0
      %1790 = vmatpush1.bf16.msra.mxu0 0
      %1791 = vmatprep.subr.bf16.mxu0 0
      %1792 = vmatpush1.bf16.msra.mxu0 0
      %1793 = vmatprep.subr.bf16.mxu0 0
      %1794 = vmatpush1.bf16.msra.mxu0 0
      %1795 = vmatprep.subr.bf16.mxu0 0
      %1796 = vmatpush1.bf16.msra.mxu0 0
      %1797 = vmatprep.subr.bf16.mxu0 0
      %1798 = vmatpush1.bf16.msra.mxu0 0
      %1799 = vmatprep.subr.bf16.mxu0 0
      %1800 = vmatpush1.bf16.msra.mxu0 0
      %1801 = vmatprep.mubr.bf16.mxu0 0
      %1802 = vmatmul.mubr.bf16.gmra.mrb[0].mxu0 %v1740
      %v1803 = vpop.f32.mrb[0].mxu0
      %v1804 = vadd.f32 0.0, %v1803
      %v1805 = vpop.f32.mrb[0].mxu0
      %v1806 = vpop.f32.mrb[0].mxu0
      %v1807 = vadd.f32 0.0, %v1806
      %v1808 = vpop.f32.mrb[0].mxu0
      %1809 = vmatprep.mubr.bf16.mxu0 0
      %1810 = vmatmul.mubr.bf16.gmra.mrb[0].mxu0 %v1743
      %v1811 = vpop.f32.mrb[0].mxu0
      %v1812 = vadd.f32 0.0, %v1811
      %v1813 = vpop.f32.mrb[0].mxu0
      %v1814 = vpop.f32.mrb[0].mxu0
      %v1815 = vadd.f32 0.0, %v1814
      %v1816 = vpop.f32.mrb[0].mxu0
      %1817 = vmatprep.mubr.bf16.mxu0 0
      %1818 = vmatmul.mubr.bf16.gmra.mrb[0].mxu0 %v1746
      %v1819 = vpop.f32.mrb[0].mxu0
      %v1820 = vadd.f32 0.0, %v1819
      %v1821 = vpop.f32.mrb[0].mxu0
      %v1822 = vpop.f32.mrb[0].mxu0
      %v1823 = vadd.f32 0.0, %v1822
      %v1824 = vpop.f32.mrb[0].mxu0
      %1825 = vmatprep.mubr.bf16.mxu0 0
      %1826 = vmatmul.mubr.bf16.gmra.mrb[0].mxu0 %v1749
      %v1827 = vpop.f32.mrb[0].mxu0
      %v1828 = vadd.f32 0.0, %v1827
      %v1829 = vpop.f32.mrb[0].mxu0
      %v1830 = vpop.f32.mrb[0].mxu0
      %v1831 = vadd.f32 0.0, %v1830
      %v1832 = vpop.f32.mrb[0].mxu0
      %1833 = vmatprep.mubr.bf16.mxu0 0
      %1834 = vmatmul.mubr.bf16.gmra.mrb[0].mxu0 %v1752
      %v1835 = vpop.f32.mrb[0].mxu0
      %v1836 = vadd.f32 0.0, %v1835
      %v1837 = vpop.f32.mrb[0].mxu0
      %v1838 = vpop.f32.mrb[0].mxu0
      %v1839 = vadd.f32 0.0, %v1838
      %v1840 = vpop.f32.mrb[0].mxu0
      %1841 = vmatprep.mubr.bf16.mxu0 0
      %1842 = vmatmul.mubr.bf16.gmra.mrb[0].mxu0 %v1755
      %v1843 = vpop.f32.mrb[0].mxu0
      %v1844 = vadd.f32 0.0, %v1843
      %v1845 = vpop.f32.mrb[0].mxu0
      %v1846 = vpop.f32.mrb[0].mxu0
      %v1847 = vadd.f32 0.0, %v1846
      %v1848 = vpop.f32.mrb[0].mxu0
      %1849 = vmatprep.mubr.bf16.mxu0 0
      %1850 = vmatmul.mubr.bf16.gmra.mrb[0].mxu0 %v1758
      %v1851 = vpop.f32.mrb[0].mxu0
      %v1852 = vadd.f32 0.0, %v1851
      %v1853 = vpop.f32.mrb[0].mxu0
      %v1854 = vpop.f32.mrb[0].mxu0
      %v1855 = vadd.f32 0.0, %v1854
      %v1856 = vpop.f32.mrb[0].mxu0
      %1857 = vmatprep.mubr.bf16.mxu0 0
      %1858 = vmatmul.mubr.bf16.gmra.mrb[0].mxu0 %v1761
      %v1859 = vpop.f32.mrb[0].mxu0
      %v1860 = vadd.f32 0.0, %v1859
      %v1861 = vpop.f32.mrb[0].mxu0
      %v1862 = vpop.f32.mrb[0].mxu0
      %v1863 = vadd.f32 0.0, %v1862
      %v1864 = vpop.f32.mrb[0].mxu0
      %1865 = vmatprep.mubr.bf16.mxu0 0
      %1866 = vmatmul.mubr.bf16.gmra.mrb[0].mxu0 %v1764
      %v1867 = vpop.f32.mrb[0].mxu0
      %v1868 = vadd.f32 0.0, %v1867
      %v1869 = vpop.f32.mrb[0].mxu0
      %v1870 = vpop.f32.mrb[0].mxu0
      %v1871 = vadd.f32 0.0, %v1870
      %v1872 = vpop.f32.mrb[0].mxu0
      %1873 = vdwg.mxu0
      %v1874 = vadd.f32 %v1669, %v1804
      %v1875 = vadd.f32 %v1670, %v1807
      %v1876 = vadd.f32 %v1671, %v1812
      %v1877 = vadd.f32 %v1672, %v1815
      %v1878 = vadd.f32 %v1673, %v1820
      %v1879 = vadd.f32 %v1674, %v1823
      %v1880 = vadd.f32 %v1675, %v1828
      %v1881 = vadd.f32 %v1676, %v1831
      %v1882 = vadd.f32 %v1677, %v1836
      %v1883 = vadd.f32 %v1678, %v1839
      %v1884 = vadd.f32 %v1679, %v1844
      %v1885 = vadd.f32 %v1680, %v1847
      %v1886 = vadd.f32 %v1681, %v1852
      %v1887 = vadd.f32 %v1682, %v1855
      %v1888 = vadd.f32 %v1683, %v1860
      %v1889 = vadd.f32 %v1684, %v1863
      %v1890 = vadd.f32 %v1685, %v1868
      %v1891 = vadd.f32 %v1686, %v1871
      %s1892 = scalar_lea.vmem %s1, 16
      %v1893 = vld [vmem:[%s1892] sm:$0x3]
      %vm1894 = vcmask 1044480
      %v1895 = vrot.slane %v487, 3
      %v1896 = vrot.slane %v488, 3
      %v1897 = vsel %vm1894, %v1895, %v1896
      %v1898 = vrot.slane %v489, 3
      %v1899 = vsel %vm1894, %v1896, %v1898
      %v1900 = vrot.slane %v490, 3
      %v1901 = vsel %vm1894, %v1898, %v1900
      %v1902 = vrot.slane %v491, 3
      %v1903 = vsel %vm1894, %v1900, %v1902
      %v1904 = vrot.slane %v492, 3
      %v1905 = vsel %vm1894, %v1902, %v1904
      %v1906 = vrot.slane %v493, 3
      %v1907 = vsel %vm1894, %v1904, %v1906
      %v1908 = vrot.slane %v1023, 3
      %v1909 = vsel %vm1894, %v1906, %v1908
      %v1910 = vrot.slane %v1545, 3
      %v1911 = vsel %vm1894, %v1908, %v1910
      %v1912 = vrot.slane %v1546, 3
      %v1913 = vsel %vm1894, %v1910, %v1912
      %v1915 = vsel %vm575, %v1897, 0
      %v1918 = vsel %vm575, %v1899, 0
      %v1921 = vsel %vm575, %v1901, 0
      %v1924 = vsel %vm575, %v1903, 0
      %v1927 = vsel %vm575, %v1905, 0
      %v1930 = vsel %vm575, %v1907, 0
      %v1933 = vsel %vm575, %v1909, 0
      %v1936 = vsel %vm575, %v1911, 0
      %v1939 = vsel %vm575, %v1913, 0
      %v1942 = vsel %vm603, %v1893, 0
      %1944 = vmatprep.subr.bf16.mxu0 0
      %1945 = vmatpush1.bf16.msra.mxu0 %v1942
      %1946 = vmatprep.subr.bf16.mxu0 0
      %1947 = vmatpush1.bf16.msra.mxu0 0
      %1948 = vmatprep.subr.bf16.mxu0 0
      %1949 = vmatpush1.bf16.msra.mxu0 0
      %1950 = vmatprep.subr.bf16.mxu0 0
      %1951 = vmatpush1.bf16.msra.mxu0 0
      %1952 = vmatprep.subr.bf16.mxu0 0
      %1953 = vmatpush1.bf16.msra.mxu0 0
      %1954 = vmatprep.subr.bf16.mxu0 0
      %1955 = vmatpush1.bf16.msra.mxu0 0
      %1956 = vmatprep.subr.bf16.mxu0 0
      %1957 = vmatpush1.bf16.msra.mxu0 0
      %1958 = vmatprep.subr.bf16.mxu0 0
      %1959 = vmatpush1.bf16.msra.mxu0 0
      %1960 = vmatprep.subr.bf16.mxu0 0
      %1961 = vmatpush1.bf16.msra.mxu0 0
      %1962 = vmatprep.subr.bf16.mxu0 0
      %1963 = vmatpush1.bf16.msra.mxu0 0
      %1964 = vmatprep.subr.bf16.mxu0 0
      %1965 = vmatpush1.bf16.msra.mxu0 0
      %1966 = vmatprep.subr.bf16.mxu0 0
      %1967 = vmatpush1.bf16.msra.mxu0 0
      %1968 = vmatprep.subr.bf16.mxu0 0
      %1969 = vmatpush1.bf16.msra.mxu0 0
      %1970 = vmatprep.subr.bf16.mxu0 0
      %1971 = vmatpush1.bf16.msra.mxu0 0
      %1972 = vmatprep.subr.bf16.mxu0 0
      %1973 = vmatpush1.bf16.msra.mxu0 0
      %1974 = vmatprep.subr.bf16.mxu0 0
      %1975 = vmatpush1.bf16.msra.mxu0 0
      %1976 = vmatprep.mubr.bf16.mxu0 0
      %1977 = vmatmul.mubr.bf16.gmra.mrb[0].mxu0 %v1915
      %v1978 = vpop.f32.mrb[0].mxu0
      %v1979 = vadd.f32 0.0, %v1978
      %v1980 = vpop.f32.mrb[0].mxu0
      %v1981 = vpop.f32.mrb[0].mxu0
      %v1982 = vadd.f32 0.0, %v1981
      %v1983 = vpop.f32.mrb[0].mxu0
      %1984 = vmatprep.mubr.bf16.mxu0 0
      %1985 = vmatmul.mubr.bf16.gmra.mrb[0].mxu0 %v1918
      %v1986 = vpop.f32.mrb[0].mxu0
      %v1987 = vadd.f32 0.0, %v1986
      %v1988 = vpop.f32.mrb[0].mxu0
      %v1989 = vpop.f32.mrb[0].mxu0
      %v1990 = vadd.f32 0.0, %v1989
      %v1991 = vpop.f32.mrb[0].mxu0
      %1992 = vmatprep.mubr.bf16.mxu0 0
      %1993 = vmatmul.mubr.bf16.gmra.mrb[0].mxu0 %v1921
      %v1994 = vpop.f32.mrb[0].mxu0
      %v1995 = vadd.f32 0.0, %v1994
      %v1996 = vpop.f32.mrb[0].mxu0
      %v1997 = vpop.f32.mrb[0].mxu0
      %v1998 = vadd.f32 0.0, %v1997
      %v1999 = vpop.f32.mrb[0].mxu0
      %2000 = vmatprep.mubr.bf16.mxu0 0
      %2001 = vmatmul.mubr.bf16.gmra.mrb[0].mxu0 %v1924
      %v2002 = vpop.f32.mrb[0].mxu0
      %v2003 = vadd.f32 0.0, %v2002
      %v2004 = vpop.f32.mrb[0].mxu0
      %v2005 = vpop.f32.mrb[0].mxu0
      %v2006 = vadd.f32 0.0, %v2005
      %v2007 = vpop.f32.mrb[0].mxu0
      %2008 = vmatprep.mubr.bf16.mxu0 0
      %2009 = vmatmul.mubr.bf16.gmra.mrb[0].mxu0 %v1927
      %v2010 = vpop.f32.mrb[0].mxu0
      %v2011 = vadd.f32 0.0, %v2010
      %v2012 = vpop.f32.mrb[0].mxu0
      %v2013 = vpop.f32.mrb[0].mxu0
      %v2014 = vadd.f32 0.0, %v2013
      %v2015 = vpop.f32.mrb[0].mxu0
      %2016 = vmatprep.mubr.bf16.mxu0 0
      %2017 = vmatmul.mubr.bf16.gmra.mrb[0].mxu0 %v1930
      %v2018 = vpop.f32.mrb[0].mxu0
      %v2019 = vadd.f32 0.0, %v2018
      %v2020 = vpop.f32.mrb[0].mxu0
      %v2021 = vpop.f32.mrb[0].mxu0
      %v2022 = vadd.f32 0.0, %v2021
      %v2023 = vpop.f32.mrb[0].mxu0
      %2024 = vmatprep.mubr.bf16.mxu0 0
      %2025 = vmatmul.mubr.bf16.gmra.mrb[0].mxu0 %v1933
      %v2026 = vpop.f32.mrb[0].mxu0
      %v2027 = vadd.f32 0.0, %v2026
      %v2028 = vpop.f32.mrb[0].mxu0
      %v2029 = vpop.f32.mrb[0].mxu0
      %v2030 = vadd.f32 0.0, %v2029
      %v2031 = vpop.f32.mrb[0].mxu0
      %2032 = vmatprep.mubr.bf16.mxu0 0
      %2033 = vmatmul.mubr.bf16.gmra.mrb[0].mxu0 %v1936
      %v2034 = vpop.f32.mrb[0].mxu0
      %v2035 = vadd.f32 0.0, %v2034
      %v2036 = vpop.f32.mrb[0].mxu0
      %v2037 = vpop.f32.mrb[0].mxu0
      %v2038 = vadd.f32 0.0, %v2037
      %v2039 = vpop.f32.mrb[0].mxu0
      %2040 = vmatprep.mubr.bf16.mxu0 0
      %2041 = vmatmul.mubr.bf16.gmra.mrb[0].mxu0 %v1939
      %v2042 = vpop.f32.mrb[0].mxu0
      %v2043 = vadd.f32 0.0, %v2042
      %v2044 = vpop.f32.mrb[0].mxu0
      %v2045 = vpop.f32.mrb[0].mxu0
      %v2046 = vadd.f32 0.0, %v2045
      %v2047 = vpop.f32.mrb[0].mxu0
      %2048 = vdwg.mxu0
      %v2049 = vadd.f32 %v1874, %v1979
      %v2050 = vadd.f32 %v1875, %v1982
      %v2051 = vadd.f32 %v1876, %v1987
      %v2052 = vadd.f32 %v1877, %v1990
      %v2053 = vadd.f32 %v1878, %v1995
      %v2054 = vadd.f32 %v1879, %v1998
      %v2055 = vadd.f32 %v1880, %v2003
      %v2056 = vadd.f32 %v1881, %v2006
      %v2057 = vadd.f32 %v1882, %v2011
      %v2058 = vadd.f32 %v1883, %v2014
      %v2059 = vadd.f32 %v1884, %v2019
      %v2060 = vadd.f32 %v1885, %v2022
      %v2061 = vadd.f32 %v1886, %v2027
      %v2062 = vadd.f32 %v1887, %v2030
      %v2063 = vadd.f32 %v1888, %v2035
      %v2064 = vadd.f32 %v1889, %v2038
      %v2065 = vadd.f32 %v1890, %v2043
      %v2066 = vadd.f32 %v1891, %v2046
      %v2067 = vpack.c.bf16 %v2050, %v2049
      %v2068 = vpack.c.bf16 %v2052, %v2051
      %v2069 = vpack.c.bf16 %v2054, %v2053
      %v2070 = vpack.c.bf16 %v2056, %v2055
      %v2071 = vpack.c.bf16 %v2058, %v2057
      %v2072 = vpack.c.bf16 %v2060, %v2059
      %v2073 = vpack.c.bf16 %v2062, %v2061
      %v2074 = vpack.c.bf16 %v2064, %v2063
      %v2075 = vpack.c.bf16 %v2066, %v2065
      %v2085 = vunpack.c.l.b16 %v2067
      %v2086 = vunpack.c.h.b16 %v2067
      %v2087 = vunpack.c.l.b16 %v2068
      %v2088 = vunpack.c.h.b16 %v2068
      %v2089 = vunpack.c.l.b16 %v2069
      %v2090 = vunpack.c.h.b16 %v2069
      %v2091 = vunpack.c.l.b16 %v2070
      %v2092 = vunpack.c.h.b16 %v2070
      %v2093 = vunpack.c.l.b16 %v2071
      %v2094 = vunpack.c.h.b16 %v2071
      %v2095 = vunpack.c.l.b16 %v2072
      %v2096 = vunpack.c.h.b16 %v2072
      %v2097 = vunpack.c.l.b16 %v2073
      %v2098 = vunpack.c.h.b16 %v2073
      %v2099 = vunpack.c.l.b16 %v2074
      %v2100 = vunpack.c.h.b16 %v2074
      %v2101 = vunpack.c.l.b16 %v2075
      %v2102 = vunpack.c.h.b16 %v2075
      %v2103 = vpack.c.b16 %v2085, %v2085
      %v2104 = vpack.c.b16 %v2086, %v2086
      %v2105 = vpack.c.b16 %v2087, %v2087
      %v2106 = vpack.c.b16 %v2088, %v2088
      %v2107 = vpack.c.b16 %v2089, %v2089
      %v2108 = vpack.c.b16 %v2090, %v2090
      %v2109 = vpack.c.b16 %v2091, %v2091
      %v2110 = vpack.c.b16 %v2092, %v2092
      %v2111 = vpack.c.b16 %v2093, %v2093
      %v2112 = vpack.c.b16 %v2094, %v2094
      %v2113 = vpack.c.b16 %v2095, %v2095
      %v2114 = vpack.c.b16 %v2096, %v2096
      %v2115 = vpack.c.b16 %v2097, %v2097
      %v2116 = vpack.c.b16 %v2098, %v2098
      %v2117 = vpack.c.b16 %v2099, %v2099
      %v2118 = vpack.c.b16 %v2100, %v2100
      %v2119 = vpack.c.b16 %v2101, %v2101
      %v2120 = vpack.c.b16 %v2102, %v2102
      %vm2139 = vcmask 27648
      %2140 = vst.msk [vmem:[%s300] sm:$0xf] %vm2139, %v2103
      %2141 = vst.msk [vmem:[%s300 + $0x4] sm:$0xf] %vm2139, %v2104
      %2142 = vst.msk [vmem:[%s300 + $0x8] sm:$0xf] %vm2139, %v2105
      %2143 = vst.msk [vmem:[%s300 + $0xc] sm:$0xf] %vm2139, %v2106
      %2144 = vst.msk [vmem:[%s300 + $0x10] sm:$0xf] %vm2139, %v2107
      %2145 = vst.msk [vmem:[%s300 + $0x14] sm:$0xf] %vm2139, %v2108
      %2146 = vst.msk [vmem:[%s300 + $0x18] sm:$0xf] %vm2139, %v2109
      %2147 = vst.msk [vmem:[%s300 + $0x1c] sm:$0xf] %vm2139, %v2110
      %2148 = vst.msk [vmem:[%s300 + $0x20] sm:$0xf] %vm2139, %v2111
      %2149 = vst.msk [vmem:[%s300 + $0x24] sm:$0xf] %vm2139, %v2112
      %2150 = vst.msk [vmem:[%s300 + $0x28] sm:$0xf] %vm2139, %v2113
      %2151 = vst.msk [vmem:[%s300 + $0x2c] sm:$0xf] %vm2139, %v2114
      %2152 = vst.msk [vmem:[%s300 + $0x30] sm:$0xf] %vm2139, %v2115
      %2153 = vst.msk [vmem:[%s300 + $0x34] sm:$0xf] %vm2139, %v2116
      %2154 = vst.msk [vmem:[%s300 + $0x38] sm:$0xf] %vm2139, %v2117
      %2155 = vst.msk [vmem:[%s300 + $0x3c] sm:$0xf] %vm2139, %v2118
      %2156 = vst.msk [vmem:[%s300 + $0x40] sm:$0xf] %vm2139, %v2119
      %2157 = vst.msk [vmem:[%s300 + $0x44] sm:$0xf] %vm2139, %v2120
      %v2158 = vld [vmem:[%s4] sm:$0xff]
      %v2159 = vld [vmem:[%s4 + $0x8] sm:$0xff]
      %v2160 = vld [vmem:[%s4 + $0x10] sm:$0xff]
      %v2161 = vld [vmem:[%s4 + $0x18] sm:$0xff]
      %v2162 = vld [vmem:[%s4 + $0x20] sm:$0xff]
      %v2163 = vld [vmem:[%s4 + $0x28] sm:$0xff]
      %v2164 = vld [vmem:[%s4 + $0x30] sm:$0xff]
      %v2165 = vld [vmem:[%s4 + $0x38] sm:$0xff]
      %v2166 = vld [vmem:[%s4 + $0x40] sm:$0xff]
      %v2167 = vld [vmem:[%s4 + $0x48] sm:$0xff]
      %v2168 = vld [vmem:[%s4 + $0x50] sm:$0xff]
      %v2169 = vld [vmem:[%s4 + $0x58] sm:$0xff]
      %v2170 = vld [vmem:[%s4 + $0x60] sm:$0xff]
      %v2171 = vld [vmem:[%s4 + $0x68] sm:$0xff]
      %v2172 = vld [vmem:[%s4 + $0x70] sm:$0xff]
      %v2173 = vld [vmem:[%s4 + $0x78] sm:$0xff]
      %v2174 = vld [vmem:[%s4 + $0x80] sm:$0xff]
      %v2175 = vld [vmem:[%s4 + $0x88] sm:$0xff]
      %2177 = vset.pattern.permute.xlu0 0
      %2178 = vperm.xlu0 %2177, %v2158
      %v2179 = vpop.permute.xlu0 %2178
      %2182 = vset.pattern.permute.xlu0 0
      %2183 = vperm.xlu0 %2182, %v2159
      %v2184 = vpop.permute.xlu0 %2183
      %2187 = vset.pattern.permute.xlu0 0
      %2188 = vperm.xlu0 %2187, %v2160
      %v2189 = vpop.permute.xlu0 %2188
      %2192 = vset.pattern.permute.xlu0 0
      %2193 = vperm.xlu0 %2192, %v2161
      %v2194 = vpop.permute.xlu0 %2193
      %2197 = vset.pattern.permute.xlu0 0
      %2198 = vperm.xlu0 %2197, %v2162
      %v2199 = vpop.permute.xlu0 %2198
      %2202 = vset.pattern.permute.xlu0 0
      %2203 = vperm.xlu0 %2202, %v2163
      %v2204 = vpop.permute.xlu0 %2203
      %2207 = vset.pattern.permute.xlu0 0
      %2208 = vperm.xlu0 %2207, %v2164
      %v2209 = vpop.permute.xlu0 %2208
      %2212 = vset.pattern.permute.xlu0 0
      %2213 = vperm.xlu0 %2212, %v2165
      %v2214 = vpop.permute.xlu0 %2213
      %2217 = vset.pattern.permute.xlu0 0
      %2218 = vperm.xlu0 %2217, %v2166
      %v2219 = vpop.permute.xlu0 %2218
      %2222 = vset.pattern.permute.xlu0 0
      %2223 = vperm.xlu0 %2222, %v2167
      %v2224 = vpop.permute.xlu0 %2223
      %2227 = vset.pattern.permute.xlu0 0
      %2228 = vperm.xlu0 %2227, %v2168
      %v2229 = vpop.permute.xlu0 %2228
      %2232 = vset.pattern.permute.xlu0 0
      %2233 = vperm.xlu0 %2232, %v2169
      %v2234 = vpop.permute.xlu0 %2233
      %2237 = vset.pattern.permute.xlu0 0
      %2238 = vperm.xlu0 %2237, %v2170
      %v2239 = vpop.permute.xlu0 %2238
      %2242 = vset.pattern.permute.xlu0 0
      %2243 = vperm.xlu0 %2242, %v2171
      %v2244 = vpop.permute.xlu0 %2243
      %2247 = vset.pattern.permute.xlu0 0
      %2248 = vperm.xlu0 %2247, %v2172
      %v2249 = vpop.permute.xlu0 %2248
      %2252 = vset.pattern.permute.xlu0 0
      %2253 = vperm.xlu0 %2252, %v2173
      %v2254 = vpop.permute.xlu0 %2253
      %2257 = vset.pattern.permute.xlu0 0
      %2258 = vperm.xlu0 %2257, %v2174
      %v2259 = vpop.permute.xlu0 %2258
      %2262 = vset.pattern.permute.xlu0 0
      %2263 = vperm.xlu0 %2262, %v2175
      %v2264 = vpop.permute.xlu0 %2263
      %v2266 = vmul.f32 %v2049, %v2179
      %v2267 = vmul.f32 %v2050, %v2184
      %v2268 = vmul.f32 %v2051, %v2189
      %v2269 = vmul.f32 %v2052, %v2194
      %v2270 = vmul.f32 %v2053, %v2199
      %v2271 = vmul.f32 %v2054, %v2204
      %v2272 = vmul.f32 %v2055, %v2209
      %v2273 = vmul.f32 %v2056, %v2214
      %v2274 = vmul.f32 %v2057, %v2219
      %v2275 = vmul.f32 %v2058, %v2224
      %v2276 = vmul.f32 %v2059, %v2229
      %v2277 = vmul.f32 %v2060, %v2234
      %v2278 = vmul.f32 %v2061, %v2239
      %v2279 = vmul.f32 %v2062, %v2244
      %v2280 = vmul.f32 %v2063, %v2249
      %v2281 = vmul.f32 %v2064, %v2254
      %v2282 = vmul.f32 %v2065, %v2259
      %v2283 = vmul.f32 %v2066, %v2264
      %v2284 = vsel %vm575, %v2266, 0.0
      %v2285 = vsel %vm575, %v2267, 0.0
      %v2286 = vadd.f32 %v2284, %v2285
      %v2287 = vsel %vm575, %v2268, 0.0
      %v2288 = vadd.f32 %v2286, %v2287
      %v2289 = vsel %vm575, %v2269, 0.0
      %v2290 = vadd.f32 %v2288, %v2289
      %v2291 = vsel %vm575, %v2270, 0.0
      %v2292 = vadd.f32 %v2290, %v2291
      %v2293 = vsel %vm575, %v2271, 0.0
      %v2294 = vadd.f32 %v2292, %v2293
      %v2295 = vsel %vm575, %v2272, 0.0
      %v2296 = vadd.f32 %v2294, %v2295
      %v2297 = vsel %vm575, %v2273, 0.0
      %v2298 = vadd.f32 %v2296, %v2297
      %v2299 = vsel %vm575, %v2274, 0.0
      %v2300 = vadd.f32 %v2298, %v2299
      %v2301 = vsel %vm575, %v2275, 0.0
      %v2302 = vadd.f32 %v2300, %v2301
      %v2303 = vsel %vm575, %v2276, 0.0
      %v2304 = vadd.f32 %v2302, %v2303
      %v2305 = vsel %vm575, %v2277, 0.0
      %v2306 = vadd.f32 %v2304, %v2305
      %v2307 = vsel %vm575, %v2278, 0.0
      %v2308 = vadd.f32 %v2306, %v2307
      %v2309 = vsel %vm575, %v2279, 0.0
      %v2310 = vadd.f32 %v2308, %v2309
      %v2311 = vsel %vm575, %v2280, 0.0
      %v2312 = vadd.f32 %v2310, %v2311
      %v2313 = vsel %vm575, %v2281, 0.0
      %v2314 = vadd.f32 %v2312, %v2313
      %v2315 = vsel %vm575, %v2282, 0.0
      %v2316 = vadd.f32 %v2314, %v2315
      %v2317 = vsel %vm575, %v2283, 0.0
      %v2318 = vadd.f32 %v2316, %v2317
      %v2319 = vrot.slane %v2318, 4
      %v2320 = vadd.f32 %v2318, %v2319
      %v2321 = vrot.slane %v2320, 2
      %v2322 = vadd.f32 %v2320, %v2321
      %v2323 = vrot.slane %v2322, 1
      %v2324 = vadd.f32 %v2322, %v2323
      %v2325 = vmul.f32 %v2049, %v2049
      %v2326 = vmul.f32 %v2050, %v2050
      %v2327 = vmul.f32 %v2051, %v2051
      %v2328 = vmul.f32 %v2052, %v2052
      %v2329 = vmul.f32 %v2053, %v2053
      %v2330 = vmul.f32 %v2054, %v2054
      %v2331 = vmul.f32 %v2055, %v2055
      %v2332 = vmul.f32 %v2056, %v2056
      %v2333 = vmul.f32 %v2057, %v2057
      %v2334 = vmul.f32 %v2058, %v2058
      %v2335 = vmul.f32 %v2059, %v2059
      %v2336 = vmul.f32 %v2060, %v2060
      %v2337 = vmul.f32 %v2061, %v2061
      %v2338 = vmul.f32 %v2062, %v2062
      %v2339 = vmul.f32 %v2063, %v2063
      %v2340 = vmul.f32 %v2064, %v2064
      %v2341 = vmul.f32 %v2065, %v2065
      %v2342 = vmul.f32 %v2066, %v2066
      %v2343 = vmul.f32 %v2325, %v2179
      %v2344 = vmul.f32 %v2326, %v2184
      %v2345 = vmul.f32 %v2327, %v2189
      %v2346 = vmul.f32 %v2328, %v2194
      %v2347 = vmul.f32 %v2329, %v2199
      %v2348 = vmul.f32 %v2330, %v2204
      %v2349 = vmul.f32 %v2331, %v2209
      %v2350 = vmul.f32 %v2332, %v2214
      %v2351 = vmul.f32 %v2333, %v2219
      %v2352 = vmul.f32 %v2334, %v2224
      %v2353 = vmul.f32 %v2335, %v2229
      %v2354 = vmul.f32 %v2336, %v2234
      %v2355 = vmul.f32 %v2337, %v2239
      %v2356 = vmul.f32 %v2338, %v2244
      %v2357 = vmul.f32 %v2339, %v2249
      %v2358 = vmul.f32 %v2340, %v2254
      %v2359 = vmul.f32 %v2341, %v2259
      %v2360 = vmul.f32 %v2342, %v2264
      %v2361 = vsel %vm575, %v2343, 0.0
      %v2362 = vsel %vm575, %v2344, 0.0
      %v2363 = vadd.f32 %v2361, %v2362
      %v2364 = vsel %vm575, %v2345, 0.0
      %v2365 = vadd.f32 %v2363, %v2364
      %v2366 = vsel %vm575, %v2346, 0.0
      %v2367 = vadd.f32 %v2365, %v2366
      %v2368 = vsel %vm575, %v2347, 0.0
      %v2369 = vadd.f32 %v2367, %v2368
      %v2370 = vsel %vm575, %v2348, 0.0
      %v2371 = vadd.f32 %v2369, %v2370
      %v2372 = vsel %vm575, %v2349, 0.0
      %v2373 = vadd.f32 %v2371, %v2372
      %v2374 = vsel %vm575, %v2350, 0.0
      %v2375 = vadd.f32 %v2373, %v2374
      %v2376 = vsel %vm575, %v2351, 0.0
      %v2377 = vadd.f32 %v2375, %v2376
      %v2378 = vsel %vm575, %v2352, 0.0
      %v2379 = vadd.f32 %v2377, %v2378
      %v2380 = vsel %vm575, %v2353, 0.0
      %v2381 = vadd.f32 %v2379, %v2380
      %v2382 = vsel %vm575, %v2354, 0.0
      %v2383 = vadd.f32 %v2381, %v2382
      %v2384 = vsel %vm575, %v2355, 0.0
      %v2385 = vadd.f32 %v2383, %v2384
      %v2386 = vsel %vm575, %v2356, 0.0
      %v2387 = vadd.f32 %v2385, %v2386
      %v2388 = vsel %vm575, %v2357, 0.0
      %v2389 = vadd.f32 %v2387, %v2388
      %v2390 = vsel %vm575, %v2358, 0.0
      %v2391 = vadd.f32 %v2389, %v2390
      %v2392 = vsel %vm575, %v2359, 0.0
      %v2393 = vadd.f32 %v2391, %v2392
      %v2394 = vsel %vm575, %v2360, 0.0
      %v2395 = vadd.f32 %v2393, %v2394
      %v2396 = vrot.slane %v2395, 4
      %v2397 = vadd.f32 %v2395, %v2396
      %v2398 = vrot.slane %v2397, 2
      %v2399 = vadd.f32 %v2397, %v2398
      %v2400 = vrot.slane %v2399, 1
      %v2401 = vadd.f32 %v2399, %v2400
      %vm2402 = vcmask 1040384
      %v2403 = vsel %vm2402, %v2324, %v2401
      %vm2404 = vcmask 25600
      %2405 = vst.msk [vmem:[%s308] sm:$0x3] %vm2404, %v2403
      %p2406 = scmp.lt.s32.totalorder %s22, 1
      %s2407 = scalar_select %p2406, %s22, 1
      %p2408 = scmp.lt.s32.totalorder %s23, 1
      %s2409 = scalar_select %p2408, %s23, 1
      %s2410 = smul.addr %s2409, 18
      %s2411 = smul.addr %s2407, 36
      %s2412 = sadd.s32 %s2410, %s2411
      %s2413 = smul.addr %s2412, 4
      %s2414 = scalar_lea.vmem %s5, %s2413
      %p2415 = scmp.lt.s32.totalorder %s22, 1
      %s2416 = scalar_select %p2415, %s22, 1
      %p2417 = scmp.lt.s32.totalorder %s23, 1
      %s2418 = scalar_select %p2417, %s23, 1
      %s2419 = smul.addr %s2416, 2
      %s2420 = sadd.s32 %s2418, %s2419
      %s2421 = smul.addr %s2420, 2
      %s2422 = scalar_lea.vmem %s6, %s2421
      // Predicated region
      $region41: #{residual_forward.5} parent=39 // pred_check
        %p2423 = pneg %p162
      $region42: #{residual_forward.5} parent=39 // pred_check_branch
        %2425 = sbr.rel (%p2423) target = $region44
      $region43: #{residual_forward.5} parent=39 // pred_region
        _
      $region44: #{residual_forward.5} parent=39 // pred_fallthru
        _
      // Predicated region
      $region45: #{residual_forward.5} parent=39 // pred_check
        %p2426 = pneg %p190
      $region46: #{residual_forward.5} parent=39 // pred_check_branch
        %2428 = sbr.rel (%p2426) target = $region48
      $region47: #{residual_forward.5} parent=39 // pred_region
        _
      $region48: #{residual_forward.5} parent=39 // pred_fallthru
        _
    $region40: #{residual_forward.5} parent=5 // pred_fallthru
      _
    %p2429 = scmp.le.s32.totalorder 2, %s13
    // Predicated region
    $region49: #{residual_forward.5} parent=5 // pred_check
      %p2430 = pneg %p2429
    $region50: #{residual_forward.5} parent=5 // pred_check_branch
      %2432 = sbr.rel (%p2430) target = $region52
    $region51: #{residual_forward.5} parent=5 // pred_region
      %s2433 = ssub.s32 %s13, 2
      // Predicated region
      $region53: #{residual_forward.5} parent=51 // pred_check
        %p2434 = pneg %p168
      $region54: #{residual_forward.5} parent=51 // pred_check_branch
        %2436 = sbr.rel (%p2434) target = $region56
      $region55: #{residual_forward.5} parent=51 // pred_region
        %p2437 = scmp.lt.s32.totalorder %s24, 1
        %s2438 = scalar_select %p2437, %s24, 1
        %p2439 = scmp.lt.s32.totalorder %s25, 1
        %s2440 = scalar_select %p2439, %s25, 1
        %s2441 = smul.addr %s2440, 18
        %s2442 = smul.addr %s2438, 36
        %s2443 = sadd.s32 %s2441, %s2442
        %s2444 = smul.addr %s2443, 4
        %s2445 = scalar_lea.vmem %s5, %s2444
      $region56: #{residual_forward.5} parent=51 // pred_fallthru
        _
      // Predicated region
      $region57: #{residual_forward.5} parent=51 // pred_check
        %p2446 = pneg %p196
      $region58: #{residual_forward.5} parent=51 // pred_check_branch
        %2448 = sbr.rel (%p2446) target = $region60
      $region59: #{residual_forward.5} parent=51 // pred_region
        %p2449 = scmp.lt.s32.totalorder %s24, 1
        %s2450 = scalar_select %p2449, %s24, 1
        %p2451 = scmp.lt.s32.totalorder %s25, 1
        %s2452 = scalar_select %p2451, %s25, 1
        %s2453 = smul.addr %s2450, 2
        %s2454 = sadd.s32 %s2452, %s2453
        %s2455 = smul.addr %s2454, 2
        %s2456 = scalar_lea.vmem %s6, %s2455
      $region60: #{residual_forward.5} parent=51 // pred_fallthru
        _
    $region52: #{residual_forward.5} parent=5 // pred_fallthru
      _
  $region6: #{residual_forward.5} parent=0 // loop_footer
    %s17 = sadd.s32 1, %s13
  $region7: #{residual_forward.5} parent=0 // loop_footer_branch
    %12 = sbr.rel target = $region3
  $region8: #{residual_forward.5} parent=0 // loop_exit
    _

</llo_original>
